<compile_context>
chip_gen: v6e
topology: v6e:2x2x1
jax: 0.10.0
libtpu: 0.0.40
codegen_flags: <defaults>
</compile_context>

<pallas_src>
import jax
import jax.numpy as jnp
from jax.experimental import pallas as pl
from jax.experimental.pallas import tpu as pltpu

# ----- synthetic (small) CLIP text-tower dimensions -----
B = 2          # batch ("text" prompts)
S = 8          # max_length (context length, small synthetic)
D = 128        # transformer width
H = 4          # attention heads
HD = D // H    # head dim
F = 4 * D      # MLP hidden
L = 2          # transformer layers
V = 64         # vocab size
E = 128        # text_projection output dim
N_REPEAT = 1   # FrozenCLIPTextEmbedder.n_repeat
EPS = 1e-5

# Batch-tile size for the leading 'parallel' grid axis (v7x: 2 TensorCores split it).
# NOTE: at real CLIP scale pick TB so TB*S (matmul M) is >= 256 (v6e/v7x) / 128 (v5e);
#       do not tile rows below the MXU height.
TB = 1
assert B % TB == 0
NB = B // TB
R = TB * S     # activation rows per batch tile


def _layer_norm(x, g, b):
    mu = jnp.mean(x, axis=-1, keepdims=True)
    var = jnp.mean(jnp.square(x - mu), axis=-1, keepdims=True)
    return (x - mu) * jax.lax.rsqrt(var + EPS) * g + b


# ---------------------------------------------------------------------------
# Fused kernel: causal transformer stack (grid = (batch tiles, layers), activation
# resident in VMEM scratch) + EOT gather + ln_final + text_projection + L2 normalize.
# ---------------------------------------------------------------------------
def transformer_kernel(eot_ref,                       # SMEM (B,) int32 scalar-prefetch
                       x_hbm_ref, mask_ref,
                       ln1g_ref, ln1b_ref, wqkv_ref, bqkv_ref, wo_ref, bo_ref,
                       ln2g_ref, ln2b_ref, w1_ref, b1_ref, w2_ref, b2_ref,
                       lnfg_ref, lnfb_ref, proj_ref,
                       z_ref, x_scr, attn_scr, copy_sem):
    bt = pl.program_id(0)                             # batch tile ('parallel')
    layer = pl.program_id(1)                          # layer ('arbitrary', innermost)
    bf16 = jnp.bfloat16

    @pl.when(layer == 0)
    def _():
        # One DMA of this tile's activation HBM -> resident VMEM scratch; x is never a
        # pipelined (double-buffered) input (it stays in memory_space=pl.ANY).
        cp = pltpu.make_async_copy(x_hbm_ref.at[bt], x_scr, copy_sem)
        cp.start()
        cp.wait()

    x = x_scr[...]                                    # (R, D) f32

    # ---- multi-head causal self-attention ----
    h = _layer_norm(x, ln1g_ref[0], ln1b_ref[0])
    qkv = jnp.dot(h.astype(bf16), wqkv_ref[0],
                  preferred_element_type=jnp.float32) + bqkv_ref[0]      # (R, 3D) f32
    qkv = qkv.astype(bf16)

    def split_heads(blk):                             # (R, D) -> (H*TB, S, HD)
        stacked = jnp.stack([blk[:, hh * HD:(hh + 1) * HD] for hh in range(H)], axis=0)
        return stacked.reshape(H * TB, S, HD)

    q = split_heads(qkv[:, 0 * D:1 * D])              # lane-aligned q/k/v slabs
    k = split_heads(qkv[:, 1 * D:2 * D])
    v = split_heads(qkv[:, 2 * D:3 * D])

    scale = 1.0 / (HD ** 0.5)
    # heads fused into the einsum batch dim: two batched matmuls, not 2*H small ones
    s = jnp.einsum('nqd,nkd->nqk', q, k,
                   preferred_element_type=jnp.float32) * scale + mask_ref[...]
    s = s - jnp.max(s, axis=-1, keepdims=True)
    p = jnp.exp(s)                                    # f32 (v5e has no bf16 EUP)
    p = p * pl.reciprocal(jnp.sum(p, axis=-1, keepdims=True), approx=True)
    o = jnp.einsum('nqk,nkd->nqd', p.astype(bf16), v,
                   preferred_element_type=jnp.float32)                   # (H*TB, S, HD) f32

    # Reassemble heads lane-dense (static lane offsets into VMEM scratch), then ONE
    # (R, D) x (D, D) output projection at full MXU contraction depth.
    o4 = o.reshape(H, TB, S, HD)
    for hh in range(H):
        attn_scr[:, hh * HD:(hh + 1) * HD] = o4[hh].reshape(R, HD)
    attn = jnp.dot(attn_scr[...].astype(bf16), wo_ref[0],
                   preferred_element_type=jnp.float32) + bo_ref[0]       # (R, D) f32
    x = x + attn

    # ---- MLP with QuickGELU (x * sigmoid(1.702 x), as in CLIP) ----
    h2 = _layer_norm(x, ln2g_ref[0], ln2b_ref[0])
    u = jnp.dot(h2.astype(bf16), w1_ref[0],
                preferred_element_type=jnp.float32) + b1_ref[0]          # (R, F) f32
    # NOTE: on v6e/v7x this sigmoid could run in bf16 (native bf16 VPU/EUP); keep f32 for v5e.
    g = u * jax.nn.sigmoid(1.702 * u)
    m = jnp.dot(g.astype(bf16), w2_ref[0],
                preferred_element_type=jnp.float32) + b2_ref[0]
    x = x + m

    x_scr[...] = x

    # ---- fused head on the last layer: EOT row gather + ln_final + proj + L2 ----
    @pl.when(layer == pl.num_programs(1) - 1)
    def _():
        rows = []
        for j in range(TB):
            e = eot_ref[bt * TB + j]                  # scalar-prefetched EOT index (SMEM)
            rows.append(x_scr[pl.ds(j * S + e, 1), :])                   # (1, D)
        x_eot = rows[0] if TB == 1 else jnp.concatenate(rows, axis=0)    # (TB, D)
        hf = _layer_norm(x_eot, lnfg_ref[...], lnfb_ref[...])
        z = jnp.dot(hf.astype(jnp.bfloat16), proj_ref[...],
                    preferred_element_type=jnp.float32)                  # (TB, E)
        inv = jax.lax.rsqrt(jnp.sum(z * z, axis=-1, keepdims=True) + 1e-12)
        z_ref[0] = z * inv                            # z / ||z||_2 (dim=1)


def run_transformer(x_tiles, eot_idx, mask, p):
    layer_keys = ("ln1g", "ln1b", "wqkv", "bqkv", "wo", "bo",
                  "ln2g", "ln2b", "w1", "b1", "w2", "b2")
    layer_params = [p[k] for k in layer_keys]
    head_params = [p["lnf_g"], p["lnf_b"], p["proj"]]

    def _layer_spec(a):
        nd = a.ndim
        return pl.BlockSpec((1,) + tuple(a.shape[1:]),
                            lambda bt, l, eot, nd=nd: (l,) + (0,) * (nd - 1))

    def _const_spec(a):
        nd = a.ndim
        return pl.BlockSpec(tuple(a.shape), lambda bt, l, eot, nd=nd: (0,) * nd)

    # x: raw HBM ref (no auto-pipelining / no double-buffering), DMA'd once per batch tile.
    # TODO(synk): at real scale the tiny const head params could use pipeline_mode=pl.Buffered(1);
    #             on v7x, fp8 (e4m3) weight storage would halve weight DMA + VMEM.
    in_specs = ([pl.BlockSpec(memory_space=pl.ANY),
                 _const_spec(mask)]
                + [_layer_spec(a) for a in layer_params]
                + [_const_spec(a) for a in head_params])

    grid_spec = pltpu.PrefetchScalarGridSpec(
        num_scalar_prefetch=1,                        # eot_idx -> SMEM
        grid=(NB, L),                                 # (batch tiles, layers); layer axis last
        in_specs=in_specs,
        out_specs=pl.BlockSpec((1, TB, E), lambda bt, l, eot: (bt, 0, 0)),
        scratch_shapes=[pltpu.VMEM((R, D), jnp.float32),   # resident activation
                        pltpu.VMEM((R, D), jnp.float32),   # lane-dense head assembly
                        pltpu.SemaphoreType.DMA(())],      # activation-copy semaphore
    )
    out = pl.pallas_call(
        transformer_kernel,
        out_shape=jax.ShapeDtypeStruct((NB, TB, E), jnp.float32),
        grid_spec=grid_spec,
        compiler_params=pltpu.CompilerParams(
            dimension_semantics=("parallel", "arbitrary"),  # batch tiles across TCs (v7x)
            vmem_limit_bytes=64 * 1024 * 1024),             # explicit budget (fits all gens)
    )(eot_idx, x_tiles, mask, *layer_params, *head_params)
    return out.reshape(B, E)


# ---------------------------------------------------------------------------
# Parameter init (deterministic, synthetic). Weights pre-transposed to (in, out)
# and stored in bf16; W_o is a single dense (L, D, D).
# ---------------------------------------------------------------------------
def init_params(key):
    ks = jax.random.split(key, 8)
    sc = 0.02
    bf = jnp.bfloat16
    return {
        "tok_emb": sc * jax.random.normal(ks[0], (V, D), jnp.float32),
        "pos_emb": sc * jax.random.normal(ks[1], (S, D), jnp.float32),
        "ln1g": jnp.ones((L, 1, D), jnp.float32),
        "ln1b": jnp.zeros((L, 1, D), jnp.float32),
        "wqkv": (sc * jax.random.normal(ks[2], (L, D, 3 * D), jnp.float32)).astype(bf),
        "bqkv": jnp.zeros((L, 1, 3 * D), jnp.float32),
        "wo": (sc * jax.random.normal(ks[3], (L, D, D), jnp.float32)).astype(bf),
        "bo": jnp.zeros((L, 1, D), jnp.float32),
        "ln2g": jnp.ones((L, 1, D), jnp.float32),
        "ln2b": jnp.zeros((L, 1, D), jnp.float32),
        "w1": (sc * jax.random.normal(ks[4], (L, D, F), jnp.float32)).astype(bf),
        "b1": jnp.zeros((L, 1, F), jnp.float32),
        "w2": (sc * jax.random.normal(ks[5], (L, F, D), jnp.float32)).astype(bf),
        "b2": jnp.zeros((L, 1, D), jnp.float32),
        "lnf_g": jnp.ones((1, D), jnp.float32),
        "lnf_b": jnp.zeros((1, D), jnp.float32),
        "proj": (sc * jax.random.normal(ks[6], (D, E), jnp.float32)).astype(bf),
    }


@jax.jit
def clip_text_embed(tokens, p):
    """FrozenCLIPTextEmbedder.forward (normalize=True) on integer tokens."""
    # glue: token-embedding gather + positional embedding, laid out per batch tile
    x = p["tok_emb"][tokens] + p["pos_emb"][None]                      # (B, S, D)
    x_tiles = x.reshape(NB, R, D)
    # glue: EOT position = argmax of token id (as in real CLIP) -> int32 indices (SMEM prefetch)
    eot_idx = jnp.argmax(tokens, axis=-1).astype(jnp.int32)           # (B,)
    # additive causal mask, built once (hoisted out of the per-layer body)
    qi = jax.lax.broadcasted_iota(jnp.int32, (S, S), 0)
    ki = jax.lax.broadcasted_iota(jnp.int32, (S, S), 1)
    mask = jnp.where(ki <= qi, 0.0, -1e30).astype(jnp.float32)        # (S, S)
    # fused Pallas kernel: transformer stack + EOT gather + head + L2 normalize
    return run_transformer(x_tiles, eot_idx, mask, p)                 # (B, E)


def clip_text_encode(tokens, p):
    """FrozenCLIPTextEmbedder.encode: z -> (B, n_repeat, E)."""
    z = clip_text_embed(tokens, p)
    return jnp.repeat(z[:, None, :], N_REPEAT, axis=1)


# ---------------------------------------------------------------------------
# Pure-JAX reference mirroring the kernel numerics (bf16 at matmul boundaries)
# ---------------------------------------------------------------------------
def reference_embed(tokens, p):
    bf = jnp.bfloat16

    def mm(a, w):
        return jnp.dot(a.astype(bf), w, preferred_element_type=jnp.float32)

    x = (p["tok_emb"][tokens] + p["pos_emb"][None]).reshape(B * S, D)
    qi = jax.lax.broadcasted_iota(jnp.int32, (S, S), 0)
    ki = jax.lax.broadcasted_iota(jnp.int32, (S, S), 1)
    causal = (ki <= qi)[None]
    for l in range(L):
        h = _layer_norm(x, p["ln1g"][l], p["ln1b"][l])
        qkv = (mm(h, p["wqkv"][l]) + p["bqkv"][l]).reshape(B, S, 3 * D).astype(bf)
        heads = []
        for hh in range(H):
            qh = qkv[:, :, 0 * D + hh * HD: 0 * D + (hh + 1) * HD]
            kh = qkv[:, :, 1 * D + hh * HD: 1 * D + (hh + 1) * HD]
            vh = qkv[:, :, 2 * D + hh * HD: 2 * D + (hh + 1) * HD]
            s = jnp.einsum('bqd,bkd->bqk', qh, kh,
                           preferred_element_type=jnp.float32) / (HD ** 0.5)
            s = jnp.where(causal, s, -1e30)
            pr = jax.nn.softmax(s, axis=-1)
            heads.append(jnp.einsum('bqk,bkd->bqd', pr.astype(bf), vh,
                                    preferred_element_type=jnp.float32))
        attn = jnp.concatenate(heads, axis=-1).reshape(B * S, D)
        x = x + mm(attn, p["wo"][l]) + p["bo"][l]
        h2 = _layer_norm(x, p["ln2g"][l], p["ln2b"][l])
        u = mm(h2, p["w1"][l]) + p["b1"][l]
        g = u * jax.nn.sigmoid(1.702 * u)
        x = x + mm(g, p["w2"][l]) + p["b2"][l]
    x = x.reshape(B, S, D)
    eot = jnp.argmax(tokens, axis=-1)
    x_eot = x[jnp.arange(B), eot]
    hf = _layer_norm(x_eot, p["lnf_g"], p["lnf_b"])
    z = mm(hf, p["proj"])
    return z / jnp.sqrt(jnp.sum(z * z, axis=1, keepdims=True) + 1e-12)


if __name__ == "__main__":
    key = jax.random.PRNGKey(0)
    kp, kt = jax.random.split(key)
    params = init_params(kp)
    tokens = jax.random.randint(kt, (B, S), 0, V, dtype=jnp.int32)

    z = clip_text_embed(tokens, params)                      # (B, E), unit-norm rows
    z = jax.block_until_ready(z)
    z_enc = jax.block_until_ready(clip_text_encode(tokens, params))   # (B, 1, E)

    z_ref = reference_embed(tokens, params)
    assert z.shape == (B, E) and z_enc.shape == (B, N_REPEAT, E)
    assert jnp.allclose(z, z_ref, atol=1e-2, rtol=1e-2), "mismatch vs reference"

    print("KERNEL_OK")
</pallas_src>

<mosaic_0001>
module attributes {stable_mosaic.version = 11 : i64} {
  func.func @transformer_kernel(%arg0: i32, %arg1: i32, %arg2: memref<2xi32, #tpu.memory_space<smem>>, %arg3: memref<2x8x128xf32, #tpu.memory_space<any>>, %arg4: memref<8x8xf32, #tpu.memory_space<vmem>>, %arg5: memref<1x1x128xf32, #tpu.memory_space<vmem>>, %arg6: memref<1x1x128xf32, #tpu.memory_space<vmem>>, %arg7: memref<1x128x384xbf16, #tpu.memory_space<vmem>>, %arg8: memref<1x1x384xf32, #tpu.memory_space<vmem>>, %arg9: memref<1x128x128xbf16, #tpu.memory_space<vmem>>, %arg10: memref<1x1x128xf32, #tpu.memory_space<vmem>>, %arg11: memref<1x1x128xf32, #tpu.memory_space<vmem>>, %arg12: memref<1x1x128xf32, #tpu.memory_space<vmem>>, %arg13: memref<1x128x512xbf16, #tpu.memory_space<vmem>>, %arg14: memref<1x1x512xf32, #tpu.memory_space<vmem>>, %arg15: memref<1x512x128xbf16, #tpu.memory_space<vmem>>, %arg16: memref<1x1x128xf32, #tpu.memory_space<vmem>>, %arg17: memref<1x128xf32, #tpu.memory_space<vmem>>, %arg18: memref<1x128xf32, #tpu.memory_space<vmem>>, %arg19: memref<128x128xbf16, #tpu.memory_space<vmem>>, %arg20: memref<1x1x128xf32, #tpu.memory_space<vmem>>, %arg21: memref<8x128xf32, #tpu.memory_space<vmem>>, %arg22: memref<8x128xf32, #tpu.memory_space<vmem>>, %arg23: memref<!tpu.dma_semaphore, #tpu.memory_space<semaphore_mem>>) attributes {dimension_semantics = [#tpu.dimension_semantics<parallel>, #tpu.dimension_semantics<arbitrary>], iteration_bounds = array<i64: 2, 2>, scalar_prefetch = 1 : i64, scratch_operands = 3 : i64, tpu.core_type = #tpu.core_type<tc>, window_params = [{}, {pipeline_mode = #tpu.pipeline_mode<synchronous>, transform_indices = @transform_1, window_bounds = array<i64: 8, 8>}, {transform_indices = @transform_2, window_bounds = array<i64: 1, 1, 128>}, {transform_indices = @transform_3, window_bounds = array<i64: 1, 1, 128>}, {transform_indices = @transform_4, window_bounds = array<i64: 1, 128, 384>}, {transform_indices = @transform_5, window_bounds = array<i64: 1, 1, 384>}, {transform_indices = @transform_6, window_bounds = array<i64: 1, 128, 128>}, {transform_indices = @transform_7, window_bounds = array<i64: 1, 1, 128>}, {transform_indices = @transform_8, window_bounds = array<i64: 1, 1, 128>}, {transform_indices = @transform_9, window_bounds = array<i64: 1, 1, 128>}, {transform_indices = @transform_10, window_bounds = array<i64: 1, 128, 512>}, {transform_indices = @transform_11, window_bounds = array<i64: 1, 1, 512>}, {transform_indices = @transform_12, window_bounds = array<i64: 1, 512, 128>}, {transform_indices = @transform_13, window_bounds = array<i64: 1, 1, 128>}, {pipeline_mode = #tpu.pipeline_mode<synchronous>, transform_indices = @transform_14, window_bounds = array<i64: 1, 128>}, {pipeline_mode = #tpu.pipeline_mode<synchronous>, transform_indices = @transform_15, window_bounds = array<i64: 1, 128>}, {pipeline_mode = #tpu.pipeline_mode<synchronous>, transform_indices = @transform_16, window_bounds = array<i64: 128, 128>}, {transform_indices = @transform_17, window_bounds = array<i64: 1, 1, 128>}]} {
    %c0_i32 = arith.constant 0 : i32
    %0 = arith.cmpi eq, %arg1, %c0_i32 : i32
    %1 = arith.extui %0 : i1 to i32
    %c0_i32_0 = arith.constant 0 : i32
    %2 = arith.cmpi ne, %1, %c0_i32_0 : i32
    scf.if %2 {
      %c0_i32_70 = arith.constant 0 : i32
      %c0_i32_71 = arith.constant 0 : i32
      %170 = tpu.memref_slice %arg3[%arg0, %c0_i32_70, %c0_i32_71] : memref<2x8x128xf32, #tpu.memory_space<any>> -> memref<1x8x128xf32, #tpu.memory_space<any>>
      %171 = tpu.memref_squeeze %170 : memref<1x8x128xf32, #tpu.memory_space<any>> -> memref<8x128xf32, #tpu.memory_space<any>>
      tpu.enqueue_dma source(%171 : memref<8x128xf32, #tpu.memory_space<any>>) target(%arg21 : memref<8x128xf32, #tpu.memory_space<vmem>>) target_semaphore(%arg23 : memref<!tpu.dma_semaphore, #tpu.memory_space<semaphore_mem>>)
      %c0_i32_72 = arith.constant 0 : i32
      %c0_i32_73 = arith.constant 0 : i32
      %172 = tpu.memref_slice %arg3[%arg0, %c0_i32_72, %c0_i32_73] : memref<2x8x128xf32, #tpu.memory_space<any>> -> memref<1x8x128xf32, #tpu.memory_space<any>>
      %173 = tpu.memref_squeeze %172 : memref<1x8x128xf32, #tpu.memory_space<any>> -> memref<8x128xf32, #tpu.memory_space<any>>
      tpu.wait_dma2 semaphore(%arg23 : memref<!tpu.dma_semaphore, #tpu.memory_space<semaphore_mem>>) src(%173 : memref<8x128xf32, #tpu.memory_space<any>>) dst(%arg21 : memref<8x128xf32, #tpu.memory_space<vmem>>)
    } else {
    }
    %c0 = arith.constant 0 : index
    %c0_1 = arith.constant 0 : index
    %3 = vector.load %arg21[%c0, %c0_1] : memref<8x128xf32, #tpu.memory_space<vmem>>, vector<8x128xf32>
    %c0_2 = arith.constant 0 : index
    %c0_3 = arith.constant 0 : index
    %c0_4 = arith.constant 0 : index
    %4 = vector.load %arg5[%c0_2, %c0_3, %c0_4] : memref<1x1x128xf32, #tpu.memory_space<vmem>>, vector<1x1x128xf32>
    %5 = vector.shape_cast %4 : vector<1x1x128xf32> to vector<1x128xf32>
    %c0_5 = arith.constant 0 : index
    %c0_6 = arith.constant 0 : index
    %c0_7 = arith.constant 0 : index
    %6 = vector.load %arg6[%c0_5, %c0_6, %c0_7] : memref<1x1x128xf32, #tpu.memory_space<vmem>>, vector<1x1x128xf32>
    %7 = vector.shape_cast %6 : vector<1x1x128xf32> to vector<1x128xf32>
    %cst = arith.constant dense<0.000000e+00> : vector<8xf32>
    %8 = vector.multi_reduction <add>, %3, %cst [1] : vector<8x128xf32> to vector<8xf32>
    %9 = vector.shape_cast %8 : vector<8xf32> to vector<8x1xf32>
    %cst_8 = arith.constant 1.280000e+02 : f32
    %10 = vector.broadcast %cst_8 : f32 to vector<8x1xf32>
    %11 = arith.divf %9, %10 : vector<8x1xf32>
    %12 = vector.broadcast %11 : vector<8x1xf32> to vector<8x128xf32>
    %13 = arith.subf %3, %12 : vector<8x128xf32>
    %14 = arith.mulf %13, %13 : vector<8x128xf32>
    %cst_9 = arith.constant dense<0.000000e+00> : vector<8xf32>
    %15 = vector.multi_reduction <add>, %14, %cst_9 [1] : vector<8x128xf32> to vector<8xf32>
    %16 = vector.shape_cast %15 : vector<8xf32> to vector<8x1xf32>
    %cst_10 = arith.constant 1.280000e+02 : f32
    %17 = vector.broadcast %cst_10 : f32 to vector<8x1xf32>
    %18 = arith.divf %16, %17 : vector<8x1xf32>
    %19 = vector.broadcast %11 : vector<8x1xf32> to vector<8x128xf32>
    %20 = arith.subf %3, %19 : vector<8x128xf32>
    %cst_11 = arith.constant 9.99999974E-6 : f32
    %21 = vector.broadcast %cst_11 : f32 to vector<8x1xf32>
    %22 = arith.addf %18, %21 : vector<8x1xf32>
    %23 = math.rsqrt %22 : vector<8x1xf32>
    %24 = vector.broadcast %23 : vector<8x1xf32> to vector<8x128xf32>
    %25 = arith.mulf %20, %24 : vector<8x128xf32>
    %26 = vector.broadcast %5 : vector<1x128xf32> to vector<8x128xf32>
    %27 = arith.mulf %25, %26 : vector<8x128xf32>
    %28 = vector.broadcast %7 : vector<1x128xf32> to vector<8x128xf32>
    %29 = arith.addf %27, %28 : vector<8x128xf32>
    %30 = arith.truncf %29 : vector<8x128xf32> to vector<8x128xbf16>
    %c0_12 = arith.constant 0 : index
    %c0_13 = arith.constant 0 : index
    %c0_14 = arith.constant 0 : index
    %31 = vector.load %arg7[%c0_12, %c0_13, %c0_14] : memref<1x128x384xbf16, #tpu.memory_space<vmem>>, vector<1x128x384xbf16>
    %32 = vector.shape_cast %31 : vector<1x128x384xbf16> to vector<128x384xbf16>
    %cst_15 = arith.constant dense<0.000000e+00> : vector<8x384xf32>
    %33 = tpu.matmul %30, %32, %cst_15 {dimension_numbers = #tpu.dot_dimension_numbers<[1], [0], [0], [1], [0, 0, 1, 1], [], []>} : vector<8x128xbf16>, vector<128x384xbf16>, vector<8x384xf32> -> vector<8x384xf32>
    %c0_16 = arith.constant 0 : index
    %c0_17 = arith.constant 0 : index
    %c0_18 = arith.constant 0 : index
    %34 = vector.load %arg8[%c0_16, %c0_17, %c0_18] : memref<1x1x384xf32, #tpu.memory_space<vmem>>, vector<1x1x384xf32>
    %35 = vector.shape_cast %34 : vector<1x1x384xf32> to vector<1x384xf32>
    %36 = vector.broadcast %35 : vector<1x384xf32> to vector<8x384xf32>
    %37 = arith.addf %33, %36 : vector<8x384xf32>
    %38 = arith.truncf %37 : vector<8x384xf32> to vector<8x384xbf16>
    %39 = vector.extract_strided_slice %38 {offsets = [0, 0], sizes = [8, 128], strides = [1, 1]} : vector<8x384xbf16> to vector<8x128xbf16>
    %40 = vector.extract_strided_slice %39 {offsets = [0, 0], sizes = [8, 32], strides = [1, 1]} : vector<8x128xbf16> to vector<8x32xbf16>
    %41 = vector.extract_strided_slice %39 {offsets = [0, 32], sizes = [8, 32], strides = [1, 1]} : vector<8x128xbf16> to vector<8x32xbf16>
    %42 = vector.extract_strided_slice %39 {offsets = [0, 64], sizes = [8, 32], strides = [1, 1]} : vector<8x128xbf16> to vector<8x32xbf16>
    %43 = vector.extract_strided_slice %39 {offsets = [0, 96], sizes = [8, 32], strides = [1, 1]} : vector<8x128xbf16> to vector<8x32xbf16>
    %44 = vector.shape_cast %40 : vector<8x32xbf16> to vector<1x8x32xbf16>
    %45 = vector.shape_cast %41 : vector<8x32xbf16> to vector<1x8x32xbf16>
    %46 = vector.shape_cast %42 : vector<8x32xbf16> to vector<1x8x32xbf16>
    %47 = vector.shape_cast %43 : vector<8x32xbf16> to vector<1x8x32xbf16>
    %48 = tpu.concatenate %44, %45, %46, %47 in 0 : vector<1x8x32xbf16>, vector<1x8x32xbf16>, vector<1x8x32xbf16>, vector<1x8x32xbf16> -> vector<4x8x32xbf16>
    %49 = vector.extract_strided_slice %38 {offsets = [0, 128], sizes = [8, 128], strides = [1, 1]} : vector<8x384xbf16> to vector<8x128xbf16>
    %50 = vector.extract_strided_slice %49 {offsets = [0, 0], sizes = [8, 32], strides = [1, 1]} : vector<8x128xbf16> to vector<8x32xbf16>
    %51 = vector.extract_strided_slice %49 {offsets = [0, 32], sizes = [8, 32], strides = [1, 1]} : vector<8x128xbf16> to vector<8x32xbf16>
    %52 = vector.extract_strided_slice %49 {offsets = [0, 64], sizes = [8, 32], strides = [1, 1]} : vector<8x128xbf16> to vector<8x32xbf16>
    %53 = vector.extract_strided_slice %49 {offsets = [0, 96], sizes = [8, 32], strides = [1, 1]} : vector<8x128xbf16> to vector<8x32xbf16>
    %54 = vector.shape_cast %50 : vector<8x32xbf16> to vector<1x8x32xbf16>
    %55 = vector.shape_cast %51 : vector<8x32xbf16> to vector<1x8x32xbf16>
    %56 = vector.shape_cast %52 : vector<8x32xbf16> to vector<1x8x32xbf16>
    %57 = vector.shape_cast %53 : vector<8x32xbf16> to vector<1x8x32xbf16>
    %58 = tpu.concatenate %54, %55, %56, %57 in 0 : vector<1x8x32xbf16>, vector<1x8x32xbf16>, vector<1x8x32xbf16>, vector<1x8x32xbf16> -> vector<4x8x32xbf16>
    %59 = vector.extract_strided_slice %38 {offsets = [0, 256], sizes = [8, 128], strides = [1, 1]} : vector<8x384xbf16> to vector<8x128xbf16>
    %60 = vector.extract_strided_slice %59 {offsets = [0, 0], sizes = [8, 32], strides = [1, 1]} : vector<8x128xbf16> to vector<8x32xbf16>
    %61 = vector.extract_strided_slice %59 {offsets = [0, 32], sizes = [8, 32], strides = [1, 1]} : vector<8x128xbf16> to vector<8x32xbf16>
    %62 = vector.extract_strided_slice %59 {offsets = [0, 64], sizes = [8, 32], strides = [1, 1]} : vector<8x128xbf16> to vector<8x32xbf16>
    %63 = vector.extract_strided_slice %59 {offsets = [0, 96], sizes = [8, 32], strides = [1, 1]} : vector<8x128xbf16> to vector<8x32xbf16>
    %64 = vector.shape_cast %60 : vector<8x32xbf16> to vector<1x8x32xbf16>
    %65 = vector.shape_cast %61 : vector<8x32xbf16> to vector<1x8x32xbf16>
    %66 = vector.shape_cast %62 : vector<8x32xbf16> to vector<1x8x32xbf16>
    %67 = vector.shape_cast %63 : vector<8x32xbf16> to vector<1x8x32xbf16>
    %68 = tpu.concatenate %64, %65, %66, %67 in 0 : vector<1x8x32xbf16>, vector<1x8x32xbf16>, vector<1x8x32xbf16>, vector<1x8x32xbf16> -> vector<4x8x32xbf16>
    "tpu.trace_start"() <{level = 10 : i32, message = "nqd,nkd->nqk"}> : () -> ()
    %cst_19 = arith.constant dense<0.000000e+00> : vector<4x8x8xf32>
    %69 = tpu.matmul %48, %58, %cst_19 {dimension_numbers = #tpu.dot_dimension_numbers<[2], [2], [1], [1], [0, 0, 0, 1, 1, 1], [0], [0]>} : vector<4x8x32xbf16>, vector<4x8x32xbf16>, vector<4x8x8xf32> -> vector<4x8x8xf32>
    "tpu.trace_stop"() : () -> ()
    %cst_20 = arith.constant 0.176776692 : f32
    %70 = vector.broadcast %cst_20 : f32 to vector<4x8x8xf32>
    %71 = arith.mulf %69, %70 : vector<4x8x8xf32>
    %c0_21 = arith.constant 0 : index
    %c0_22 = arith.constant 0 : index
    %72 = vector.load %arg4[%c0_21, %c0_22] : memref<8x8xf32, #tpu.memory_space<vmem>>, vector<8x8xf32>
    %73 = vector.shape_cast %72 : vector<8x8xf32> to vector<1x8x8xf32>
    %74 = vector.broadcast %73 : vector<1x8x8xf32> to vector<4x8x8xf32>
    %75 = arith.addf %71, %74 : vector<4x8x8xf32>
    %cst_23 = arith.constant dense<0xFF800000> : vector<4x8xf32>
    %76 = vector.multi_reduction <maximumf>, %75, %cst_23 [2] : vector<4x8x8xf32> to vector<4x8xf32>
    %77 = vector.shape_cast %76 : vector<4x8xf32> to vector<4x8x1xf32>
    %78 = vector.broadcast %77 : vector<4x8x1xf32> to vector<4x8x8xf32>
    %79 = arith.subf %75, %78 : vector<4x8x8xf32>
    %80 = math.exp %79 : vector<4x8x8xf32>
    %cst_24 = arith.constant dense<0.000000e+00> : vector<4x8xf32>
    %81 = vector.multi_reduction <add>, %80, %cst_24 [2] : vector<4x8x8xf32> to vector<4x8xf32>
    %82 = vector.shape_cast %81 : vector<4x8xf32> to vector<4x8x1xf32>
    %83 = tpu.reciprocal %82 {approx = true} : vector<4x8x1xf32> -> vector<4x8x1xf32>
    %84 = vector.broadcast %83 : vector<4x8x1xf32> to vector<4x8x8xf32>
    %85 = arith.mulf %80, %84 : vector<4x8x8xf32>
    %86 = arith.truncf %85 : vector<4x8x8xf32> to vector<4x8x8xbf16>
    "tpu.trace_start"() <{level = 10 : i32, message = "nqk,nkd->nqd"}> : () -> ()
    %cst_25 = arith.constant dense<0.000000e+00> : vector<4x8x32xf32>
    %87 = tpu.matmul %86, %68, %cst_25 {dimension_numbers = #tpu.dot_dimension_numbers<[2], [1], [1], [2], [0, 0, 0, 1, 1, 2], [0], [0]>} : vector<4x8x8xbf16>, vector<4x8x32xbf16>, vector<4x8x32xf32> -> vector<4x8x32xf32>
    "tpu.trace_stop"() : () -> ()
    %88 = vector.shape_cast %87 : vector<4x8x32xf32> to vector<4x1x8x32xf32>
    %89 = vector.extract_strided_slice %88 {offsets = [0, 0, 0, 0], sizes = [1, 1, 8, 32], strides = [1, 1, 1, 1]} : vector<4x1x8x32xf32> to vector<1x1x8x32xf32>
    %90 = vector.shape_cast %89 : vector<1x1x8x32xf32> to vector<1x8x32xf32>
    %91 = vector.shape_cast %90 : vector<1x8x32xf32> to vector<8x32xf32>
    %c0_26 = arith.constant 0 : index
    %c0_27 = arith.constant 0 : index
    %92 = vector.load %arg22[%c0_26, %c0_27] : memref<8x128xf32, #tpu.memory_space<vmem>>, vector<8x32xf32>
    tpu.vector_store %arg22[%c0_26, %c0_27], %91 {strides = array<i32>} : memref<8x128xf32, #tpu.memory_space<vmem>>, vector<8x32xf32>,
    %93 = vector.extract_strided_slice %88 {offsets = [1, 0, 0, 0], sizes = [1, 1, 8, 32], strides = [1, 1, 1, 1]} : vector<4x1x8x32xf32> to vector<1x1x8x32xf32>
    %94 = vector.shape_cast %93 : vector<1x1x8x32xf32> to vector<1x8x32xf32>
    %95 = vector.shape_cast %94 : vector<1x8x32xf32> to vector<8x32xf32>
    %c0_28 = arith.constant 0 : index
    %c32 = arith.constant 32 : index
    %96 = vector.load %arg22[%c0_28, %c32] : memref<8x128xf32, #tpu.memory_space<vmem>>, vector<8x32xf32>
    tpu.vector_store %arg22[%c0_28, %c32], %95 {strides = array<i32>} : memref<8x128xf32, #tpu.memory_space<vmem>>, vector<8x32xf32>,
    %97 = vector.extract_strided_slice %88 {offsets = [2, 0, 0, 0], sizes = [1, 1, 8, 32], strides = [1, 1, 1, 1]} : vector<4x1x8x32xf32> to vector<1x1x8x32xf32>
    %98 = vector.shape_cast %97 : vector<1x1x8x32xf32> to vector<1x8x32xf32>
    %99 = vector.shape_cast %98 : vector<1x8x32xf32> to vector<8x32xf32>
    %c0_29 = arith.constant 0 : index
    %c64 = arith.constant 64 : index
    %100 = vector.load %arg22[%c0_29, %c64] : memref<8x128xf32, #tpu.memory_space<vmem>>, vector<8x32xf32>
    tpu.vector_store %arg22[%c0_29, %c64], %99 {strides = array<i32>} : memref<8x128xf32, #tpu.memory_space<vmem>>, vector<8x32xf32>,
    %101 = vector.extract_strided_slice %88 {offsets = [3, 0, 0, 0], sizes = [1, 1, 8, 32], strides = [1, 1, 1, 1]} : vector<4x1x8x32xf32> to vector<1x1x8x32xf32>
    %102 = vector.shape_cast %101 : vector<1x1x8x32xf32> to vector<1x8x32xf32>
    %103 = vector.shape_cast %102 : vector<1x8x32xf32> to vector<8x32xf32>
    %c0_30 = arith.constant 0 : index
    %c96 = arith.constant 96 : index
    %104 = vector.load %arg22[%c0_30, %c96] : memref<8x128xf32, #tpu.memory_space<vmem>>, vector<8x32xf32>
    tpu.vector_store %arg22[%c0_30, %c96], %103 {strides = array<i32>} : memref<8x128xf32, #tpu.memory_space<vmem>>, vector<8x32xf32>,
    %c0_31 = arith.constant 0 : index
    %c0_32 = arith.constant 0 : index
    %105 = vector.load %arg22[%c0_31, %c0_32] : memref<8x128xf32, #tpu.memory_space<vmem>>, vector<8x128xf32>
    %106 = arith.truncf %105 : vector<8x128xf32> to vector<8x128xbf16>
    %c0_33 = arith.constant 0 : index
    %c0_34 = arith.constant 0 : index
    %c0_35 = arith.constant 0 : index
    %107 = vector.load %arg9[%c0_33, %c0_34, %c0_35] : memref<1x128x128xbf16, #tpu.memory_space<vmem>>, vector<1x128x128xbf16>
    %108 = vector.shape_cast %107 : vector<1x128x128xbf16> to vector<128x128xbf16>
    %cst_36 = arith.constant dense<0.000000e+00> : vector<8x128xf32>
    %109 = tpu.matmul %106, %108, %cst_36 {dimension_numbers = #tpu.dot_dimension_numbers<[1], [0], [0], [1], [0, 0, 1, 1], [], []>} : vector<8x128xbf16>, vector<128x128xbf16>, vector<8x128xf32> -> vector<8x128xf32>
    %c0_37 = arith.constant 0 : index
    %c0_38 = arith.constant 0 : index
    %c0_39 = arith.constant 0 : index
    %110 = vector.load %arg10[%c0_37, %c0_38, %c0_39] : memref<1x1x128xf32, #tpu.memory_space<vmem>>, vector<1x1x128xf32>
    %111 = vector.shape_cast %110 : vector<1x1x128xf32> to vector<1x128xf32>
    %112 = vector.broadcast %111 : vector<1x128xf32> to vector<8x128xf32>
    %113 = arith.addf %109, %112 : vector<8x128xf32>
    %114 = arith.addf %3, %113 : vector<8x128xf32>
    %c0_40 = arith.constant 0 : index
    %c0_41 = arith.constant 0 : index
    %c0_42 = arith.constant 0 : index
    %115 = vector.load %arg11[%c0_40, %c0_41, %c0_42] : memref<1x1x128xf32, #tpu.memory_space<vmem>>, vector<1x1x128xf32>
    %116 = vector.shape_cast %115 : vector<1x1x128xf32> to vector<1x128xf32>
    %c0_43 = arith.constant 0 : index
    %c0_44 = arith.constant 0 : index
    %c0_45 = arith.constant 0 : index
    %117 = vector.load %arg12[%c0_43, %c0_44, %c0_45] : memref<1x1x128xf32, #tpu.memory_space<vmem>>, vector<1x1x128xf32>
    %118 = vector.shape_cast %117 : vector<1x1x128xf32> to vector<1x128xf32>
    %cst_46 = arith.constant dense<0.000000e+00> : vector<8xf32>
    %119 = vector.multi_reduction <add>, %114, %cst_46 [1] : vector<8x128xf32> to vector<8xf32>
    %120 = vector.shape_cast %119 : vector<8xf32> to vector<8x1xf32>
    %cst_47 = arith.constant 1.280000e+02 : f32
    %121 = vector.broadcast %cst_47 : f32 to vector<8x1xf32>
    %122 = arith.divf %120, %121 : vector<8x1xf32>
    %123 = vector.broadcast %122 : vector<8x1xf32> to vector<8x128xf32>
    %124 = arith.subf %114, %123 : vector<8x128xf32>
    %125 = arith.mulf %124, %124 : vector<8x128xf32>
    %cst_48 = arith.constant dense<0.000000e+00> : vector<8xf32>
    %126 = vector.multi_reduction <add>, %125, %cst_48 [1] : vector<8x128xf32> to vector<8xf32>
    %127 = vector.shape_cast %126 : vector<8xf32> to vector<8x1xf32>
    %cst_49 = arith.constant 1.280000e+02 : f32
    %128 = vector.broadcast %cst_49 : f32 to vector<8x1xf32>
    %129 = arith.divf %127, %128 : vector<8x1xf32>
    %130 = vector.broadcast %122 : vector<8x1xf32> to vector<8x128xf32>
    %131 = arith.subf %114, %130 : vector<8x128xf32>
    %cst_50 = arith.constant 9.99999974E-6 : f32
    %132 = vector.broadcast %cst_50 : f32 to vector<8x1xf32>
    %133 = arith.addf %129, %132 : vector<8x1xf32>
    %134 = math.rsqrt %133 : vector<8x1xf32>
    %135 = vector.broadcast %134 : vector<8x1xf32> to vector<8x128xf32>
    %136 = arith.mulf %131, %135 : vector<8x128xf32>
    %137 = vector.broadcast %116 : vector<1x128xf32> to vector<8x128xf32>
    %138 = arith.mulf %136, %137 : vector<8x128xf32>
    %139 = vector.broadcast %118 : vector<1x128xf32> to vector<8x128xf32>
    %140 = arith.addf %138, %139 : vector<8x128xf32>
    %141 = arith.truncf %140 : vector<8x128xf32> to vector<8x128xbf16>
    %c0_51 = arith.constant 0 : index
    %c0_52 = arith.constant 0 : index
    %c0_53 = arith.constant 0 : index
    %142 = vector.load %arg13[%c0_51, %c0_52, %c0_53] : memref<1x128x512xbf16, #tpu.memory_space<vmem>>, vector<1x128x512xbf16>
    %143 = vector.shape_cast %142 : vector<1x128x512xbf16> to vector<128x512xbf16>
    %cst_54 = arith.constant dense<0.000000e+00> : vector<8x512xf32>
    %144 = tpu.matmul %141, %143, %cst_54 {dimension_numbers = #tpu.dot_dimension_numbers<[1], [0], [0], [1], [0, 0, 1, 1], [], []>} : vector<8x128xbf16>, vector<128x512xbf16>, vector<8x512xf32> -> vector<8x512xf32>
    %c0_55 = arith.constant 0 : index
    %c0_56 = arith.constant 0 : index
    %c0_57 = arith.constant 0 : index
    %145 = vector.load %arg14[%c0_55, %c0_56, %c0_57] : memref<1x1x512xf32, #tpu.memory_space<vmem>>, vector<1x1x512xf32>
    %146 = vector.shape_cast %145 : vector<1x1x512xf32> to vector<1x512xf32>
    %147 = vector.broadcast %146 : vector<1x512xf32> to vector<8x512xf32>
    %148 = arith.addf %144, %147 : vector<8x512xf32>
    %cst_58 = arith.constant 1.702000e+00 : f32
    %149 = vector.broadcast %cst_58 : f32 to vector<8x512xf32>
    %150 = arith.mulf %149, %148 : vector<8x512xf32>
    %151 = arith.negf %150 : vector<8x512xf32>
    %152 = math.exp %151 : vector<8x512xf32>
    %cst_59 = arith.constant 1.000000e+00 : f32
    %153 = vector.broadcast %cst_59 : f32 to vector<8x512xf32>
    %154 = arith.addf %153, %152 : vector<8x512xf32>
    %155 = arith.divf %153, %154 : vector<8x512xf32>
    %156 = arith.mulf %148, %155 : vector<8x512xf32>
    %157 = arith.truncf %156 : vector<8x512xf32> to vector<8x512xbf16>
    %c0_60 = arith.constant 0 : index
    %c0_61 = arith.constant 0 : index
    %c0_62 = arith.constant 0 : index
    %158 = vector.load %arg15[%c0_60, %c0_61, %c0_62] : memref<1x512x128xbf16, #tpu.memory_space<vmem>>, vector<1x512x128xbf16>
    %159 = vector.shape_cast %158 : vector<1x512x128xbf16> to vector<512x128xbf16>
    %cst_63 = arith.constant dense<0.000000e+00> : vector<8x128xf32>
    %160 = tpu.matmul %157, %159, %cst_63 {dimension_numbers = #tpu.dot_dimension_numbers<[1], [0], [0], [1], [0, 0, 1, 1], [], []>} : vector<8x512xbf16>, vector<512x128xbf16>, vector<8x128xf32> -> vector<8x128xf32>
    %c0_64 = arith.constant 0 : index
    %c0_65 = arith.constant 0 : index
    %c0_66 = arith.constant 0 : index
    %161 = vector.load %arg16[%c0_64, %c0_65, %c0_66] : memref<1x1x128xf32, #tpu.memory_space<vmem>>, vector<1x1x128xf32>
    %162 = vector.shape_cast %161 : vector<1x1x128xf32> to vector<1x128xf32>
    %163 = vector.broadcast %162 : vector<1x128xf32> to vector<8x128xf32>
    %164 = arith.addf %160, %163 : vector<8x128xf32>
    %165 = arith.addf %114, %164 : vector<8x128xf32>
    %c0_67 = arith.constant 0 : index
    %c0_68 = arith.constant 0 : index
    %166 = vector.load %arg21[%c0_67, %c0_68] : memref<8x128xf32, #tpu.memory_space<vmem>>, vector<8x128xf32>
    tpu.vector_store %arg21[%c0_67, %c0_68], %165 {strides = array<i32>} : memref<8x128xf32, #tpu.memory_space<vmem>>, vector<8x128xf32>,
    %c1_i32 = arith.constant 1 : i32
    %167 = arith.cmpi eq, %arg1, %c1_i32 : i32
    %168 = arith.extui %167 : i1 to i32
    %c0_i32_69 = arith.constant 0 : i32
    %169 = arith.cmpi ne, %168, %c0_i32_69 : i32
    scf.if %169 {
      %c1_i32_70 = arith.constant 1 : i32
      %170 = arith.muli %arg0, %c1_i32_70 : i32
      %c0_i32_71 = arith.constant 0 : i32
      %171 = arith.addi %170, %c0_i32_71 : i32
      %172 = arith.index_cast %171 : i32 to index
      %173 = memref.load %arg2[%172] : memref<2xi32, #tpu.memory_space<smem>>
      %c0_i32_72 = arith.constant 0 : i32
      %174 = arith.addi %c0_i32_72, %173 : i32
      %175 = arith.index_cast %174 : i32 to index
      %c0_73 = arith.constant 0 : index
      %176 = vector.load %arg21[%175, %c0_73] : memref<8x128xf32, #tpu.memory_space<vmem>>, vector<1x128xf32>
      %c0_74 = arith.constant 0 : index
      %c0_75 = arith.constant 0 : index
      %177 = vector.load %arg17[%c0_74, %c0_75] : memref<1x128xf32, #tpu.memory_space<vmem>>, vector<1x128xf32>
      %c0_76 = arith.constant 0 : index
      %c0_77 = arith.constant 0 : index
      %178 = vector.load %arg18[%c0_76, %c0_77] : memref<1x128xf32, #tpu.memory_space<vmem>>, vector<1x128xf32>
      %cst_78 = arith.constant dense<0.000000e+00> : vector<1xf32>
      %179 = vector.multi_reduction <add>, %176, %cst_78 [1] : vector<1x128xf32> to vector<1xf32>
      %180 = vector.shape_cast %179 : vector<1xf32> to vector<1x1xf32>
      %cst_79 = arith.constant 1.280000e+02 : f32
      %181 = vector.broadcast %cst_79 : f32 to vector<1x1xf32>
      %182 = arith.divf %180, %181 : vector<1x1xf32>
      %183 = vector.broadcast %182 : vector<1x1xf32> to vector<1x128xf32>
      %184 = arith.subf %176, %183 : vector<1x128xf32>
      %185 = arith.mulf %184, %184 : vector<1x128xf32>
      %cst_80 = arith.constant dense<0.000000e+00> : vector<1xf32>
      %186 = vector.multi_reduction <add>, %185, %cst_80 [1] : vector<1x128xf32> to vector<1xf32>
      %187 = vector.shape_cast %186 : vector<1xf32> to vector<1x1xf32>
      %cst_81 = arith.constant 1.280000e+02 : f32
      %188 = vector.broadcast %cst_81 : f32 to vector<1x1xf32>
      %189 = arith.divf %187, %188 : vector<1x1xf32>
      %190 = vector.broadcast %182 : vector<1x1xf32> to vector<1x128xf32>
      %191 = arith.subf %176, %190 : vector<1x128xf32>
      %cst_82 = arith.constant 9.99999974E-6 : f32
      %192 = vector.broadcast %cst_82 : f32 to vector<1x1xf32>
      %193 = arith.addf %189, %192 : vector<1x1xf32>
      %194 = math.rsqrt %193 : vector<1x1xf32>
      %195 = vector.broadcast %194 : vector<1x1xf32> to vector<1x128xf32>
      %196 = arith.mulf %191, %195 : vector<1x128xf32>
      %197 = arith.mulf %196, %177 : vector<1x128xf32>
      %198 = arith.addf %197, %178 : vector<1x128xf32>
      %199 = arith.truncf %198 : vector<1x128xf32> to vector<1x128xbf16>
      %c0_83 = arith.constant 0 : index
      %c0_84 = arith.constant 0 : index
      %200 = vector.load %arg19[%c0_83, %c0_84] : memref<128x128xbf16, #tpu.memory_space<vmem>>, vector<128x128xbf16>
      %cst_85 = arith.constant dense<0.000000e+00> : vector<1x128xf32>
      %201 = tpu.matmul %199, %200, %cst_85 {dimension_numbers = #tpu.dot_dimension_numbers<[1], [0], [0], [1], [0, 0, 1, 1], [], []>} : vector<1x128xbf16>, vector<128x128xbf16>, vector<1x128xf32> -> vector<1x128xf32>
      %202 = arith.mulf %201, %201 : vector<1x128xf32>
      %cst_86 = arith.constant dense<0.000000e+00> : vector<1xf32>
      %203 = vector.multi_reduction <add>, %202, %cst_86 [1] : vector<1x128xf32> to vector<1xf32>
      %204 = vector.shape_cast %203 : vector<1xf32> to vector<1x1xf32>
      %cst_87 = arith.constant 9.99999996E-13 : f32
      %205 = vector.broadcast %cst_87 : f32 to vector<1x1xf32>
      %206 = arith.addf %204, %205 : vector<1x1xf32>
      %207 = math.rsqrt %206 : vector<1x1xf32>
      %208 = vector.broadcast %207 : vector<1x1xf32> to vector<1x128xf32>
      %209 = arith.mulf %201, %208 : vector<1x128xf32>
      %c0_88 = arith.constant 0 : index
      %c0_89 = arith.constant 0 : index
      %c0_90 = arith.constant 0 : index
      %210 = vector.load %arg20[%c0_88, %c0_89, %c0_90] : memref<1x1x128xf32, #tpu.memory_space<vmem>>, vector<1x1x128xf32>
      %211 = vector.shape_cast %210 : vector<1x1x128xf32> to vector<1x128xf32>
      %212 = vector.shape_cast %209 : vector<1x128xf32> to vector<1x1x128xf32>
      tpu.vector_store %arg20[%c0_88, %c0_89, %c0_90], %212 {strides = array<i32>} : memref<1x1x128xf32, #tpu.memory_space<vmem>>, vector<1x1x128xf32>,
    } else {
    }
    return
  }
  func.func @transform_1(%arg0: i32, %arg1: i32, %arg2: memref<2xi32, #tpu.memory_space<smem>>) -> (i32, i32) {
    %c0_i32 = arith.constant 0 : i32
    %c0_i32_0 = arith.constant 0 : i32
    %c0_i32_1 = arith.constant 0 : i32
    return %c0_i32, %c0_i32_0 : i32, i32
  }
  func.func @transform_2(%arg0: i32, %arg1: i32, %arg2: memref<2xi32, #tpu.memory_space<smem>>) -> (i32, i32, i32) {
    %c0_i32 = arith.constant 0 : i32
    %c0_i32_0 = arith.constant 0 : i32
    %c0_i32_1 = arith.constant 0 : i32
    return %arg1, %c0_i32, %c0_i32_0 : i32, i32, i32
  }
  func.func @transform_3(%arg0: i32, %arg1: i32, %arg2: memref<2xi32, #tpu.memory_space<smem>>) -> (i32, i32, i32) {
    %c0_i32 = arith.constant 0 : i32
    %c0_i32_0 = arith.constant 0 : i32
    %c0_i32_1 = arith.constant 0 : i32
    return %arg1, %c0_i32, %c0_i32_0 : i32, i32, i32
  }
  func.func @transform_4(%arg0: i32, %arg1: i32, %arg2: memref<2xi32, #tpu.memory_space<smem>>) -> (i32, i32, i32) {
    %c0_i32 = arith.constant 0 : i32
    %c0_i32_0 = arith.constant 0 : i32
    %c0_i32_1 = arith.constant 0 : i32
    return %arg1, %c0_i32, %c0_i32_0 : i32, i32, i32
  }
  func.func @transform_5(%arg0: i32, %arg1: i32, %arg2: memref<2xi32, #tpu.memory_space<smem>>) -> (i32, i32, i32) {
    %c0_i32 = arith.constant 0 : i32
    %c0_i32_0 = arith.constant 0 : i32
    %c0_i32_1 = arith.constant 0 : i32
    return %arg1, %c0_i32, %c0_i32_0 : i32, i32, i32
  }
  func.func @transform_6(%arg0: i32, %arg1: i32, %arg2: memref<2xi32, #tpu.memory_space<smem>>) -> (i32, i32, i32) {
    %c0_i32 = arith.constant 0 : i32
    %c0_i32_0 = arith.constant 0 : i32
    %c0_i32_1 = arith.constant 0 : i32
    return %arg1, %c0_i32, %c0_i32_0 : i32, i32, i32
  }
  func.func @transform_7(%arg0: i32, %arg1: i32, %arg2: memref<2xi32, #tpu.memory_space<smem>>) -> (i32, i32, i32) {
    %c0_i32 = arith.constant 0 : i32
    %c0_i32_0 = arith.constant 0 : i32
    %c0_i32_1 = arith.constant 0 : i32
    return %arg1, %c0_i32, %c0_i32_0 : i32, i32, i32
  }
  func.func @transform_8(%arg0: i32, %arg1: i32, %arg2: memref<2xi32, #tpu.memory_space<smem>>) -> (i32, i32, i32) {
    %c0_i32 = arith.constant 0 : i32
    %c0_i32_0 = arith.constant 0 : i32
    %c0_i32_1 = arith.constant 0 : i32
    return %arg1, %c0_i32, %c0_i32_0 : i32, i32, i32
  }
  func.func @transform_9(%arg0: i32, %arg1: i32, %arg2: memref<2xi32, #tpu.memory_space<smem>>) -> (i32, i32, i32) {
    %c0_i32 = arith.constant 0 : i32
    %c0_i32_0 = arith.constant 0 : i32
    %c0_i32_1 = arith.constant 0 : i32
    return %arg1, %c0_i32, %c0_i32_0 : i32, i32, i32
  }
  func.func @transform_10(%arg0: i32, %arg1: i32, %arg2: memref<2xi32, #tpu.memory_space<smem>>) -> (i32, i32, i32) {
    %c0_i32 = arith.constant 0 : i32
    %c0_i32_0 = arith.constant 0 : i32
    %c0_i32_1 = arith.constant 0 : i32
    return %arg1, %c0_i32, %c0_i32_0 : i32, i32, i32
  }
  func.func @transform_11(%arg0: i32, %arg1: i32, %arg2: memref<2xi32, #tpu.memory_space<smem>>) -> (i32, i32, i32) {
    %c0_i32 = arith.constant 0 : i32
    %c0_i32_0 = arith.constant 0 : i32
    %c0_i32_1 = arith.constant 0 : i32
    return %arg1, %c0_i32, %c0_i32_0 : i32, i32, i32
  }
  func.func @transform_12(%arg0: i32, %arg1: i32, %arg2: memref<2xi32, #tpu.memory_space<smem>>) -> (i32, i32, i32) {
    %c0_i32 = arith.constant 0 : i32
    %c0_i32_0 = arith.constant 0 : i32
    %c0_i32_1 = arith.constant 0 : i32
    return %arg1, %c0_i32, %c0_i32_0 : i32, i32, i32
  }
  func.func @transform_13(%arg0: i32, %arg1: i32, %arg2: memref<2xi32, #tpu.memory_space<smem>>) -> (i32, i32, i32) {
    %c0_i32 = arith.constant 0 : i32
    %c0_i32_0 = arith.constant 0 : i32
    %c0_i32_1 = arith.constant 0 : i32
    return %arg1, %c0_i32, %c0_i32_0 : i32, i32, i32
  }
  func.func @transform_14(%arg0: i32, %arg1: i32, %arg2: memref<2xi32, #tpu.memory_space<smem>>) -> (i32, i32) {
    %c0_i32 = arith.constant 0 : i32
    %c0_i32_0 = arith.constant 0 : i32
    %c0_i32_1 = arith.constant 0 : i32
    return %c0_i32, %c0_i32_0 : i32, i32
  }
  func.func @transform_15(%arg0: i32, %arg1: i32, %arg2: memref<2xi32, #tpu.memory_space<smem>>) -> (i32, i32) {
    %c0_i32 = arith.constant 0 : i32
    %c0_i32_0 = arith.constant 0 : i32
    %c0_i32_1 = arith.constant 0 : i32
    return %c0_i32, %c0_i32_0 : i32, i32
  }
  func.func @transform_16(%arg0: i32, %arg1: i32, %arg2: memref<2xi32, #tpu.memory_space<smem>>) -> (i32, i32) {
    %c0_i32 = arith.constant 0 : i32
    %c0_i32_0 = arith.constant 0 : i32
    %c0_i32_1 = arith.constant 0 : i32
    return %c0_i32, %c0_i32_0 : i32, i32
  }
  func.func @transform_17(%arg0: i32, %arg1: i32, %arg2: memref<2xi32, #tpu.memory_space<smem>>) -> (i32, i32, i32) {
    %c0_i32 = arith.constant 0 : i32
    %c0_i32_0 = arith.constant 0 : i32
    %c0_i32_1 = arith.constant 0 : i32
    return %arg0, %c0_i32, %c0_i32_0 : i32, i32, i32
  }
}

</mosaic_0001>

<llo_original>
// kernel: clip_text_embed.1
$region0: #{clip_text_embed.1}
  #allocation0 [shape = 'u32[]', space=smem, size = 0x4, offset = 0x4, fixed_abs, tag = 'smem constant byte address 0x4 - core index']
  #allocation1 [shape = 'u32[144,128]{1,0:T(1,128)}', space=vmem, size = 0x12000, scoped, tag = 'internal scratch']
  #allocation2 [shape = 'f32[8,128]{1,0:T(8,128)}', space=vmem, size = 0x1000, scoped, tag = 'scratch operand']
  #allocation3 [shape = 'f32[8,128]{1,0:T(8,128)}', space=vmem, size = 0x1000, scoped, tag = 'scratch operand']
  #allocation4 [shape = 's32[1]{0}', space=sflag, size = 0x4, scoped, tag = 'scratch operand']
  #allocation5 [shape = 's32[1]{0}', space=sflag, size = 0x4, scoped, tag = 'scoped memory for clip_text_embed.1']
  #allocation6 [shape = 'u8[512]{0}', space=smem, size = 0x200, scoped, tag = 'prefetched SMEM operand 0']
  #allocation17 [shape = 's32[]', space=sflag, size = 0x4, offset = 0, fixed_abs, tag = 'sflag constant byte address 0x0 - dummy sync flag']
  %s0 = inlined_call_operand.vmem [shape: s32[2], index: 0, kind: input, shape index: {}]
  %s1 = inlined_call_operand.vmem [shape: f32[2,8,128], index: 1, kind: input, shape index: {}]
  %s2 = inlined_call_operand.vmem [shape: f32[8,8], index: 2, kind: input, shape index: {}]
  %s3 = inlined_call_operand.vmem [shape: f32[2,1,128], index: 3, kind: input, shape index: {}]
  %s4 = inlined_call_operand.vmem [shape: f32[2,1,128], index: 4, kind: input, shape index: {}]
  %s5 = inlined_call_operand.hbm [shape: bf16[2,128,384], index: 5, kind: input, shape index: {}]
  %s6 = inlined_call_operand.vmem [shape: f32[2,1,384], index: 6, kind: input, shape index: {}]
  %s7 = inlined_call_operand.vmem [shape: bf16[2,128,128], index: 7, kind: input, shape index: {}]
  %s8 = inlined_call_operand.vmem [shape: f32[2,1,128], index: 8, kind: input, shape index: {}]
  %s9 = inlined_call_operand.vmem [shape: f32[2,1,128], index: 9, kind: input, shape index: {}]
  %s10 = inlined_call_operand.vmem [shape: f32[2,1,128], index: 10, kind: input, shape index: {}]
  %s11 = inlined_call_operand.hbm [shape: bf16[2,128,512], index: 11, kind: input, shape index: {}]
  %s12 = inlined_call_operand.vmem [shape: f32[2,1,512], index: 12, kind: input, shape index: {}]
  %s13 = inlined_call_operand.hbm [shape: bf16[2,512,128], index: 13, kind: input, shape index: {}]
  %s14 = inlined_call_operand.vmem [shape: f32[2,1,128], index: 14, kind: input, shape index: {}]
  %s15 = inlined_call_operand.hbm [shape: f32[1,128], index: 15, kind: input, shape index: {}]
  %s16 = inlined_call_operand.hbm [shape: f32[1,128], index: 16, kind: input, shape index: {}]
  %s17 = inlined_call_operand.vmem [shape: bf16[128,128], index: 17, kind: input, shape index: {}]
  %s18 = inlined_call_operand.hbm [shape: f32[2,1,128], index: 18, kind: output, shape index: {}]
  %s19 = sld [smem:[#allocation0]]
  $region159: #{clip_text_embed.1} parent=0
    _
  %s21 = ssub.s32 1, %s19
  %s22 = scalar_select 0, %s21, %s19
  %s23 = sshll.u32 %s0, 4
  %s24 = int_to_ptr.vmem [resolvable:$true] %s23
  %26 = dma.vmem_to_smem %s24, 16, [#allocation6], [#allocation5]
  %27 = dma.done [#allocation5], 16
  %28 = sfence
  $region1: #{clip_text_embed.1} parent=0
    #allocation7 [shape = 'u8[196608]{0}', space=vmem, size = 0x30000, scoped, tag = 'input window, operand 5']
    #allocation8 [shape = 's32[2]{0}', space=sflag, size = 0x8, scoped, tag = 'scoped memory for clip_text_embed.1']
    #allocation9 [shape = 's32[2]{0}', space=sflag, size = 0x8, scoped, tag = 'scoped memory for clip_text_embed.1']
    #allocation10 [shape = 'u8[262144]{0}', space=vmem, size = 0x40000, scoped, tag = 'input window, operand 11']
    #allocation11 [shape = 's32[2]{0}', space=sflag, size = 0x8, scoped, tag = 'scoped memory for clip_text_embed.1']
    #allocation12 [shape = 'u8[262144]{0}', space=vmem, size = 0x40000, scoped, tag = 'input window, operand 13']
    #allocation13 [shape = 'u8[512]{0}', space=vmem, size = 0x400, scoped, tag = 'input window, operand 15, single buffered']
    #allocation14 [shape = 's32[1]{0}', space=sflag, size = 0x4, scoped, tag = 'scoped memory for clip_text_embed.1']
    #allocation15 [shape = 'u8[512]{0}', space=vmem, size = 0x400, scoped, tag = 'input window, operand 16, single buffered']
    #allocation16 [shape = 'u8[1024]{0}', space=vmem, size = 0x400, scoped, tag = 'output window, operand 0']
    %29 = vsyncpa [#allocation8], 0
    %s30 = scalar_lea.sflag [#allocation8], 1
    %31 = vsyncpa %s30, 0
    %32 = vsyncpa [#allocation11], 0
    %s33 = scalar_lea.sflag [#allocation11], 1
    %34 = vsyncpa %s33, 0
    %35 = vsyncpa [#allocation14], 0
    %36 = vsyncpa [#allocation9], 0
    %s37 = scalar_lea.sflag [#allocation9], 1
    %38 = vsyncpa %s37, 0
    loop: start=0, step=1, limit=6
    $region2: #{clip_text_embed.1} parent=1 // loop_pre_header
      _
    $region3: #{clip_text_embed.1} parent=1 // loop_header
      %s40 = sphi 0, %s44
      %p41 = scmp.ge.s32.totalorder %s40, 6
      %s47 = sphi 0, %s59
      %s48 = sphi 0, %s55
      %s49 = sphi 0, %s47
      %s50 = sphi 0, %s48
      %s51 = sphi 0, %s49
      %s52 = sphi 0, %s50
      %s60 = sphi 0, %s60
      %s62 = sphi 0, %s60
      %s63 = sphi 0, %s62
      %s77 = sphi 0, %s63
      %s83 = sphi 0, %s85
      %s86 = sphi 0, %s83
      %s87 = sphi 0, %s86
      %s103 = sphi 0, %s87
      %s109 = sphi 0, %s111
      %s112 = sphi 0, %s109
      %s113 = sphi 0, %s112
      %s129 = sphi 0, %s113
      %s135 = sphi 0, %s137
      %s138 = sphi 0, %s135
      %s139 = sphi 0, %s138
      %s155 = sphi 0, %s139
      %s161 = sphi 0, %s163
      %s164 = sphi 0, %s161
      %s165 = sphi 0, %s164
      %s181 = sphi 0, %s165
      %s187 = sphi 0, %s189
      %s190 = sphi 0, %s187
      %s191 = sphi 0, %s190
      %s207 = sphi 0, %s191
      %s213 = sphi 0, %s215
      %s216 = sphi 0, %s213
      %s217 = sphi 0, %s216
      %s233 = sphi 0, %s217
      %s239 = sphi 0, %s241
      %s242 = sphi 0, %s239
      %s243 = sphi 0, %s242
      %s259 = sphi 0, %s243
      %s265 = sphi 0, %s267
      %s268 = sphi 0, %s265
      %s269 = sphi 0, %s268
      %s285 = sphi 0, %s269
      %s291 = sphi 0, %s293
      %s294 = sphi 0, %s291
      %s295 = sphi 0, %s294
      %s311 = sphi 0, %s295
      %s317 = sphi 0, %s319
      %s320 = sphi 0, %s317
      %s321 = sphi 0, %s320
      %s337 = sphi 0, %s321
      %s343 = sphi 0, %s345
      %s346 = sphi 0, %s343
      %s347 = sphi 0, %s346
      %s363 = sphi 0, %s347
      %s369 = sphi 0, %s371
      %s372 = sphi 0, %s369
      %s373 = sphi 0, %s372
      %s389 = sphi 0, %s373
      %s393 = sphi 0, %s393
      %s395 = sphi 0, %s393
      %s396 = sphi 0, %s395
      %s410 = sphi 0, %s396
      %s414 = sphi 0, %s414
      %s416 = sphi 0, %s414
      %s417 = sphi 0, %s416
      %s431 = sphi 0, %s417
      %s435 = sphi 0, %s435
      %s437 = sphi 0, %s435
      %s438 = sphi 0, %s437
      %s452 = sphi 0, %s438
      %s458 = sphi 0, %s460
      %s461 = sphi 0, %s458
      %s462 = sphi 0, %s461
      %s478 = sphi 0, %s462
    $region4: #{clip_text_embed.1} parent=1 // loop_header_branch
      %43 = sbr.rel (%p41) target = $region8
    $region5: #{clip_text_embed.1} parent=1 // loop_body
      %s45 = ssub.s32 %s40, 1
      %s46 = ssub.s32 %s40, 2
      %s53 = sadd.s32 1, %s48
      %p54 = scmp.ge.s32.totalorder %s53, 2
      %s55 = scalar_select %p54, 0, %s53
      %s56 = sadd.s32 1, %s47
      %s57 = scalar_select %p54, %s56, %s47
      %p58 = scmp.ge.s32.totalorder %s57, 2
      %s59 = scalar_select %p58, 0, %s57
      %s61 = sadd.s32 %s60, 1
      %p64 = scmp.eq.s32.totalorder %s40, 3
      %p65 = scmp.ne.s32.totalorder %s60, %s62
      %p66 = scmp.eq.s32.totalorder %s40, 0
      %p67 = por %p65, %p66
      %p68 = scmp.ne.s32.totalorder %s60, %s62
      %p69 = scmp.eq.s32.totalorder %s45, 3
      %p70 = por %p68, %p69
      %p71 = scmp.ne.s32.totalorder %s62, %s63
      %p72 = scmp.eq.s32.totalorder %s45, 0
      %p73 = por %p71, %p72
      %p74 = scmp.ne.s32.totalorder %s62, %s63
      %p75 = scmp.eq.s32.totalorder %s46, 3
      %p76 = por %p74, %p75
      %p78 = scmp.ne.s32.totalorder %s63, %s77
      %p79 = scmp.eq.s32.totalorder %s46, 0
      %p80 = por %p78, %p79
      %s81 = ssub.s32 %s48, %s55
      %p82 = scmp.eq.s32.totalorder %s81, 0
      %s84 = sadd.s32 %s83, 1
      %s85 = scalar_select %p82, %s83, %s84
      %p88 = pneg %p82
      %p89 = scmp.eq.s32.totalorder %s40, 3
      %p90 = por %p88, %p89
      %p91 = scmp.ne.s32.totalorder %s83, %s86
      %p92 = scmp.eq.s32.totalorder %s40, 0
      %p93 = por %p91, %p92
      %p94 = scmp.ne.s32.totalorder %s83, %s86
      %p95 = scmp.eq.s32.totalorder %s45, 3
      %p96 = por %p94, %p95
      %p97 = scmp.ne.s32.totalorder %s86, %s87
      %p98 = scmp.eq.s32.totalorder %s45, 0
      %p99 = por %p97, %p98
      %p100 = scmp.ne.s32.totalorder %s86, %s87
      %p101 = scmp.eq.s32.totalorder %s46, 3
      %p102 = por %p100, %p101
      %p104 = scmp.ne.s32.totalorder %s87, %s103
      %p105 = scmp.eq.s32.totalorder %s46, 0
      %p106 = por %p104, %p105
      %s107 = ssub.s32 %s48, %s55
      %p108 = scmp.eq.s32.totalorder %s107, 0
      %s110 = sadd.s32 %s109, 1
      %s111 = scalar_select %p108, %s109, %s110
      %p114 = pneg %p108
      %p115 = scmp.eq.s32.totalorder %s40, 3
      %p116 = por %p114, %p115
      %p117 = scmp.ne.s32.totalorder %s109, %s112
      %p118 = scmp.eq.s32.totalorder %s40, 0
      %p119 = por %p117, %p118
      %p120 = scmp.ne.s32.totalorder %s109, %s112
      %p121 = scmp.eq.s32.totalorder %s45, 3
      %p122 = por %p120, %p121
      %p123 = scmp.ne.s32.totalorder %s112, %s113
      %p124 = scmp.eq.s32.totalorder %s45, 0
      %p125 = por %p123, %p124
      %p126 = scmp.ne.s32.totalorder %s112, %s113
      %p127 = scmp.eq.s32.totalorder %s46, 3
      %p128 = por %p126, %p127
      %p130 = scmp.ne.s32.totalorder %s113, %s129
      %p131 = scmp.eq.s32.totalorder %s46, 0
      %p132 = por %p130, %p131
      %s133 = ssub.s32 %s48, %s55
      %p134 = scmp.eq.s32.totalorder %s133, 0
      %s136 = sadd.s32 %s135, 1
      %s137 = scalar_select %p134, %s135, %s136
      %p140 = pneg %p134
      %p141 = scmp.eq.s32.totalorder %s40, 3
      %p142 = por %p140, %p141
      %p143 = scmp.ne.s32.totalorder %s135, %s138
      %p144 = scmp.eq.s32.totalorder %s40, 0
      %p145 = por %p143, %p144
      %p146 = scmp.ne.s32.totalorder %s135, %s138
      %p147 = scmp.eq.s32.totalorder %s45, 3
      %p148 = por %p146, %p147
      %p149 = scmp.ne.s32.totalorder %s138, %s139
      %p150 = scmp.eq.s32.totalorder %s45, 0
      %p151 = por %p149, %p150
      %p152 = scmp.ne.s32.totalorder %s138, %s139
      %p153 = scmp.eq.s32.totalorder %s46, 3
      %p154 = por %p152, %p153
      %p156 = scmp.ne.s32.totalorder %s139, %s155
      %p157 = scmp.eq.s32.totalorder %s46, 0
      %p158 = por %p156, %p157
      %s159 = ssub.s32 %s48, %s55
      %p160 = scmp.eq.s32.totalorder %s159, 0
      %s162 = sadd.s32 %s161, 1
      %s163 = scalar_select %p160, %s161, %s162
      %p166 = pneg %p160
      %p167 = scmp.eq.s32.totalorder %s40, 3
      %p168 = por %p166, %p167
      %p169 = scmp.ne.s32.totalorder %s161, %s164
      %p170 = scmp.eq.s32.totalorder %s40, 0
      %p171 = por %p169, %p170
      %p172 = scmp.ne.s32.totalorder %s161, %s164
      %p173 = scmp.eq.s32.totalorder %s45, 3
      %p174 = por %p172, %p173
      %p175 = scmp.ne.s32.totalorder %s164, %s165
      %p176 = scmp.eq.s32.totalorder %s45, 0
      %p177 = por %p175, %p176
      %p178 = scmp.ne.s32.totalorder %s164, %s165
      %p179 = scmp.eq.s32.totalorder %s46, 3
      %p180 = por %p178, %p179
      %p182 = scmp.ne.s32.totalorder %s165, %s181
      %p183 = scmp.eq.s32.totalorder %s46, 0
      %p184 = por %p182, %p183
      %s185 = ssub.s32 %s48, %s55
      %p186 = scmp.eq.s32.totalorder %s185, 0
      %s188 = sadd.s32 %s187, 1
      %s189 = scalar_select %p186, %s187, %s188
      %p192 = pneg %p186
      %p193 = scmp.eq.s32.totalorder %s40, 3
      %p194 = por %p192, %p193
      %p195 = scmp.ne.s32.totalorder %s187, %s190
      %p196 = scmp.eq.s32.totalorder %s40, 0
      %p197 = por %p195, %p196
      %p198 = scmp.ne.s32.totalorder %s187, %s190
      %p199 = scmp.eq.s32.totalorder %s45, 3
      %p200 = por %p198, %p199
      %p201 = scmp.ne.s32.totalorder %s190, %s191
      %p202 = scmp.eq.s32.totalorder %s45, 0
      %p203 = por %p201, %p202
      %p204 = scmp.ne.s32.totalorder %s190, %s191
      %p205 = scmp.eq.s32.totalorder %s46, 3
      %p206 = por %p204, %p205
      %p208 = scmp.ne.s32.totalorder %s191, %s207
      %p209 = scmp.eq.s32.totalorder %s46, 0
      %p210 = por %p208, %p209
      %s211 = ssub.s32 %s48, %s55
      %p212 = scmp.eq.s32.totalorder %s211, 0
      %s214 = sadd.s32 %s213, 1
      %s215 = scalar_select %p212, %s213, %s214
      %p218 = pneg %p212
      %p219 = scmp.eq.s32.totalorder %s40, 3
      %p220 = por %p218, %p219
      %p221 = scmp.ne.s32.totalorder %s213, %s216
      %p222 = scmp.eq.s32.totalorder %s40, 0
      %p223 = por %p221, %p222
      %p224 = scmp.ne.s32.totalorder %s213, %s216
      %p225 = scmp.eq.s32.totalorder %s45, 3
      %p226 = por %p224, %p225
      %p227 = scmp.ne.s32.totalorder %s216, %s217
      %p228 = scmp.eq.s32.totalorder %s45, 0
      %p229 = por %p227, %p228
      %p230 = scmp.ne.s32.totalorder %s216, %s217
      %p231 = scmp.eq.s32.totalorder %s46, 3
      %p232 = por %p230, %p231
      %p234 = scmp.ne.s32.totalorder %s217, %s233
      %p235 = scmp.eq.s32.totalorder %s46, 0
      %p236 = por %p234, %p235
      %s237 = ssub.s32 %s48, %s55
      %p238 = scmp.eq.s32.totalorder %s237, 0
      %s240 = sadd.s32 %s239, 1
      %s241 = scalar_select %p238, %s239, %s240
      %p244 = pneg %p238
      %p245 = scmp.eq.s32.totalorder %s40, 3
      %p246 = por %p244, %p245
      %p247 = scmp.ne.s32.totalorder %s239, %s242
      %p248 = scmp.eq.s32.totalorder %s40, 0
      %p249 = por %p247, %p248
      %p250 = scmp.ne.s32.totalorder %s239, %s242
      %p251 = scmp.eq.s32.totalorder %s45, 3
      %p252 = por %p250, %p251
      %p253 = scmp.ne.s32.totalorder %s242, %s243
      %p254 = scmp.eq.s32.totalorder %s45, 0
      %p255 = por %p253, %p254
      %p256 = scmp.ne.s32.totalorder %s242, %s243
      %p257 = scmp.eq.s32.totalorder %s46, 3
      %p258 = por %p256, %p257
      %p260 = scmp.ne.s32.totalorder %s243, %s259
      %p261 = scmp.eq.s32.totalorder %s46, 0
      %p262 = por %p260, %p261
      %s263 = ssub.s32 %s48, %s55
      %p264 = scmp.eq.s32.totalorder %s263, 0
      %s266 = sadd.s32 %s265, 1
      %s267 = scalar_select %p264, %s265, %s266
      %p270 = pneg %p264
      %p271 = scmp.eq.s32.totalorder %s40, 3
      %p272 = por %p270, %p271
      %p273 = scmp.ne.s32.totalorder %s265, %s268
      %p274 = scmp.eq.s32.totalorder %s40, 0
      %p275 = por %p273, %p274
      %p276 = scmp.ne.s32.totalorder %s265, %s268
      %p277 = scmp.eq.s32.totalorder %s45, 3
      %p278 = por %p276, %p277
      %p279 = scmp.ne.s32.totalorder %s268, %s269
      %p280 = scmp.eq.s32.totalorder %s45, 0
      %p281 = por %p279, %p280
      %p282 = scmp.ne.s32.totalorder %s268, %s269
      %p283 = scmp.eq.s32.totalorder %s46, 3
      %p284 = por %p282, %p283
      %p286 = scmp.ne.s32.totalorder %s269, %s285
      %p287 = scmp.eq.s32.totalorder %s46, 0
      %p288 = por %p286, %p287
      %s289 = ssub.s32 %s48, %s55
      %p290 = scmp.eq.s32.totalorder %s289, 0
      %s292 = sadd.s32 %s291, 1
      %s293 = scalar_select %p290, %s291, %s292
      %p296 = pneg %p290
      %p297 = scmp.eq.s32.totalorder %s40, 3
      %p298 = por %p296, %p297
      %p299 = scmp.ne.s32.totalorder %s291, %s294
      %p300 = scmp.eq.s32.totalorder %s40, 0
      %p301 = por %p299, %p300
      %p302 = scmp.ne.s32.totalorder %s291, %s294
      %p303 = scmp.eq.s32.totalorder %s45, 3
      %p304 = por %p302, %p303
      %p305 = scmp.ne.s32.totalorder %s294, %s295
      %p306 = scmp.eq.s32.totalorder %s45, 0
      %p307 = por %p305, %p306
      %p308 = scmp.ne.s32.totalorder %s294, %s295
      %p309 = scmp.eq.s32.totalorder %s46, 3
      %p310 = por %p308, %p309
      %p312 = scmp.ne.s32.totalorder %s295, %s311
      %p313 = scmp.eq.s32.totalorder %s46, 0
      %p314 = por %p312, %p313
      %s315 = ssub.s32 %s48, %s55
      %p316 = scmp.eq.s32.totalorder %s315, 0
      %s318 = sadd.s32 %s317, 1
      %s319 = scalar_select %p316, %s317, %s318
      %p322 = pneg %p316
      %p323 = scmp.eq.s32.totalorder %s40, 3
      %p324 = por %p322, %p323
      %p325 = scmp.ne.s32.totalorder %s317, %s320
      %p326 = scmp.eq.s32.totalorder %s40, 0
      %p327 = por %p325, %p326
      %p328 = scmp.ne.s32.totalorder %s317, %s320
      %p329 = scmp.eq.s32.totalorder %s45, 3
      %p330 = por %p328, %p329
      %p331 = scmp.ne.s32.totalorder %s320, %s321
      %p332 = scmp.eq.s32.totalorder %s45, 0
      %p333 = por %p331, %p332
      %p334 = scmp.ne.s32.totalorder %s320, %s321
      %p335 = scmp.eq.s32.totalorder %s46, 3
      %p336 = por %p334, %p335
      %p338 = scmp.ne.s32.totalorder %s321, %s337
      %p339 = scmp.eq.s32.totalorder %s46, 0
      %p340 = por %p338, %p339
      %s341 = ssub.s32 %s48, %s55
      %p342 = scmp.eq.s32.totalorder %s341, 0
      %s344 = sadd.s32 %s343, 1
      %s345 = scalar_select %p342, %s343, %s344
      %p348 = pneg %p342
      %p349 = scmp.eq.s32.totalorder %s40, 3
      %p350 = por %p348, %p349
      %p351 = scmp.ne.s32.totalorder %s343, %s346
      %p352 = scmp.eq.s32.totalorder %s40, 0
      %p353 = por %p351, %p352
      %p354 = scmp.ne.s32.totalorder %s343, %s346
      %p355 = scmp.eq.s32.totalorder %s45, 3
      %p356 = por %p354, %p355
      %p357 = scmp.ne.s32.totalorder %s346, %s347
      %p358 = scmp.eq.s32.totalorder %s45, 0
      %p359 = por %p357, %p358
      %p360 = scmp.ne.s32.totalorder %s346, %s347
      %p361 = scmp.eq.s32.totalorder %s46, 3
      %p362 = por %p360, %p361
      %p364 = scmp.ne.s32.totalorder %s347, %s363
      %p365 = scmp.eq.s32.totalorder %s46, 0
      %p366 = por %p364, %p365
      %s367 = ssub.s32 %s48, %s55
      %p368 = scmp.eq.s32.totalorder %s367, 0
      %s370 = sadd.s32 %s369, 1
      %s371 = scalar_select %p368, %s369, %s370
      %p374 = pneg %p368
      %p375 = scmp.eq.s32.totalorder %s40, 3
      %p376 = por %p374, %p375
      %p377 = scmp.ne.s32.totalorder %s369, %s372
      %p378 = scmp.eq.s32.totalorder %s40, 0
      %p379 = por %p377, %p378
      %p380 = scmp.ne.s32.totalorder %s369, %s372
      %p381 = scmp.eq.s32.totalorder %s45, 3
      %p382 = por %p380, %p381
      %p383 = scmp.ne.s32.totalorder %s372, %s373
      %p384 = scmp.eq.s32.totalorder %s45, 0
      %p385 = por %p383, %p384
      %p386 = scmp.ne.s32.totalorder %s372, %s373
      %p387 = scmp.eq.s32.totalorder %s46, 3
      %p388 = por %p386, %p387
      %p390 = scmp.ne.s32.totalorder %s373, %s389
      %p391 = scmp.eq.s32.totalorder %s46, 0
      %p392 = por %p390, %p391
      %s394 = sadd.s32 %s393, 1
      %p397 = scmp.eq.s32.totalorder %s40, 3
      %p398 = scmp.ne.s32.totalorder %s393, %s395
      %p399 = scmp.eq.s32.totalorder %s40, 0
      %p400 = por %p398, %p399
      %p401 = scmp.ne.s32.totalorder %s393, %s395
      %p402 = scmp.eq.s32.totalorder %s45, 3
      %p403 = por %p401, %p402
      %p404 = scmp.ne.s32.totalorder %s395, %s396
      %p405 = scmp.eq.s32.totalorder %s45, 0
      %p406 = por %p404, %p405
      %p407 = scmp.ne.s32.totalorder %s395, %s396
      %p408 = scmp.eq.s32.totalorder %s46, 3
      %p409 = por %p407, %p408
      %p411 = scmp.ne.s32.totalorder %s396, %s410
      %p412 = scmp.eq.s32.totalorder %s46, 0
      %p413 = por %p411, %p412
      %s415 = sadd.s32 %s414, 1
      %p418 = scmp.eq.s32.totalorder %s40, 3
      %p419 = scmp.ne.s32.totalorder %s414, %s416
      %p420 = scmp.eq.s32.totalorder %s40, 0
      %p421 = por %p419, %p420
      %p422 = scmp.ne.s32.totalorder %s414, %s416
      %p423 = scmp.eq.s32.totalorder %s45, 3
      %p424 = por %p422, %p423
      %p425 = scmp.ne.s32.totalorder %s416, %s417
      %p426 = scmp.eq.s32.totalorder %s45, 0
      %p427 = por %p425, %p426
      %p428 = scmp.ne.s32.totalorder %s416, %s417
      %p429 = scmp.eq.s32.totalorder %s46, 3
      %p430 = por %p428, %p429
      %p432 = scmp.ne.s32.totalorder %s417, %s431
      %p433 = scmp.eq.s32.totalorder %s46, 0
      %p434 = por %p432, %p433
      %s436 = sadd.s32 %s435, 1
      %p439 = scmp.eq.s32.totalorder %s40, 3
      %p440 = scmp.ne.s32.totalorder %s435, %s437
      %p441 = scmp.eq.s32.totalorder %s40, 0
      %p442 = por %p440, %p441
      %p443 = scmp.ne.s32.totalorder %s435, %s437
      %p444 = scmp.eq.s32.totalorder %s45, 3
      %p445 = por %p443, %p444
      %p446 = scmp.ne.s32.totalorder %s437, %s438
      %p447 = scmp.eq.s32.totalorder %s45, 0
      %p448 = por %p446, %p447
      %p449 = scmp.ne.s32.totalorder %s437, %s438
      %p450 = scmp.eq.s32.totalorder %s46, 3
      %p451 = por %p449, %p450
      %p453 = scmp.ne.s32.totalorder %s438, %s452
      %p454 = scmp.eq.s32.totalorder %s46, 0
      %p455 = por %p453, %p454
      %s456 = ssub.s32 %s47, %s59
      %p457 = scmp.eq.s32.totalorder %s456, 0
      %s459 = sadd.s32 %s458, 1
      %s460 = scalar_select %p457, %s458, %s459
      %p463 = pneg %p457
      %p464 = scmp.eq.s32.totalorder %s40, 3
      %p465 = por %p463, %p464
      %p466 = scmp.ne.s32.totalorder %s458, %s461
      %p467 = scmp.eq.s32.totalorder %s40, 0
      %p468 = por %p466, %p467
      %p469 = scmp.ne.s32.totalorder %s458, %s461
      %p470 = scmp.eq.s32.totalorder %s45, 3
      %p471 = por %p469, %p470
      %p472 = scmp.ne.s32.totalorder %s461, %s462
      %p473 = scmp.eq.s32.totalorder %s45, 0
      %p474 = por %p472, %p473
      %p475 = scmp.ne.s32.totalorder %s461, %s462
      %p476 = scmp.eq.s32.totalorder %s46, 3
      %p477 = por %p475, %p476
      %p479 = scmp.ne.s32.totalorder %s462, %s478
      %p480 = scmp.eq.s32.totalorder %s46, 0
      %p481 = por %p479, %p480
      %p482 = scmp.le.s32.totalorder 1, %s40
      %p483 = scmp.lt.s32.totalorder %s40, 5
      %p484 = pnand %p482, %p483
      %p485 = pneg %p484
      // Predicated region
      $region9: #{clip_text_embed.1} parent=5 // pred_check
        _
      $region10: #{clip_text_embed.1} parent=5 // pred_check_branch
        %487 = sbr.rel (%p484) target = $region12
      $region11: #{clip_text_embed.1} parent=5 // pred_region
        %s488 = ssub.s32 %s40, 1
        // Predicated region
        $region13: #{clip_text_embed.1} parent=11 // pred_check
          %p489 = pneg %p73
        $region14: #{clip_text_embed.1} parent=11 // pred_check_branch
          %491 = sbr.rel (%p489) target = $region16
        $region15: #{clip_text_embed.1} parent=11 // pred_region
          _
        $region16: #{clip_text_embed.1} parent=11 // pred_fallthru
          _
        // Predicated region
        $region17: #{clip_text_embed.1} parent=11 // pred_check
          %p492 = pneg %p406
        $region18: #{clip_text_embed.1} parent=11 // pred_check_branch
          %494 = sbr.rel (%p492) target = $region20
        $region19: #{clip_text_embed.1} parent=11 // pred_region
          %s496 = ssub.s32 16, 16
          %497 = vsyncadd [#allocation14], %s496
          %s499 = sshll.u32 [#allocation13], 4
          %s500 = int_to_ptr.vmem [resolvable:$true] %s499
          %502 = dma.hbm_to_vmem [thread:$0]  %s15, 16, %s500, [#allocation14]
        $region20: #{clip_text_embed.1} parent=11 // pred_fallthru
          _
        // Predicated region
        $region21: #{clip_text_embed.1} parent=11 // pred_check
          %p503 = pneg %p427
        $region22: #{clip_text_embed.1} parent=11 // pred_check_branch
          %505 = sbr.rel (%p503) target = $region24
        $region23: #{clip_text_embed.1} parent=11 // pred_region
          %s507 = ssub.s32 16, 16
          %508 = vsyncadd [#allocation14], %s507
          %s510 = sshll.u32 [#allocation15], 4
          %s511 = int_to_ptr.vmem [resolvable:$true] %s510
          %513 = dma.hbm_to_vmem [thread:$0]  %s16, 16, %s511, [#allocation14]
        $region24: #{clip_text_embed.1} parent=11 // pred_fallthru
          _
        // Predicated region
        $region25: #{clip_text_embed.1} parent=11 // pred_check
          %p514 = pneg %p448
        $region26: #{clip_text_embed.1} parent=11 // pred_check_branch
          %516 = sbr.rel (%p514) target = $region28
        $region27: #{clip_text_embed.1} parent=11 // pred_region
          _
        $region28: #{clip_text_embed.1} parent=11 // pred_fallthru
          _
      $region12: #{clip_text_embed.1} parent=5 // pred_fallthru
        _
      %p517 = scmp.lt.s32.totalorder %s40, 4
      // Predicated region
      $region29: #{clip_text_embed.1} parent=5 // pred_check
        %p518 = pneg %p517
      $region30: #{clip_text_embed.1} parent=5 // pred_check_branch
        %520 = sbr.rel (%p518) target = $region32
      $region31: #{clip_text_embed.1} parent=5 // pred_region
        // Predicated region
        $region33: #{clip_text_embed.1} parent=31 // pred_check
          %p521 = pneg %p93
        $region34: #{clip_text_embed.1} parent=31 // pred_check_branch
          %523 = sbr.rel (%p521) target = $region36
        $region35: #{clip_text_embed.1} parent=31 // pred_region
          %p524 = scmp.lt.s32.totalorder %s48, 1
          %s525 = scalar_select %p524, %s48, 1
          %s526 = scalar_lea.vmem %s3, %s525
        $region36: #{clip_text_embed.1} parent=31 // pred_fallthru
          _
        // Predicated region
        $region37: #{clip_text_embed.1} parent=31 // pred_check
          %p527 = pneg %p119
        $region38: #{clip_text_embed.1} parent=31 // pred_check_branch
          %529 = sbr.rel (%p527) target = $region40
        $region39: #{clip_text_embed.1} parent=31 // pred_region
          %p530 = scmp.lt.s32.totalorder %s48, 1
          %s531 = scalar_select %p530, %s48, 1
          %s532 = scalar_lea.vmem %s4, %s531
        $region40: #{clip_text_embed.1} parent=31 // pred_fallthru
          _
        // Predicated region
        $region41: #{clip_text_embed.1} parent=31 // pred_check
          %p533 = pneg %p145
        $region42: #{clip_text_embed.1} parent=31 // pred_check_branch
          %535 = sbr.rel (%p533) target = $region44
        $region43: #{clip_text_embed.1} parent=31 // pred_region
          %s536 = sand.u32 %s135, 1
          %s537 = scalar_lea.sflag [#allocation8], %s536
          %s538 = sand.u32 %s135, 1
          %s539 = smul.addr %s538, 192
          %s540 = scalar_lea.vmem [#allocation7], %s539
          %s542 = ssub.s32 3072, 3072
          %543 = vsyncadd %s537, %s542
          %s544 = smul.addr %s48, 48
          %s545 = smul.addr %s544, 64
          %s546 = scalar_lea.hbm %s5, %s545
          %s547 = sshll.u32 %s540, 4
          %s548 = int_to_ptr.vmem [resolvable:$true] %s547
          %553 = dma.hbm_to_vmem [thread:$0]  %s546, 3072, %s548, %s537, 192, 192, 12
        $region44: #{clip_text_embed.1} parent=31 // pred_fallthru
          _
        // Predicated region
        $region45: #{clip_text_embed.1} parent=31 // pred_check
          %p554 = pneg %p171
        $region46: #{clip_text_embed.1} parent=31 // pred_check_branch
          %556 = sbr.rel (%p554) target = $region48
        $region47: #{clip_text_embed.1} parent=31 // pred_region
          %p557 = scmp.lt.s32.totalorder %s48, 1
          %s558 = scalar_select %p557, %s48, 1
          %s559 = smul.addr %s558, 3
          %s560 = scalar_lea.vmem %s6, %s559
        $region48: #{clip_text_embed.1} parent=31 // pred_fallthru
          _
        // Predicated region
        $region49: #{clip_text_embed.1} parent=31 // pred_check
          %p561 = pneg %p197
        $region50: #{clip_text_embed.1} parent=31 // pred_check_branch
          %563 = sbr.rel (%p561) target = $region52
        $region51: #{clip_text_embed.1} parent=31 // pred_region
          %p564 = scmp.lt.s32.totalorder %s48, 1
          %s565 = scalar_select %p564, %s48, 1
          %s566 = smul.addr %s565, 16
          %s567 = smul.addr %s566, 4
          %s568 = scalar_lea.vmem %s7, %s567
        $region52: #{clip_text_embed.1} parent=31 // pred_fallthru
          _
        // Predicated region
        $region53: #{clip_text_embed.1} parent=31 // pred_check
          %p569 = pneg %p223
        $region54: #{clip_text_embed.1} parent=31 // pred_check_branch
          %571 = sbr.rel (%p569) target = $region56
        $region55: #{clip_text_embed.1} parent=31 // pred_region
          %p572 = scmp.lt.s32.totalorder %s48, 1
          %s573 = scalar_select %p572, %s48, 1
          %s574 = scalar_lea.vmem %s8, %s573
        $region56: #{clip_text_embed.1} parent=31 // pred_fallthru
          _
        // Predicated region
        $region57: #{clip_text_embed.1} parent=31 // pred_check
          %p575 = pneg %p249
        $region58: #{clip_text_embed.1} parent=31 // pred_check_branch
          %577 = sbr.rel (%p575) target = $region60
        $region59: #{clip_text_embed.1} parent=31 // pred_region
          %p578 = scmp.lt.s32.totalorder %s48, 1
          %s579 = scalar_select %p578, %s48, 1
          %s580 = scalar_lea.vmem %s9, %s579
        $region60: #{clip_text_embed.1} parent=31 // pred_fallthru
          _
        // Predicated region
        $region61: #{clip_text_embed.1} parent=31 // pred_check
          %p581 = pneg %p275
        $region62: #{clip_text_embed.1} parent=31 // pred_check_branch
          %583 = sbr.rel (%p581) target = $region64
        $region63: #{clip_text_embed.1} parent=31 // pred_region
          %p584 = scmp.lt.s32.totalorder %s48, 1
          %s585 = scalar_select %p584, %s48, 1
          %s586 = scalar_lea.vmem %s10, %s585
        $region64: #{clip_text_embed.1} parent=31 // pred_fallthru
          _
        // Predicated region
        $region65: #{clip_text_embed.1} parent=31 // pred_check
          %p587 = pneg %p301
        $region66: #{clip_text_embed.1} parent=31 // pred_check_branch
          %589 = sbr.rel (%p587) target = $region68
        $region67: #{clip_text_embed.1} parent=31 // pred_region
          %s590 = sand.u32 %s40, 1
          %s591 = scalar_lea.sflag [#allocation11], %s590
          %s592 = sand.u32 %s291, 1
          %s593 = smul.addr %s592, 256
          %s594 = scalar_lea.vmem [#allocation10], %s593
          %s596 = ssub.s32 4096, 4096
          %597 = vsyncadd %s591, %s596
          %s598 = smul.addr %s48, 64
          %s599 = smul.addr %s598, 64
          %s600 = scalar_lea.hbm %s11, %s599
          %s601 = sshll.u32 %s594, 4
          %s602 = int_to_ptr.vmem [resolvable:$true] %s601
          %607 = dma.hbm_to_vmem [thread:$0]  %s600, 4096, %s602, %s591, 256, 256, 16
        $region68: #{clip_text_embed.1} parent=31 // pred_fallthru
          _
        // Predicated region
        $region69: #{clip_text_embed.1} parent=31 // pred_check
          %p608 = pneg %p327
        $region70: #{clip_text_embed.1} parent=31 // pred_check_branch
          %610 = sbr.rel (%p608) target = $region72
        $region71: #{clip_text_embed.1} parent=31 // pred_region
          %p611 = scmp.lt.s32.totalorder %s48, 1
          %s612 = scalar_select %p611, %s48, 1
          %s613 = smul.addr %s612, 4
          %s614 = scalar_lea.vmem %s12, %s613
        $region72: #{clip_text_embed.1} parent=31 // pred_fallthru
          _
        // Predicated region
        $region73: #{clip_text_embed.1} parent=31 // pred_check
          %p615 = pneg %p353
        $region74: #{clip_text_embed.1} parent=31 // pred_check_branch
          %617 = sbr.rel (%p615) target = $region76
        $region75: #{clip_text_embed.1} parent=31 // pred_region
          %s618 = sand.u32 %s40, 1
          %s619 = scalar_lea.sflag [#allocation11], %s618
          %s620 = sand.u32 %s343, 1
          %s621 = smul.addr %s620, 256
          %s622 = scalar_lea.vmem [#allocation12], %s621
          %s624 = ssub.s32 4096, 4096
          %625 = vsyncadd %s619, %s624
          %s626 = smul.addr %s48, 64
          %s627 = smul.addr %s626, 64
          %s628 = scalar_lea.hbm %s13, %s627
          %s629 = sshll.u32 %s622, 4
          %s630 = int_to_ptr.vmem [resolvable:$true] %s629
          %635 = dma.hbm_to_vmem [thread:$0]  %s628, 4096, %s630, %s619, 64, 64, 4
        $region76: #{clip_text_embed.1} parent=31 // pred_fallthru
          _
        // Predicated region
        $region77: #{clip_text_embed.1} parent=31 // pred_check
          %p636 = pneg %p379
        $region78: #{clip_text_embed.1} parent=31 // pred_check_branch
          %638 = sbr.rel (%p636) target = $region80
        $region79: #{clip_text_embed.1} parent=31 // pred_region
          %p639 = scmp.lt.s32.totalorder %s48, 1
          %s640 = scalar_select %p639, %s48, 1
          %s641 = scalar_lea.vmem %s14, %s640
        $region80: #{clip_text_embed.1} parent=31 // pred_fallthru
          _
      $region32: #{clip_text_embed.1} parent=5 // pred_fallthru
        _
      %p642 = scmp.le.s32.totalorder 1, %s40
      %p643 = scmp.lt.s32.totalorder %s40, 5
      %p644 = pnand %p642, %p643
      %p645 = pneg %p644
      // Predicated region
      $region81: #{clip_text_embed.1} parent=5 // pred_check
        _
      $region82: #{clip_text_embed.1} parent=5 // pred_check_branch
        %647 = sbr.rel (%p644) target = $region84
      $region83: #{clip_text_embed.1} parent=5 // pred_region
        %s648 = ssub.s32 %s40, 1
        %s649 = sand.u32 %s138, 1
        %s650 = scalar_lea.sflag [#allocation8], %s649
        %s651 = sand.u32 %s138, 1
        %s652 = smul.addr %s651, 192
        %s653 = scalar_lea.vmem [#allocation7], %s652
        // Predicated region
        $region85: #{clip_text_embed.1} parent=83 // pred_check
          %p654 = pneg %p151
        $region86: #{clip_text_embed.1} parent=83 // pred_check_branch
          %656 = sbr.rel (%p654) target = $region88
        $region87: #{clip_text_embed.1} parent=83 // pred_region
          %657 = dma.done %s650, 3072
        $region88: #{clip_text_embed.1} parent=83 // pred_fallthru
          _
        %s658 = sand.u32 %s45, 1
        %s659 = scalar_lea.sflag [#allocation11], %s658
        %s660 = sand.u32 %s294, 1
        %s661 = smul.addr %s660, 256
        %s662 = scalar_lea.vmem [#allocation10], %s661
        // Predicated region
        $region89: #{clip_text_embed.1} parent=83 // pred_check
          %p663 = pneg %p307
        $region90: #{clip_text_embed.1} parent=83 // pred_check_branch
          %665 = sbr.rel (%p663) target = $region92
        $region91: #{clip_text_embed.1} parent=83 // pred_region
          %666 = dma.done %s659, 4096
        $region92: #{clip_text_embed.1} parent=83 // pred_fallthru
          _
        %s667 = sand.u32 %s45, 1
        %s668 = scalar_lea.sflag [#allocation11], %s667
        %s669 = sand.u32 %s346, 1
        %s670 = smul.addr %s669, 256
        %s671 = scalar_lea.vmem [#allocation12], %s670
        // Predicated region
        $region93: #{clip_text_embed.1} parent=83 // pred_check
          %p672 = pneg %p359
        $region94: #{clip_text_embed.1} parent=83 // pred_check_branch
          %674 = sbr.rel (%p672) target = $region96
        $region95: #{clip_text_embed.1} parent=83 // pred_region
          %675 = dma.done %s668, 4096
        $region96: #{clip_text_embed.1} parent=83 // pred_fallthru
          _
        // Predicated region
        $region97: #{clip_text_embed.1} parent=83 // pred_check
          %p676 = pneg %p406
        $region98: #{clip_text_embed.1} parent=83 // pred_check_branch
          %678 = sbr.rel (%p676) target = $region100
        $region99: #{clip_text_embed.1} parent=83 // pred_region
          %679 = dma.done [#allocation14], 16
        $region100: #{clip_text_embed.1} parent=83 // pred_fallthru
          _
        // Predicated region
        $region101: #{clip_text_embed.1} parent=83 // pred_check
          %p680 = pneg %p427
        $region102: #{clip_text_embed.1} parent=83 // pred_check_branch
          %682 = sbr.rel (%p680) target = $region104
        $region103: #{clip_text_embed.1} parent=83 // pred_region
          %683 = dma.done [#allocation14], 16
        $region104: #{clip_text_embed.1} parent=83 // pred_fallthru
          _
        %p684 = pneg %p73
        %p685 = pneg %p70
        %p686 = scmp.lt.s32.totalorder %s50, 1
        %s687 = scalar_select %p686, %s50, 1
        %s688 = scalar_lea.vmem %s3, %s687
        %p689 = pneg %p99
        %p690 = pneg %p96
        %p691 = scmp.lt.s32.totalorder %s50, 1
        %s692 = scalar_select %p691, %s50, 1
        %s693 = scalar_lea.vmem %s4, %s692
        %p694 = pneg %p125
        %p695 = pneg %p122
        %s696 = sand.u32 %s138, 1
        %s697 = scalar_lea.sflag [#allocation8], %s696
        %s698 = sand.u32 %s138, 1
        %s699 = smul.addr %s698, 192
        %s700 = scalar_lea.vmem [#allocation7], %s699
        %p701 = pneg %p151
        %p702 = pneg %p148
        %p703 = scmp.lt.s32.totalorder %s50, 1
        %s704 = scalar_select %p703, %s50, 1
        %s705 = smul.addr %s704, 3
        %s706 = scalar_lea.vmem %s6, %s705
        %p707 = pneg %p177
        %p708 = pneg %p174
        %p709 = scmp.lt.s32.totalorder %s50, 1
        %s710 = scalar_select %p709, %s50, 1
        %s711 = smul.addr %s710, 16
        %s712 = smul.addr %s711, 4
        %s713 = scalar_lea.vmem %s7, %s712
        %p714 = pneg %p203
        %p715 = pneg %p200
        %p716 = scmp.lt.s32.totalorder %s50, 1
        %s717 = scalar_select %p716, %s50, 1
        %s718 = scalar_lea.vmem %s8, %s717
        %p719 = pneg %p229
        %p720 = pneg %p226
        %p721 = scmp.lt.s32.totalorder %s50, 1
        %s722 = scalar_select %p721, %s50, 1
        %s723 = scalar_lea.vmem %s9, %s722
        %p724 = pneg %p255
        %p725 = pneg %p252
        %p726 = scmp.lt.s32.totalorder %s50, 1
        %s727 = scalar_select %p726, %s50, 1
        %s728 = scalar_lea.vmem %s10, %s727
        %p729 = pneg %p281
        %p730 = pneg %p278
        %s731 = sand.u32 %s45, 1
        %s732 = scalar_lea.sflag [#allocation11], %s731
        %s733 = sand.u32 %s294, 1
        %s734 = smul.addr %s733, 256
        %s735 = scalar_lea.vmem [#allocation10], %s734
        %p736 = pneg %p307
        %p737 = pneg %p304
        %p738 = scmp.lt.s32.totalorder %s50, 1
        %s739 = scalar_select %p738, %s50, 1
        %s740 = smul.addr %s739, 4
        %s741 = scalar_lea.vmem %s12, %s740
        %p742 = pneg %p333
        %p743 = pneg %p330
        %s744 = sand.u32 %s45, 1
        %s745 = scalar_lea.sflag [#allocation11], %s744
        %s746 = sand.u32 %s346, 1
        %s747 = smul.addr %s746, 256
        %s748 = scalar_lea.vmem [#allocation12], %s747
        %p749 = pneg %p359
        %p750 = pneg %p356
        %p751 = scmp.lt.s32.totalorder %s50, 1
        %s752 = scalar_select %p751, %s50, 1
        %s753 = scalar_lea.vmem %s14, %s752
        %p754 = pneg %p385
        %p755 = pneg %p382
        %p756 = pneg %p406
        %p757 = pneg %p403
        %p758 = pneg %p427
        %p759 = pneg %p424
        %p760 = pneg %p448
        %p761 = pneg %p445
        %p762 = pneg %p474
        %p763 = pneg %p471
        %s764 = sand.u32 %s461, 1
        %s765 = scalar_lea.sflag [#allocation9], %s764
        %s766 = sand.u32 %s461, 1
        %s767 = scalar_lea.vmem [#allocation16], %s766
        %p768 = scmp.lt.s32.totalorder %s50, 1
        %s769 = scalar_select %p768, %s50, 1
        %s770 = scalar_lea.vmem %s3, %s769
        %p771 = scmp.lt.s32.totalorder %s50, 1
        %s772 = scalar_select %p771, %s50, 1
        %s773 = scalar_lea.vmem %s4, %s772
        %p774 = scmp.lt.s32.totalorder %s50, 1
        %s775 = scalar_select %p774, %s50, 1
        %s776 = smul.addr %s775, 3
        %s777 = scalar_lea.vmem %s6, %s776
        %p778 = scmp.lt.s32.totalorder %s50, 1
        %s779 = scalar_select %p778, %s50, 1
        %s780 = smul.addr %s779, 16
        %s781 = smul.addr %s780, 4
        %s782 = scalar_lea.vmem %s7, %s781
        %p783 = scmp.lt.s32.totalorder %s50, 1
        %s784 = scalar_select %p783, %s50, 1
        %s785 = scalar_lea.vmem %s8, %s784
        %p786 = scmp.lt.s32.totalorder %s50, 1
        %s787 = scalar_select %p786, %s50, 1
        %s788 = scalar_lea.vmem %s9, %s787
        %p789 = scmp.lt.s32.totalorder %s50, 1
        %s790 = scalar_select %p789, %s50, 1
        %s791 = scalar_lea.vmem %s10, %s790
        %p792 = scmp.lt.s32.totalorder %s50, 1
        %s793 = scalar_select %p792, %s50, 1
        %s794 = smul.addr %s793, 4
        %s795 = scalar_lea.vmem %s12, %s794
        %p796 = scmp.lt.s32.totalorder %s50, 1
        %s797 = scalar_select %p796, %s50, 1
        %s798 = scalar_lea.vmem %s14, %s797
        %p800 = scmp.eq.s32.totalorder %s50, 0
        // Predicated region
        $region105: #{clip_text_embed.1} parent=83 // pred_check
          %p801 = pneg %p800
        $region106: #{clip_text_embed.1} parent=83 // pred_check_branch
          %803 = sbr.rel (%p801) target = $region108
        $region107: #{clip_text_embed.1} parent=83 // pred_region
          %s804 = smul.u32 %s49, 8
          %s805 = scalar_lea.vmem %s1, %s804
          %p807 = scmp.lt.u32.totalorder 8, 8
          %p808 = pneg %p807
          // Predicated region
          $region109: #{clip_text_embed.1} parent=107 // pred_check
            _
          $region110: #{clip_text_embed.1} parent=107 // pred_check_branch
            %810 = sbr.rel (%p807) target = $region112
          $region111: #{clip_text_embed.1} parent=107 // pred_region
            %s826 = sand.u32 8, 7
            %p827 = scmp.eq.s32.totalorder %s826, 0
            // Predicated region
            $region124: #{clip_text_embed.1} parent=111 // pred_check
              %p828 = pneg %p827
            $region125: #{clip_text_embed.1} parent=111 // pred_check_branch
              %830 = sbr.rel (%p828) target = $region127
            $region126: #{clip_text_embed.1} parent=111 // pred_region
              loop: start=0, step=1, limit=1
              $region128: #{clip_text_embed.1} parent=126 // loop_pre_header
                _
              $region129: #{clip_text_embed.1} parent=126 // loop_header
                %s832 = sphi 0, %s836
                %p833 = scmp.ge.s32.totalorder %s832, 1
                %s837 = sphi %s805, %s805
                %s838 = sphi [#allocation2], [#allocation2]
              $region130: #{clip_text_embed.1} parent=126 // loop_header_branch
                %835 = sbr.rel (%p833) target = $region134
              $region131: #{clip_text_embed.1} parent=126 // loop_body
                %v839 = vld [vmem:[%s837] sm:$0xff]
                %840 = vst [vmem:[%s838] sm:$0xff] %v839
              $region132: #{clip_text_embed.1} parent=126 // loop_footer
                %s836 = sadd.s32 1, %s832
              $region133: #{clip_text_embed.1} parent=126 // loop_footer_branch
                %831 = sbr.rel target = $region129
              $region134: #{clip_text_embed.1} parent=126 // loop_exit
                _
            $region127: #{clip_text_embed.1} parent=111 // pred_fallthru
              _
            %p841 = pneg %p827
            // Predicated region
            $region135: #{clip_text_embed.1} parent=111 // pred_check
              _
            $region136: #{clip_text_embed.1} parent=111 // pred_check_branch
              %843 = sbr.rel (%p827) target = $region138
            $region137: #{clip_text_embed.1} parent=111 // pred_region
              %s844 = sand.u32 8, 7
            $region138: #{clip_text_embed.1} parent=111 // pred_fallthru
              _
          $region112: #{clip_text_embed.1} parent=107 // pred_fallthru
            _
          // Predicated region
          $region113: #{clip_text_embed.1} parent=107 // pred_check
            %p811 = pneg %p807
          $region114: #{clip_text_embed.1} parent=107 // pred_check_branch
            %813 = sbr.rel (%p811) target = $region116
          $region115: #{clip_text_embed.1} parent=107 // pred_region
            %s814 = sshll.u32 1, 8
            %s815 = ssub.s32 %s814, 1
            loop: start=0, step=1, limit=1
            $region117: #{clip_text_embed.1} parent=115 // loop_pre_header
              _
            $region118: #{clip_text_embed.1} parent=115 // loop_header
              %s817 = sphi 0, %s821
              %p818 = scmp.ge.s32.totalorder %s817, 1
              %s822 = sphi %s805, %s805
              %s823 = sphi [#allocation2], [#allocation2]
            $region119: #{clip_text_embed.1} parent=115 // loop_header_branch
              %820 = sbr.rel (%p818) target = $region123
            $region120: #{clip_text_embed.1} parent=115 // loop_body
              %v824 = vld [vmem:[%s822] sm:%s815]
              %825 = vst [vmem:[%s823] sm:%s815] %v824
            $region121: #{clip_text_embed.1} parent=115 // loop_footer
              %s821 = sadd.s32 1, %s817
            $region122: #{clip_text_embed.1} parent=115 // loop_footer_branch
              %816 = sbr.rel target = $region118
            $region123: #{clip_text_embed.1} parent=115 // loop_exit
              _
          $region116: #{clip_text_embed.1} parent=107 // pred_fallthru
            _
          // Predicated region
          $region139: #{clip_text_embed.1} parent=107 // pred_check
            _
          $region140: #{clip_text_embed.1} parent=107 // pred_check_branch
            %847 = sbr.rel (0) target = $region142
          $region141: #{clip_text_embed.1} parent=107 // pred_region
            %848 = vsyncadd [#allocation4], 128
          $region142: #{clip_text_embed.1} parent=107 // pred_fallthru
            _
          %s849 = smul.u32 8, 1
          %s850 = sshll.u32 %s849, 4
          %851 = dma.done [#allocation4], %s850
        $region108: #{clip_text_embed.1} parent=83 // pred_fallthru
          _
        %v852 = vld [vmem:[#allocation2] sm:$0xff]
        %v853 = vld [vmem:[%s770] sm:$0x1]
        %v854 = vld [vmem:[%s773] sm:$0x1]
        %855 = vadd.xlane.f32.xlu0 %v852
        %v856 = vpop.xlane.xlu0 %855
        %v857 = vrcp.pop 128.0
        %v858 = vmul.f32 %v856, %v857
        %v859 = vsub.f32 %v852, %v858
        %v860 = vmul.f32 %v859, %v859
        %861 = vadd.xlane.f32.xlu0 %v860
        %v862 = vpop.xlane.xlu0 %861
        %v863 = vmul.f32 %v862, %v857
        %v864 = vadd.f32 %v863, 1e-05
        %v865 = vrsqrt.pop %v864
        %v866 = vmul.f32 %v859, %v865
        %v868 = vlaneseq
        %v869 = vshrl.u32 %v868, 7
        %v870 = vsub.s32 0, %v869
        %v871 = vrot.slane %v853, %v870
        %v873 = vmul.f32 %v866, %v871
        %v875 = vlaneseq
        %v876 = vshrl.u32 %v875, 7
        %v877 = vsub.s32 0, %v876
        %v878 = vrot.slane %v854, %v877
        %v880 = vadd.f32 %v873, %v878
        %v881 = vpack.c.bf16 %v880, %v880
        %v882 = vld [vmem:[%s653] sm:$0xff]
        %v883 = vld [vmem:[%s653 + $0x8] sm:$0xf]
        %v884 = vld [vmem:[%s653 + $0xc] sm:$0xff]
        %v885 = vld [vmem:[%s653 + $0x14] sm:$0xf]
        %v886 = vld [vmem:[%s653 + $0x18] sm:$0xff]
        %v887 = vld [vmem:[%s653 + $0x20] sm:$0xf]
        %v888 = vld [vmem:[%s653 + $0x24] sm:$0xff]
        %v889 = vld [vmem:[%s653 + $0x2c] sm:$0xf]
        %v890 = vld [vmem:[%s653 + $0x30] sm:$0xff]
        %v891 = vld [vmem:[%s653 + $0x38] sm:$0xf]
        %v892 = vld [vmem:[%s653 + $0x3c] sm:$0xff]
        %v893 = vld [vmem:[%s653 + $0x44] sm:$0xf]
        %v894 = vld [vmem:[%s653 + $0x48] sm:$0xff]
        %v895 = vld [vmem:[%s653 + $0x50] sm:$0xf]
        %v896 = vld [vmem:[%s653 + $0x54] sm:$0xff]
        %v897 = vld [vmem:[%s653 + $0x5c] sm:$0xf]
        %v898 = vld [vmem:[%s653 + $0x60] sm:$0xff]
        %v899 = vld [vmem:[%s653 + $0x68] sm:$0xf]
        %v900 = vld [vmem:[%s653 + $0x6c] sm:$0xff]
        %v901 = vld [vmem:[%s653 + $0x74] sm:$0xf]
        %v902 = vld [vmem:[%s653 + $0x78] sm:$0xff]
        %v903 = vld [vmem:[%s653 + $0x80] sm:$0xf]
        %v904 = vld [vmem:[%s653 + $0x84] sm:$0xff]
        %v905 = vld [vmem:[%s653 + $0x8c] sm:$0xf]
        %v906 = vld [vmem:[%s653 + $0x90] sm:$0xff]
        %v907 = vld [vmem:[%s653 + $0x98] sm:$0xf]
        %v908 = vld [vmem:[%s653 + $0x9c] sm:$0xff]
        %v909 = vld [vmem:[%s653 + $0xa4] sm:$0xf]
        %v910 = vld [vmem:[%s653 + $0xa8] sm:$0xff]
        %v911 = vld [vmem:[%s653 + $0xb0] sm:$0xf]
        %v912 = vld [vmem:[%s653 + $0xb4] sm:$0xff]
        %v913 = vld [vmem:[%s653 + $0xbc] sm:$0xf]
        %v914 = vld [vmem:[%s777] sm:$0x7]
        %v916 = vlaneseq
        %v917 = vshrl.u32 %v916, 7
        %v918 = vsub.s32 0, %v917
        %v919 = vrot.slane %v914, %v918
        %v920 = vlaneseq
        %v921 = vshrl.u32 %v920, 7
        %v922 = vsub.s32 1, %v921
        %v923 = vrot.slane %v914, %v922
        %v924 = vlaneseq
        %v925 = vshrl.u32 %v924, 7
        %v926 = vsub.s32 2, %v925
        %v927 = vrot.slane %v914, %v926
        %v963 = vunpack.c.l.b16 %v882
        %v964 = vunpack.c.h.b16 %v882
        %v965 = vunpack.c.l.b16 %v883
        %v966 = vunpack.c.l.b16 %v884
        %v967 = vunpack.c.h.b16 %v884
        %v968 = vunpack.c.l.b16 %v885
        %v969 = vunpack.c.l.b16 %v886
        %v970 = vunpack.c.h.b16 %v886
        %v971 = vunpack.c.l.b16 %v887
        %v972 = vunpack.c.l.b16 %v888
        %v973 = vunpack.c.h.b16 %v888
        %v974 = vunpack.c.l.b16 %v889
        %v975 = vunpack.c.l.b16 %v890
        %v976 = vunpack.c.h.b16 %v890
        %v977 = vunpack.c.l.b16 %v891
        %v978 = vunpack.c.l.b16 %v892
        %v979 = vunpack.c.h.b16 %v892
        %v980 = vunpack.c.l.b16 %v893
        %v981 = vunpack.c.l.b16 %v894
        %v982 = vunpack.c.h.b16 %v894
        %v983 = vunpack.c.l.b16 %v895
        %v984 = vunpack.c.l.b16 %v896
        %v985 = vunpack.c.h.b16 %v896
        %v986 = vunpack.c.l.b16 %v897
        %v987 = vunpack.c.l.b16 %v898
        %v988 = vunpack.c.h.b16 %v898
        %v989 = vunpack.c.l.b16 %v899
        %v990 = vunpack.c.l.b16 %v900
        %v991 = vunpack.c.h.b16 %v900
        %v992 = vunpack.c.l.b16 %v901
        %v993 = vunpack.c.l.b16 %v902
        %v994 = vunpack.c.h.b16 %v902
        %v995 = vunpack.c.l.b16 %v903
        %v996 = vunpack.c.l.b16 %v904
        %v997 = vunpack.c.h.b16 %v904
        %v998 = vunpack.c.l.b16 %v905
        %v999 = vunpack.c.l.b16 %v906
        %v1000 = vunpack.c.h.b16 %v906
        %v1001 = vunpack.c.l.b16 %v907
        %v1002 = vunpack.c.l.b16 %v908
        %v1003 = vunpack.c.h.b16 %v908
        %v1004 = vunpack.c.l.b16 %v909
        %v1005 = vunpack.c.l.b16 %v910
        %v1006 = vunpack.c.h.b16 %v910
        %v1007 = vunpack.c.l.b16 %v911
        %v1008 = vunpack.c.l.b16 %v912
        %v1009 = vunpack.c.h.b16 %v912
        %v1010 = vunpack.c.l.b16 %v913
        %v1011 = vpack.c.b16 %v966, %v963
        %v1012 = vpack.c.b16 %v967, %v964
        %v1013 = vpack.c.b16 %v968, %v965
        %v1014 = vpack.c.b16 %v972, %v969
        %v1015 = vpack.c.b16 %v973, %v970
        %v1016 = vpack.c.b16 %v974, %v971
        %v1017 = vpack.c.b16 %v978, %v975
        %v1018 = vpack.c.b16 %v979, %v976
        %v1019 = vpack.c.b16 %v980, %v977
        %v1020 = vpack.c.b16 %v984, %v981
        %v1021 = vpack.c.b16 %v985, %v982
        %v1022 = vpack.c.b16 %v986, %v983
        %v1023 = vpack.c.b16 %v990, %v987
        %v1024 = vpack.c.b16 %v991, %v988
        %v1025 = vpack.c.b16 %v992, %v989
        %v1026 = vpack.c.b16 %v996, %v993
        %v1027 = vpack.c.b16 %v997, %v994
        %v1028 = vpack.c.b16 %v998, %v995
        %v1029 = vpack.c.b16 %v1002, %v999
        %v1030 = vpack.c.b16 %v1003, %v1000
        %v1031 = vpack.c.b16 %v1004, %v1001
        %v1032 = vpack.c.b16 %v1008, %v1005
        %v1033 = vpack.c.b16 %v1009, %v1006
        %v1034 = vpack.c.b16 %v1010, %v1007
        %1059 = vmatprep.subr.bf16.mxu0 %v1033
        %1060 = vmatpush1.bf16.msra.mxu0 %v1032
        %1061 = vmatprep.subr.bf16.mxu0 %v1030
        %1062 = vmatpush1.bf16.msra.mxu0 %v1029
        %1063 = vmatprep.subr.bf16.mxu0 %v1027
        %1064 = vmatpush1.bf16.msra.mxu0 %v1026
        %1065 = vmatprep.subr.bf16.mxu0 %v1024
        %1066 = vmatpush1.bf16.msra.mxu0 %v1023
        %1067 = vmatprep.subr.bf16.mxu0 %v1021
        %1068 = vmatpush1.bf16.msra.mxu0 %v1020
        %1069 = vmatprep.subr.bf16.mxu0 %v1018
        %1070 = vmatpush1.bf16.msra.mxu0 %v1017
        %1071 = vmatprep.subr.bf16.mxu0 %v1015
        %1072 = vmatpush1.bf16.msra.mxu0 %v1014
        %1073 = vmatprep.subr.bf16.mxu0 %v1012
        %1074 = vmatpush1.bf16.msra.mxu0 %v1011
        %1075 = vmatprep.subr.bf16.mxu0 0
        %1076 = vmatpush2.bf16.msra.mxu0 0
        %1077 = vmatprep.subr.bf16.mxu0 0
        %1078 = vmatpush2.bf16.msra.mxu0 0
        %1079 = vmatprep.subr.bf16.mxu0 0
        %1080 = vmatpush2.bf16.msra.mxu0 0
        %1081 = vmatprep.subr.bf16.mxu0 0
        %1082 = vmatpush2.bf16.msra.mxu0 0
        %1083 = vmatprep.subr.bf16.mxu0 0
        %1084 = vmatpush2.bf16.msra.mxu0 0
        %1085 = vmatprep.subr.bf16.mxu0 0
        %1086 = vmatpush2.bf16.msra.mxu0 0
        %1087 = vmatprep.subr.bf16.mxu0 0
        %1088 = vmatpush2.bf16.msra.mxu0 0
        %1089 = vmatprep.subr.bf16.mxu0 0
        %1090 = vmatpush2.bf16.msra.mxu0 0
        %1091 = vmatprep.mubr.bf16.mxu0 0
        %1092 = vmatmul.mubr.bf16.gmra.mxu0 %v881
        %v1093 = vpop.f32.mrf.mxu0
        %v1094 = vadd.f32 %v919, %v1093
        %v1095 = vpop.f32.mrf.mxu0
        %v1096 = vadd.f32 %v923, %v1095
        %v1097 = vpop.f32.mrf.mxu0
        %v1098 = vpop.f32.mrf.mxu0
        %1099 = vdwg.mxu0
        %1100 = vmatprep.subr.bf16.mxu0 0
        %1101 = vmatpush1.bf16.msra.mxu0 %v1034
        %1102 = vmatprep.subr.bf16.mxu0 0
        %1103 = vmatpush1.bf16.msra.mxu0 %v1031
        %1104 = vmatprep.subr.bf16.mxu0 0
        %1105 = vmatpush1.bf16.msra.mxu0 %v1028
        %1106 = vmatprep.subr.bf16.mxu0 0
        %1107 = vmatpush1.bf16.msra.mxu0 %v1025
        %1108 = vmatprep.subr.bf16.mxu0 0
        %1109 = vmatpush1.bf16.msra.mxu0 %v1022
        %1110 = vmatprep.subr.bf16.mxu0 0
        %1111 = vmatpush1.bf16.msra.mxu0 %v1019
        %1112 = vmatprep.subr.bf16.mxu0 0
        %1113 = vmatpush1.bf16.msra.mxu0 %v1016
        %1114 = vmatprep.subr.bf16.mxu0 0
        %1115 = vmatpush1.bf16.msra.mxu0 %v1013
        %1116 = vmatprep.subr.bf16.mxu0 0
        %1117 = vmatpush2.bf16.msra.mxu0 0
        %1118 = vmatprep.subr.bf16.mxu0 0
        %1119 = vmatpush2.bf16.msra.mxu0 0
        %1120 = vmatprep.subr.bf16.mxu0 0
        %1121 = vmatpush2.bf16.msra.mxu0 0
        %1122 = vmatprep.subr.bf16.mxu0 0
        %1123 = vmatpush2.bf16.msra.mxu0 0
        %1124 = vmatprep.subr.bf16.mxu0 0
        %1125 = vmatpush2.bf16.msra.mxu0 0
        %1126 = vmatprep.subr.bf16.mxu0 0
        %1127 = vmatpush2.bf16.msra.mxu0 0
        %1128 = vmatprep.subr.bf16.mxu0 0
        %1129 = vmatpush2.bf16.msra.mxu0 0
        %1130 = vmatprep.subr.bf16.mxu0 0
        %1131 = vmatpush2.bf16.msra.mxu0 0
        %1132 = vmatprep.mubr.bf16.mxu0 0
        %1133 = vmatmul.mubr.bf16.gmra.mxu0 %v881
        %v1134 = vpop.f32.mrf.mxu0
        %v1135 = vadd.f32 %v927, %v1134
        %v1136 = vpop.f32.mrf.mxu0
        %v1137 = vpop.f32.mrf.mxu0
        %v1138 = vpop.f32.mrf.mxu0
        %1139 = vdwg.mxu0
        %v1140 = vpack.c.bf16 %v1094, %v1094
        %v1141 = vpack.c.bf16 %v1096, %v1096
        %v1142 = vpack.c.bf16 %v1135, %v1135
        %1144 = vrot.lane.b32.xlu0 %v1140, 96
        %v1145 = vpop.permute.xlu0 %1144
        %1146 = vrot.lane.b32.xlu0 %v1140, 64
        %v1147 = vpop.permute.xlu0 %1146
        %1148 = vrot.lane.b32.xlu0 %v1140, 32
        %v1149 = vpop.permute.xlu0 %1148
        %1151 = vrot.lane.b32.xlu0 %v1141, 96
        %v1152 = vpop.permute.xlu0 %1151
        %1153 = vrot.lane.b32.xlu0 %v1141, 64
        %v1154 = vpop.permute.xlu0 %1153
        %1155 = vrot.lane.b32.xlu0 %v1141, 32
        %v1156 = vpop.permute.xlu0 %1155
        %1158 = vrot.lane.b32.xlu0 %v1142, 96
        %v1159 = vpop.permute.xlu0 %1158
        %1160 = vrot.lane.b32.xlu0 %v1142, 64
        %v1161 = vpop.permute.xlu0 %1160
        %1162 = vrot.lane.b32.xlu0 %v1142, 32
        %v1163 = vpop.permute.xlu0 %1162
        %vm1164 = vcmask 261120
        %v1166 = vsel %vm1164, %v1140, 0
        %v1169 = vsel %vm1164, %v1141, 0
        %1171 = vmatprep.subr.bf16.mxu0 0
        %1172 = vmatpush1.bf16.xpose.msra.mxu0 0
        %1173 = vmatprep.subr.bf16.mxu0 0
        %1174 = vmatpush1.bf16.xpose.msra.mxu0 0
        %1175 = vmatprep.subr.bf16.mxu0 0
        %1176 = vmatpush1.bf16.xpose.msra.mxu0 0
        %1177 = vmatprep.subr.bf16.mxu0 0
        %1178 = vmatpush1.bf16.xpose.msra.mxu0 0
        %1179 = vmatprep.subr.bf16.mxu0 0
        %1180 = vmatpush1.bf16.xpose.msra.mxu0 0
        %1181 = vmatprep.subr.bf16.mxu0 0
        %1182 = vmatpush1.bf16.xpose.msra.mxu0 0
        %1183 = vmatprep.subr.bf16.mxu0 0
        %1184 = vmatpush1.bf16.xpose.msra.mxu0 0
        %1185 = vmatprep.subr.bf16.mxu0 0
        %1186 = vmatpush1.bf16.xpose.msra.mxu0 %v1169
        %1187 = vmatprep.subr.bf16.mxu0 0
        %1188 = vmatpush2.bf16.xpose.msra.mxu0 0
        %1189 = vmatprep.subr.bf16.mxu0 0
        %1190 = vmatpush2.bf16.xpose.msra.mxu0 0
        %1191 = vmatprep.subr.bf16.mxu0 0
        %1192 = vmatpush2.bf16.xpose.msra.mxu0 0
        %1193 = vmatprep.subr.bf16.mxu0 0
        %1194 = vmatpush2.bf16.xpose.msra.mxu0 0
        %1195 = vmatprep.subr.bf16.mxu0 0
        %1196 = vmatpush2.bf16.xpose.msra.mxu0 0
        %1197 = vmatprep.subr.bf16.mxu0 0
        %1198 = vmatpush2.bf16.xpose.msra.mxu0 0
        %1199 = vmatprep.subr.bf16.mxu0 0
        %1200 = vmatpush2.bf16.xpose.msra.mxu0 0
        %1201 = vmatprep.subr.bf16.mxu0 0
        %1202 = vmatpush2.bf16.xpose.msra.mxu0 0
        %1203 = vmatprep.mubr.bf16.mxu0 0
        %1204 = vmatmul.mubr.bf16.gmra.mxu0 %v1166
        %v1205 = vpop.f32.mrf.mxu0
        %v1206 = vadd.f32 0.0, %v1205
        %v1207 = vpop.f32.mrf.mxu0
        %v1208 = vpop.f32.mrf.mxu0
        %v1209 = vpop.f32.mrf.mxu0
        %1210 = vdwg.mxu0
        %v1212 = vsel %vm1164, %v1145, 0
        %v1215 = vsel %vm1164, %v1152, 0
        %1217 = vmatprep.subr.bf16.mxu0 0
        %1218 = vmatpush1.bf16.xpose.msra.mxu0 0
        %1219 = vmatprep.subr.bf16.mxu0 0
        %1220 = vmatpush1.bf16.xpose.msra.mxu0 0
        %1221 = vmatprep.subr.bf16.mxu0 0
        %1222 = vmatpush1.bf16.xpose.msra.mxu0 0
        %1223 = vmatprep.subr.bf16.mxu0 0
        %1224 = vmatpush1.bf16.xpose.msra.mxu0 0
        %1225 = vmatprep.subr.bf16.mxu0 0
        %1226 = vmatpush1.bf16.xpose.msra.mxu0 0
        %1227 = vmatprep.subr.bf16.mxu0 0
        %1228 = vmatpush1.bf16.xpose.msra.mxu0 0
        %1229 = vmatprep.subr.bf16.mxu0 0
        %1230 = vmatpush1.bf16.xpose.msra.mxu0 0
        %1231 = vmatprep.subr.bf16.mxu0 0
        %1232 = vmatpush1.bf16.xpose.msra.mxu0 %v1215
        %1233 = vmatprep.subr.bf16.mxu0 0
        %1234 = vmatpush2.bf16.xpose.msra.mxu0 0
        %1235 = vmatprep.subr.bf16.mxu0 0
        %1236 = vmatpush2.bf16.xpose.msra.mxu0 0
        %1237 = vmatprep.subr.bf16.mxu0 0
        %1238 = vmatpush2.bf16.xpose.msra.mxu0 0
        %1239 = vmatprep.subr.bf16.mxu0 0
        %1240 = vmatpush2.bf16.xpose.msra.mxu0 0
        %1241 = vmatprep.subr.bf16.mxu0 0
        %1242 = vmatpush2.bf16.xpose.msra.mxu0 0
        %1243 = vmatprep.subr.bf16.mxu0 0
        %1244 = vmatpush2.bf16.xpose.msra.mxu0 0
        %1245 = vmatprep.subr.bf16.mxu0 0
        %1246 = vmatpush2.bf16.xpose.msra.mxu0 0
        %1247 = vmatprep.subr.bf16.mxu0 0
        %1248 = vmatpush2.bf16.xpose.msra.mxu0 0
        %1249 = vmatprep.mubr.bf16.mxu0 0
        %1250 = vmatmul.mubr.bf16.gmra.mxu0 %v1212
        %v1251 = vpop.f32.mrf.mxu0
        %v1252 = vadd.f32 0.0, %v1251
        %v1253 = vpop.f32.mrf.mxu0
        %v1254 = vpop.f32.mrf.mxu0
        %v1255 = vpop.f32.mrf.mxu0
        %1256 = vdwg.mxu0
        %v1258 = vsel %vm1164, %v1147, 0
        %v1261 = vsel %vm1164, %v1154, 0
        %1263 = vmatprep.subr.bf16.mxu0 0
        %1264 = vmatpush1.bf16.xpose.msra.mxu0 0
        %1265 = vmatprep.subr.bf16.mxu0 0
        %1266 = vmatpush1.bf16.xpose.msra.mxu0 0
        %1267 = vmatprep.subr.bf16.mxu0 0
        %1268 = vmatpush1.bf16.xpose.msra.mxu0 0
        %1269 = vmatprep.subr.bf16.mxu0 0
        %1270 = vmatpush1.bf16.xpose.msra.mxu0 0
        %1271 = vmatprep.subr.bf16.mxu0 0
        %1272 = vmatpush1.bf16.xpose.msra.mxu0 0
        %1273 = vmatprep.subr.bf16.mxu0 0
        %1274 = vmatpush1.bf16.xpose.msra.mxu0 0
        %1275 = vmatprep.subr.bf16.mxu0 0
        %1276 = vmatpush1.bf16.xpose.msra.mxu0 0
        %1277 = vmatprep.subr.bf16.mxu0 0
        %1278 = vmatpush1.bf16.xpose.msra.mxu0 %v1261
        %1279 = vmatprep.subr.bf16.mxu0 0
        %1280 = vmatpush2.bf16.xpose.msra.mxu0 0
        %1281 = vmatprep.subr.bf16.mxu0 0
        %1282 = vmatpush2.bf16.xpose.msra.mxu0 0
        %1283 = vmatprep.subr.bf16.mxu0 0
        %1284 = vmatpush2.bf16.xpose.msra.mxu0 0
        %1285 = vmatprep.subr.bf16.mxu0 0
        %1286 = vmatpush2.bf16.xpose.msra.mxu0 0
        %1287 = vmatprep.subr.bf16.mxu0 0
        %1288 = vmatpush2.bf16.xpose.msra.mxu0 0
        %1289 = vmatprep.subr.bf16.mxu0 0
        %1290 = vmatpush2.bf16.xpose.msra.mxu0 0
        %1291 = vmatprep.subr.bf16.mxu0 0
        %1292 = vmatpush2.bf16.xpose.msra.mxu0 0
        %1293 = vmatprep.subr.bf16.mxu0 0
        %1294 = vmatpush2.bf16.xpose.msra.mxu0 0
        %1295 = vmatprep.mubr.bf16.mxu0 0
        %1296 = vmatmul.mubr.bf16.gmra.mxu0 %v1258
        %v1297 = vpop.f32.mrf.mxu0
        %v1298 = vadd.f32 0.0, %v1297
        %v1299 = vpop.f32.mrf.mxu0
        %v1300 = vpop.f32.mrf.mxu0
        %v1301 = vpop.f32.mrf.mxu0
        %1302 = vdwg.mxu0
        %v1304 = vsel %vm1164, %v1149, 0
        %v1307 = vsel %vm1164, %v1156, 0
        %1309 = vmatprep.subr.bf16.mxu0 0
        %1310 = vmatpush1.bf16.xpose.msra.mxu0 0
        %1311 = vmatprep.subr.bf16.mxu0 0
        %1312 = vmatpush1.bf16.xpose.msra.mxu0 0
        %1313 = vmatprep.subr.bf16.mxu0 0
        %1314 = vmatpush1.bf16.xpose.msra.mxu0 0
        %1315 = vmatprep.subr.bf16.mxu0 0
        %1316 = vmatpush1.bf16.xpose.msra.mxu0 0
        %1317 = vmatprep.subr.bf16.mxu0 0
        %1318 = vmatpush1.bf16.xpose.msra.mxu0 0
        %1319 = vmatprep.subr.bf16.mxu0 0
        %1320 = vmatpush1.bf16.xpose.msra.mxu0 0
        %1321 = vmatprep.subr.bf16.mxu0 0
        %1322 = vmatpush1.bf16.xpose.msra.mxu0 0
        %1323 = vmatprep.subr.bf16.mxu0 0
        %1324 = vmatpush1.bf16.xpose.msra.mxu0 %v1307
        %1325 = vmatprep.subr.bf16.mxu0 0
        %1326 = vmatpush2.bf16.xpose.msra.mxu0 0
        %1327 = vmatprep.subr.bf16.mxu0 0
        %1328 = vmatpush2.bf16.xpose.msra.mxu0 0
        %1329 = vmatprep.subr.bf16.mxu0 0
        %1330 = vmatpush2.bf16.xpose.msra.mxu0 0
        %1331 = vmatprep.subr.bf16.mxu0 0
        %1332 = vmatpush2.bf16.xpose.msra.mxu0 0
        %1333 = vmatprep.subr.bf16.mxu0 0
        %1334 = vmatpush2.bf16.xpose.msra.mxu0 0
        %1335 = vmatprep.subr.bf16.mxu0 0
        %1336 = vmatpush2.bf16.xpose.msra.mxu0 0
        %1337 = vmatprep.subr.bf16.mxu0 0
        %1338 = vmatpush2.bf16.xpose.msra.mxu0 0
        %1339 = vmatprep.subr.bf16.mxu0 0
        %1340 = vmatpush2.bf16.xpose.msra.mxu0 0
        %1341 = vmatprep.mubr.bf16.mxu0 0
        %1342 = vmatmul.mubr.bf16.gmra.mxu0 %v1304
        %v1343 = vpop.f32.mrf.mxu0
        %v1344 = vadd.f32 0.0, %v1343
        %v1345 = vpop.f32.mrf.mxu0
        %v1346 = vpop.f32.mrf.mxu0
        %v1347 = vpop.f32.mrf.mxu0
        %1348 = vdwg.mxu0
        %v1349 = vmul.f32 %v1206, 0.17677669
        %v1350 = vmul.f32 %v1252, 0.17677669
        %v1351 = vmul.f32 %v1298, 0.17677669
        %v1352 = vmul.f32 %v1344, 0.17677669
        %v1353 = vld [vmem:[%s2] sm:$0xff]
        %v1354 = vadd.f32 %v1349, %v1353
        %v1355 = vadd.f32 %v1350, %v1353
        %v1356 = vadd.f32 %v1351, %v1353
        %v1357 = vadd.f32 %v1352, %v1353
        %vm1358 = vcmask 64512
        %v1359 = vsel %vm1358, %v1354, -inf
        %1360 = vmax.xlane.f32.xlu0 %v1359
        %v1361 = vpop.xlane.xlu0 %1360
        %v1362 = vsel %vm1358, %v1355, -inf
        %1363 = vmax.xlane.f32.xlu0 %v1362
        %v1364 = vpop.xlane.xlu0 %1363
        %v1365 = vsel %vm1358, %v1356, -inf
        %1366 = vmax.xlane.f32.xlu0 %v1365
        %v1367 = vpop.xlane.xlu0 %1366
        %v1368 = vsel %vm1358, %v1357, -inf
        %1369 = vmax.xlane.f32.xlu0 %v1368
        %v1370 = vpop.xlane.xlu0 %1369
        %v1371 = vsub.f32 %v1354, %v1361
        %v1372 = vsub.f32 %v1355, %v1364
        %v1373 = vsub.f32 %v1356, %v1367
        %v1374 = vsub.f32 %v1357, %v1370
        %v1375 = vmul.f32 %v1371, 1.442695
        %v1376 = vpow.pop %v1375
        %v1377 = vmul.f32 %v1372, 1.442695
        %v1378 = vpow.pop %v1377
        %v1379 = vmul.f32 %v1373, 1.442695
        %v1380 = vpow.pop %v1379
        %v1381 = vmul.f32 %v1374, 1.442695
        %v1382 = vpow.pop %v1381
        %v1383 = vsel %vm1358, %v1376, 0.0
        %1384 = vadd.xlane.f32.xlu0 %v1383
        %v1385 = vpop.xlane.xlu0 %1384
        %v1386 = vsel %vm1358, %v1378, 0.0
        %1387 = vadd.xlane.f32.xlu0 %v1386
        %v1388 = vpop.xlane.xlu0 %1387
        %v1389 = vsel %vm1358, %v1380, 0.0
        %1390 = vadd.xlane.f32.xlu0 %v1389
        %v1391 = vpop.xlane.xlu0 %1390
        %v1392 = vsel %vm1358, %v1382, 0.0
        %1393 = vadd.xlane.f32.xlu0 %v1392
        %v1394 = vpop.xlane.xlu0 %1393
        %v1395 = vrcp.pop %v1385
        %v1396 = vrcp.pop %v1388
        %v1397 = vrcp.pop %v1391
        %v1398 = vrcp.pop %v1394
        %v1399 = vmul.f32 %v1376, %v1395
        %v1400 = vmul.f32 %v1378, %v1396
        %v1401 = vmul.f32 %v1380, %v1397
        %v1402 = vmul.f32 %v1382, %v1398
        %v1403 = vpack.c.bf16 %v1399, %v1399
        %v1404 = vpack.c.bf16 %v1400, %v1400
        %v1405 = vpack.c.bf16 %v1401, %v1401
        %v1406 = vpack.c.bf16 %v1402, %v1402
        %v1408 = vsel %vm1358, %v1403, 0
        %vm1410 = vcmask 1043456
        %v1412 = vsel %vm1410, %v1142, 0
        %1414 = vmatprep.subr.bf16.mxu0 0
        %1415 = vmatpush1.bf16.msra.mxu0 0
        %1416 = vmatprep.subr.bf16.mxu0 0
        %1417 = vmatpush1.bf16.msra.mxu0 0
        %1418 = vmatprep.subr.bf16.mxu0 0
        %1419 = vmatpush1.bf16.msra.mxu0 0
        %1420 = vmatprep.subr.bf16.mxu0 0
        %1421 = vmatpush1.bf16.msra.mxu0 0
        %1422 = vmatprep.subr.bf16.mxu0 0
        %1423 = vmatpush1.bf16.msra.mxu0 0
        %1424 = vmatprep.subr.bf16.mxu0 0
        %1425 = vmatpush1.bf16.msra.mxu0 0
        %1426 = vmatprep.subr.bf16.mxu0 0
        %1427 = vmatpush1.bf16.msra.mxu0 0
        %1428 = vmatprep.subr.bf16.mxu0 0
        %1429 = vmatpush1.bf16.msra.mxu0 %v1412
        %1430 = vmatprep.subr.bf16.mxu0 0
        %1431 = vmatpush2.bf16.msra.mxu0 0
        %1432 = vmatprep.subr.bf16.mxu0 0
        %1433 = vmatpush2.bf16.msra.mxu0 0
        %1434 = vmatprep.subr.bf16.mxu0 0
        %1435 = vmatpush2.bf16.msra.mxu0 0
        %1436 = vmatprep.subr.bf16.mxu0 0
        %1437 = vmatpush2.bf16.msra.mxu0 0
        %1438 = vmatprep.subr.bf16.mxu0 0
        %1439 = vmatpush2.bf16.msra.mxu0 0
        %1440 = vmatprep.subr.bf16.mxu0 0
        %1441 = vmatpush2.bf16.msra.mxu0 0
        %1442 = vmatprep.subr.bf16.mxu0 0
        %1443 = vmatpush2.bf16.msra.mxu0 0
        %1444 = vmatprep.subr.bf16.mxu0 0
        %1445 = vmatpush2.bf16.msra.mxu0 0
        %1446 = vmatprep.mubr.bf16.mxu0 0
        %1447 = vmatmul.mubr.bf16.gmra.mxu0 %v1408
        %v1448 = vpop.f32.mrf.mxu0
        %v1449 = vadd.f32 0.0, %v1448
        %v1450 = vpop.f32.mrf.mxu0
        %v1451 = vpop.f32.mrf.mxu0
        %v1452 = vpop.f32.mrf.mxu0
        %1453 = vdwg.mxu0
        %v1455 = vsel %vm1358, %v1404, 0
        %v1458 = vsel %vm1410, %v1159, 0
        %1460 = vmatprep.subr.bf16.mxu0 0
        %1461 = vmatpush1.bf16.msra.mxu0 0
        %1462 = vmatprep.subr.bf16.mxu0 0
        %1463 = vmatpush1.bf16.msra.mxu0 0
        %1464 = vmatprep.subr.bf16.mxu0 0
        %1465 = vmatpush1.bf16.msra.mxu0 0
        %1466 = vmatprep.subr.bf16.mxu0 0
        %1467 = vmatpush1.bf16.msra.mxu0 0
        %1468 = vmatprep.subr.bf16.mxu0 0
        %1469 = vmatpush1.bf16.msra.mxu0 0
        %1470 = vmatprep.subr.bf16.mxu0 0
        %1471 = vmatpush1.bf16.msra.mxu0 0
        %1472 = vmatprep.subr.bf16.mxu0 0
        %1473 = vmatpush1.bf16.msra.mxu0 0
        %1474 = vmatprep.subr.bf16.mxu0 0
        %1475 = vmatpush1.bf16.msra.mxu0 %v1458
        %1476 = vmatprep.subr.bf16.mxu0 0
        %1477 = vmatpush2.bf16.msra.mxu0 0
        %1478 = vmatprep.subr.bf16.mxu0 0
        %1479 = vmatpush2.bf16.msra.mxu0 0
        %1480 = vmatprep.subr.bf16.mxu0 0
        %1481 = vmatpush2.bf16.msra.mxu0 0
        %1482 = vmatprep.subr.bf16.mxu0 0
        %1483 = vmatpush2.bf16.msra.mxu0 0
        %1484 = vmatprep.subr.bf16.mxu0 0
        %1485 = vmatpush2.bf16.msra.mxu0 0
        %1486 = vmatprep.subr.bf16.mxu0 0
        %1487 = vmatpush2.bf16.msra.mxu0 0
        %1488 = vmatprep.subr.bf16.mxu0 0
        %1489 = vmatpush2.bf16.msra.mxu0 0
        %1490 = vmatprep.subr.bf16.mxu0 0
        %1491 = vmatpush2.bf16.msra.mxu0 0
        %1492 = vmatprep.mubr.bf16.mxu0 0
        %1493 = vmatmul.mubr.bf16.gmra.mxu0 %v1455
        %v1494 = vpop.f32.mrf.mxu0
        %v1495 = vadd.f32 0.0, %v1494
        %v1496 = vpop.f32.mrf.mxu0
        %v1497 = vpop.f32.mrf.mxu0
        %v1498 = vpop.f32.mrf.mxu0
        %1499 = vdwg.mxu0
        %v1501 = vsel %vm1358, %v1405, 0
        %v1504 = vsel %vm1410, %v1161, 0
        %1506 = vmatprep.subr.bf16.mxu0 0
        %1507 = vmatpush1.bf16.msra.mxu0 0
        %1508 = vmatprep.subr.bf16.mxu0 0
        %1509 = vmatpush1.bf16.msra.mxu0 0
        %1510 = vmatprep.subr.bf16.mxu0 0
        %1511 = vmatpush1.bf16.msra.mxu0 0
        %1512 = vmatprep.subr.bf16.mxu0 0
        %1513 = vmatpush1.bf16.msra.mxu0 0
        %1514 = vmatprep.subr.bf16.mxu0 0
        %1515 = vmatpush1.bf16.msra.mxu0 0
        %1516 = vmatprep.subr.bf16.mxu0 0
        %1517 = vmatpush1.bf16.msra.mxu0 0
        %1518 = vmatprep.subr.bf16.mxu0 0
        %1519 = vmatpush1.bf16.msra.mxu0 0
        %1520 = vmatprep.subr.bf16.mxu0 0
        %1521 = vmatpush1.bf16.msra.mxu0 %v1504
        %1522 = vmatprep.subr.bf16.mxu0 0
        %1523 = vmatpush2.bf16.msra.mxu0 0
        %1524 = vmatprep.subr.bf16.mxu0 0
        %1525 = vmatpush2.bf16.msra.mxu0 0
        %1526 = vmatprep.subr.bf16.mxu0 0
        %1527 = vmatpush2.bf16.msra.mxu0 0
        %1528 = vmatprep.subr.bf16.mxu0 0
        %1529 = vmatpush2.bf16.msra.mxu0 0
        %1530 = vmatprep.subr.bf16.mxu0 0
        %1531 = vmatpush2.bf16.msra.mxu0 0
        %1532 = vmatprep.subr.bf16.mxu0 0
        %1533 = vmatpush2.bf16.msra.mxu0 0
        %1534 = vmatprep.subr.bf16.mxu0 0
        %1535 = vmatpush2.bf16.msra.mxu0 0
        %1536 = vmatprep.subr.bf16.mxu0 0
        %1537 = vmatpush2.bf16.msra.mxu0 0
        %1538 = vmatprep.mubr.bf16.mxu0 0
        %1539 = vmatmul.mubr.bf16.gmra.mxu0 %v1501
        %v1540 = vpop.f32.mrf.mxu0
        %v1541 = vadd.f32 0.0, %v1540
        %v1542 = vpop.f32.mrf.mxu0
        %v1543 = vpop.f32.mrf.mxu0
        %v1544 = vpop.f32.mrf.mxu0
        %1545 = vdwg.mxu0
        %v1547 = vsel %vm1358, %v1406, 0
        %v1550 = vsel %vm1410, %v1163, 0
        %1552 = vmatprep.subr.bf16.mxu0 0
        %1553 = vmatpush1.bf16.msra.mxu0 0
        %1554 = vmatprep.subr.bf16.mxu0 0
        %1555 = vmatpush1.bf16.msra.mxu0 0
        %1556 = vmatprep.subr.bf16.mxu0 0
        %1557 = vmatpush1.bf16.msra.mxu0 0
        %1558 = vmatprep.subr.bf16.mxu0 0
        %1559 = vmatpush1.bf16.msra.mxu0 0
        %1560 = vmatprep.subr.bf16.mxu0 0
        %1561 = vmatpush1.bf16.msra.mxu0 0
        %1562 = vmatprep.subr.bf16.mxu0 0
        %1563 = vmatpush1.bf16.msra.mxu0 0
        %1564 = vmatprep.subr.bf16.mxu0 0
        %1565 = vmatpush1.bf16.msra.mxu0 0
        %1566 = vmatprep.subr.bf16.mxu0 0
        %1567 = vmatpush1.bf16.msra.mxu0 %v1550
        %1568 = vmatprep.subr.bf16.mxu0 0
        %1569 = vmatpush2.bf16.msra.mxu0 0
        %1570 = vmatprep.subr.bf16.mxu0 0
        %1571 = vmatpush2.bf16.msra.mxu0 0
        %1572 = vmatprep.subr.bf16.mxu0 0
        %1573 = vmatpush2.bf16.msra.mxu0 0
        %1574 = vmatprep.subr.bf16.mxu0 0
        %1575 = vmatpush2.bf16.msra.mxu0 0
        %1576 = vmatprep.subr.bf16.mxu0 0
        %1577 = vmatpush2.bf16.msra.mxu0 0
        %1578 = vmatprep.subr.bf16.mxu0 0
        %1579 = vmatpush2.bf16.msra.mxu0 0
        %1580 = vmatprep.subr.bf16.mxu0 0
        %1581 = vmatpush2.bf16.msra.mxu0 0
        %1582 = vmatprep.subr.bf16.mxu0 0
        %1583 = vmatpush2.bf16.msra.mxu0 0
        %1584 = vmatprep.mubr.bf16.mxu0 0
        %1585 = vmatmul.mubr.bf16.gmra.mxu0 %v1547
        %v1586 = vpop.f32.mrf.mxu0
        %v1587 = vadd.f32 0.0, %v1586
        %v1588 = vpop.f32.mrf.mxu0
        %v1589 = vpop.f32.mrf.mxu0
        %v1590 = vpop.f32.mrf.mxu0
        %1591 = vdwg.mxu0
        %1592 = vst.msk [vmem:[#allocation3] sm:$0xff] %vm1164, %v1449
        %1594 = vrot.lane.b32.xlu0 %v1495, 32
        %v1595 = vpop.permute.xlu0 %1594
        %vm1597 = vcmask 523520
        %1598 = vst.msk [vmem:[#allocation3] sm:$0xff] %vm1597, %v1595
        %1600 = vrot.lane.b32.xlu0 %v1541, 64
        %v1601 = vpop.permute.xlu0 %1600
        %vm1603 = vcmask 785920
        %1604 = vst.msk [vmem:[#allocation3] sm:$0xff] %vm1603, %v1601
        %1606 = vrot.lane.b32.xlu0 %v1587, 96
        %v1607 = vpop.permute.xlu0 %1606
        %vm1609 = vcmask 1048320
        %1610 = vst.msk [vmem:[#allocation3] sm:$0xff] %vm1609, %v1607
        %v1611 = vld [vmem:[#allocation3] sm:$0xff]
        %v1612 = vpack.c.bf16 %v1611, %v1611
        %v1613 = vld [vmem:[%s782] sm:$0xf]
        %v1614 = vld [vmem:[%s782 + $0x4] sm:$0xf]
        %v1615 = vld [vmem:[%s782 + $0x8] sm:$0xf]
        %v1616 = vld [vmem:[%s782 + $0xc] sm:$0xf]
        %v1617 = vld [vmem:[%s782 + $0x10] sm:$0xf]
        %v1618 = vld [vmem:[%s782 + $0x14] sm:$0xf]
        %v1619 = vld [vmem:[%s782 + $0x18] sm:$0xf]
        %v1620 = vld [vmem:[%s782 + $0x1c] sm:$0xf]
        %v1621 = vld [vmem:[%s782 + $0x20] sm:$0xf]
        %v1622 = vld [vmem:[%s782 + $0x24] sm:$0xf]
        %v1623 = vld [vmem:[%s782 + $0x28] sm:$0xf]
        %v1624 = vld [vmem:[%s782 + $0x2c] sm:$0xf]
        %v1625 = vld [vmem:[%s782 + $0x30] sm:$0xf]
        %v1626 = vld [vmem:[%s782 + $0x34] sm:$0xf]
        %v1627 = vld [vmem:[%s782 + $0x38] sm:$0xf]
        %v1628 = vld [vmem:[%s782 + $0x3c] sm:$0xf]
        %v1629 = vld [vmem:[%s785] sm:$0x1]
        %v1631 = vlaneseq
        %v1632 = vshrl.u32 %v1631, 7
        %v1633 = vsub.s32 0, %v1632
        %v1634 = vrot.slane %v1629, %v1633
        %v1652 = vunpack.c.l.b16 %v1613
        %v1653 = vunpack.c.l.b16 %v1614
        %v1654 = vunpack.c.l.b16 %v1615
        %v1655 = vunpack.c.l.b16 %v1616
        %v1656 = vunpack.c.l.b16 %v1617
        %v1657 = vunpack.c.l.b16 %v1618
        %v1658 = vunpack.c.l.b16 %v1619
        %v1659 = vunpack.c.l.b16 %v1620
        %v1660 = vunpack.c.l.b16 %v1621
        %v1661 = vunpack.c.l.b16 %v1622
        %v1662 = vunpack.c.l.b16 %v1623
        %v1663 = vunpack.c.l.b16 %v1624
        %v1664 = vunpack.c.l.b16 %v1625
        %v1665 = vunpack.c.l.b16 %v1626
        %v1666 = vunpack.c.l.b16 %v1627
        %v1667 = vunpack.c.l.b16 %v1628
        %v1668 = vpack.c.b16 %v1653, %v1652
        %v1669 = vpack.c.b16 %v1655, %v1654
        %v1670 = vpack.c.b16 %v1657, %v1656
        %v1671 = vpack.c.b16 %v1659, %v1658
        %v1672 = vpack.c.b16 %v1661, %v1660
        %v1673 = vpack.c.b16 %v1663, %v1662
        %v1674 = vpack.c.b16 %v1665, %v1664
        %v1675 = vpack.c.b16 %v1667, %v1666
        %1684 = vmatprep.subr.bf16.mxu0 0
        %1685 = vmatpush1.bf16.msra.mxu0 %v1675
        %1686 = vmatprep.subr.bf16.mxu0 0
        %1687 = vmatpush1.bf16.msra.mxu0 %v1674
        %1688 = vmatprep.subr.bf16.mxu0 0
        %1689 = vmatpush1.bf16.msra.mxu0 %v1673
        %1690 = vmatprep.subr.bf16.mxu0 0
        %1691 = vmatpush1.bf16.msra.mxu0 %v1672
        %1692 = vmatprep.subr.bf16.mxu0 0
        %1693 = vmatpush1.bf16.msra.mxu0 %v1671
        %1694 = vmatprep.subr.bf16.mxu0 0
        %1695 = vmatpush1.bf16.msra.mxu0 %v1670
        %1696 = vmatprep.subr.bf16.mxu0 0
        %1697 = vmatpush1.bf16.msra.mxu0 %v1669
        %1698 = vmatprep.subr.bf16.mxu0 0
        %1699 = vmatpush1.bf16.msra.mxu0 %v1668
        %1700 = vmatprep.subr.bf16.mxu0 0
        %1701 = vmatpush2.bf16.msra.mxu0 0
        %1702 = vmatprep.subr.bf16.mxu0 0
        %1703 = vmatpush2.bf16.msra.mxu0 0
        %1704 = vmatprep.subr.bf16.mxu0 0
        %1705 = vmatpush2.bf16.msra.mxu0 0
        %1706 = vmatprep.subr.bf16.mxu0 0
        %1707 = vmatpush2.bf16.msra.mxu0 0
        %1708 = vmatprep.subr.bf16.mxu0 0
        %1709 = vmatpush2.bf16.msra.mxu0 0
        %1710 = vmatprep.subr.bf16.mxu0 0
        %1711 = vmatpush2.bf16.msra.mxu0 0
        %1712 = vmatprep.subr.bf16.mxu0 0
        %1713 = vmatpush2.bf16.msra.mxu0 0
        %1714 = vmatprep.subr.bf16.mxu0 0
        %1715 = vmatpush2.bf16.msra.mxu0 0
        %1716 = vmatprep.mubr.bf16.mxu0 0
        %1717 = vmatmul.mubr.bf16.gmra.mxu0 %v1612
        %v1718 = vpop.f32.mrf.mxu0
        %v1719 = vadd.f32 %v1634, %v1718
        %v1720 = vpop.f32.mrf.mxu0
        %v1721 = vpop.f32.mrf.mxu0
        %v1722 = vpop.f32.mrf.mxu0
        %1723 = vdwg.mxu0
        %v1724 = vadd.f32 %v852, %v1719
        %v1725 = vld [vmem:[%s788] sm:$0x1]
        %v1726 = vld [vmem:[%s791] sm:$0x1]
        %1727 = vadd.xlane.f32.xlu0 %v1724
        %v1728 = vpop.xlane.xlu0 %1727
        %v1729 = vmul.f32 %v1728, %v857
        %v1730 = vsub.f32 %v1724, %v1729
        %v1731 = vmul.f32 %v1730, %v1730
        %1732 = vadd.xlane.f32.xlu0 %v1731
        %v1733 = vpop.xlane.xlu0 %1732
        %v1734 = vmul.f32 %v1733, %v857
        %v1735 = vadd.f32 %v1734, 1e-05
        %v1736 = vrsqrt.pop %v1735
        %v1737 = vmul.f32 %v1730, %v1736
        %v1739 = vlaneseq
        %v1740 = vshrl.u32 %v1739, 7
        %v1741 = vsub.s32 0, %v1740
        %v1742 = vrot.slane %v1725, %v1741
        %v1744 = vmul.f32 %v1737, %v1742
        %v1746 = vlaneseq
        %v1747 = vshrl.u32 %v1746, 7
        %v1748 = vsub.s32 0, %v1747
        %v1749 = vrot.slane %v1726, %v1748
        %v1751 = vadd.f32 %v1744, %v1749
        %v1752 = vpack.c.bf16 %v1751, %v1751
        %v1753 = vld [vmem:[%s662] sm:$0xff]
        %v1754 = vld [vmem:[%s662 + $0x8] sm:$0xff]
        %v1755 = vld [vmem:[%s662 + $0x10] sm:$0xff]
        %v1756 = vld [vmem:[%s662 + $0x18] sm:$0xff]
        %v1757 = vld [vmem:[%s662 + $0x20] sm:$0xff]
        %v1758 = vld [vmem:[%s662 + $0x28] sm:$0xff]
        %v1759 = vld [vmem:[%s662 + $0x30] sm:$0xff]
        %v1760 = vld [vmem:[%s662 + $0x38] sm:$0xff]
        %v1761 = vld [vmem:[%s662 + $0x40] sm:$0xff]
        %v1762 = vld [vmem:[%s662 + $0x48] sm:$0xff]
        %v1763 = vld [vmem:[%s662 + $0x50] sm:$0xff]
        %v1764 = vld [vmem:[%s662 + $0x58] sm:$0xff]
        %v1765 = vld [vmem:[%s662 + $0x60] sm:$0xff]
        %v1766 = vld [vmem:[%s662 + $0x68] sm:$0xff]
        %v1767 = vld [vmem:[%s662 + $0x70] sm:$0xff]
        %v1768 = vld [vmem:[%s662 + $0x78] sm:$0xff]
        %v1769 = vld [vmem:[%s662 + $0x80] sm:$0xff]
        %v1770 = vld [vmem:[%s662 + $0x88] sm:$0xff]
        %v1771 = vld [vmem:[%s662 + $0x90] sm:$0xff]
        %v1772 = vld [vmem:[%s662 + $0x98] sm:$0xff]
        %v1773 = vld [vmem:[%s662 + $0xa0] sm:$0xff]
        %v1774 = vld [vmem:[%s662 + $0xa8] sm:$0xff]
        %v1775 = vld [vmem:[%s662 + $0xb0] sm:$0xff]
        %v1776 = vld [vmem:[%s662 + $0xb8] sm:$0xff]
        %v1777 = vld [vmem:[%s662 + $0xc0] sm:$0xff]
        %v1778 = vld [vmem:[%s662 + $0xc8] sm:$0xff]
        %v1779 = vld [vmem:[%s662 + $0xd0] sm:$0xff]
        %v1780 = vld [vmem:[%s662 + $0xd8] sm:$0xff]
        %v1781 = vld [vmem:[%s662 + $0xe0] sm:$0xff]
        %v1782 = vld [vmem:[%s662 + $0xe8] sm:$0xff]
        %v1783 = vld [vmem:[%s662 + $0xf0] sm:$0xff]
        %v1784 = vld [vmem:[%s662 + $0xf8] sm:$0xff]
        %v1785 = vld [vmem:[%s795] sm:$0xf]
        %v1787 = vlaneseq
        %v1788 = vshrl.u32 %v1787, 7
        %v1789 = vsub.s32 0, %v1788
        %v1790 = vrot.slane %v1785, %v1789
        %v1791 = vlaneseq
        %v1792 = vshrl.u32 %v1791, 7
        %v1793 = vsub.s32 1, %v1792
        %v1794 = vrot.slane %v1785, %v1793
        %v1795 = vlaneseq
        %v1796 = vshrl.u32 %v1795, 7
        %v1797 = vsub.s32 2, %v1796
        %v1798 = vrot.slane %v1785, %v1797
        %v1799 = vlaneseq
        %v1800 = vshrl.u32 %v1799, 7
        %v1801 = vsub.s32 3, %v1800
        %v1802 = vrot.slane %v1785, %v1801
        %v1839 = vunpack.c.l.b16 %v1753
        %v1840 = vunpack.c.h.b16 %v1753
        %v1841 = vunpack.c.l.b16 %v1754
        %v1842 = vunpack.c.h.b16 %v1754
        %v1843 = vunpack.c.l.b16 %v1755
        %v1844 = vunpack.c.h.b16 %v1755
        %v1845 = vunpack.c.l.b16 %v1756
        %v1846 = vunpack.c.h.b16 %v1756
        %v1847 = vunpack.c.l.b16 %v1757
        %v1848 = vunpack.c.h.b16 %v1757
        %v1849 = vunpack.c.l.b16 %v1758
        %v1850 = vunpack.c.h.b16 %v1758
        %v1851 = vunpack.c.l.b16 %v1759
        %v1852 = vunpack.c.h.b16 %v1759
        %v1853 = vunpack.c.l.b16 %v1760
        %v1854 = vunpack.c.h.b16 %v1760
        %v1855 = vunpack.c.l.b16 %v1761
        %v1856 = vunpack.c.h.b16 %v1761
        %v1857 = vunpack.c.l.b16 %v1762
        %v1858 = vunpack.c.h.b16 %v1762
        %v1859 = vunpack.c.l.b16 %v1763
        %v1860 = vunpack.c.h.b16 %v1763
        %v1861 = vunpack.c.l.b16 %v1764
        %v1862 = vunpack.c.h.b16 %v1764
        %v1863 = vunpack.c.l.b16 %v1765
        %v1864 = vunpack.c.h.b16 %v1765
        %v1865 = vunpack.c.l.b16 %v1766
        %v1866 = vunpack.c.h.b16 %v1766
        %v1867 = vunpack.c.l.b16 %v1767
        %v1868 = vunpack.c.h.b16 %v1767
        %v1869 = vunpack.c.l.b16 %v1768
        %v1870 = vunpack.c.h.b16 %v1768
        %v1871 = vunpack.c.l.b16 %v1769
        %v1872 = vunpack.c.h.b16 %v1769
        %v1873 = vunpack.c.l.b16 %v1770
        %v1874 = vunpack.c.h.b16 %v1770
        %v1875 = vunpack.c.l.b16 %v1771
        %v1876 = vunpack.c.h.b16 %v1771
        %v1877 = vunpack.c.l.b16 %v1772
        %v1878 = vunpack.c.h.b16 %v1772
        %v1879 = vunpack.c.l.b16 %v1773
        %v1880 = vunpack.c.h.b16 %v1773
        %v1881 = vunpack.c.l.b16 %v1774
        %v1882 = vunpack.c.h.b16 %v1774
        %v1883 = vunpack.c.l.b16 %v1775
        %v1884 = vunpack.c.h.b16 %v1775
        %v1885 = vunpack.c.l.b16 %v1776
        %v1886 = vunpack.c.h.b16 %v1776
        %v1887 = vunpack.c.l.b16 %v1777
        %v1888 = vunpack.c.h.b16 %v1777
        %v1889 = vunpack.c.l.b16 %v1778
        %v1890 = vunpack.c.h.b16 %v1778
        %v1891 = vunpack.c.l.b16 %v1779
        %v1892 = vunpack.c.h.b16 %v1779
        %v1893 = vunpack.c.l.b16 %v1780
        %v1894 = vunpack.c.h.b16 %v1780
        %v1895 = vunpack.c.l.b16 %v1781
        %v1896 = vunpack.c.h.b16 %v1781
        %v1897 = vunpack.c.l.b16 %v1782
        %v1898 = vunpack.c.h.b16 %v1782
        %v1899 = vunpack.c.l.b16 %v1783
        %v1900 = vunpack.c.h.b16 %v1783
        %v1901 = vunpack.c.l.b16 %v1784
        %v1902 = vunpack.c.h.b16 %v1784
        %v1903 = vpack.c.b16 %v1843, %v1839
        %v1904 = vpack.c.b16 %v1844, %v1840
        %v1905 = vpack.c.b16 %v1845, %v1841
        %v1906 = vpack.c.b16 %v1846, %v1842
        %v1907 = vpack.c.b16 %v1851, %v1847
        %v1908 = vpack.c.b16 %v1852, %v1848
        %v1909 = vpack.c.b16 %v1853, %v1849
        %v1910 = vpack.c.b16 %v1854, %v1850
        %v1911 = vpack.c.b16 %v1859, %v1855
        %v1912 = vpack.c.b16 %v1860, %v1856
        %v1913 = vpack.c.b16 %v1861, %v1857
        %v1914 = vpack.c.b16 %v1862, %v1858
        %v1915 = vpack.c.b16 %v1867, %v1863
        %v1916 = vpack.c.b16 %v1868, %v1864
        %v1917 = vpack.c.b16 %v1869, %v1865
        %v1918 = vpack.c.b16 %v1870, %v1866
        %v1919 = vpack.c.b16 %v1875, %v1871
        %v1920 = vpack.c.b16 %v1876, %v1872
        %v1921 = vpack.c.b16 %v1877, %v1873
        %v1922 = vpack.c.b16 %v1878, %v1874
        %v1923 = vpack.c.b16 %v1883, %v1879
        %v1924 = vpack.c.b16 %v1884, %v1880
        %v1925 = vpack.c.b16 %v1885, %v1881
        %v1926 = vpack.c.b16 %v1886, %v1882
        %v1927 = vpack.c.b16 %v1891, %v1887
        %v1928 = vpack.c.b16 %v1892, %v1888
        %v1929 = vpack.c.b16 %v1893, %v1889
        %v1930 = vpack.c.b16 %v1894, %v1890
        %v1931 = vpack.c.b16 %v1899, %v1895
        %v1932 = vpack.c.b16 %v1900, %v1896
        %v1933 = vpack.c.b16 %v1901, %v1897
        %v1934 = vpack.c.b16 %v1902, %v1898
        %1967 = vmatprep.subr.bf16.mxu0 %v1932
        %1968 = vmatpush1.bf16.msra.mxu0 %v1931
        %1969 = vmatprep.subr.bf16.mxu0 %v1928
        %1970 = vmatpush1.bf16.msra.mxu0 %v1927
        %1971 = vmatprep.subr.bf16.mxu0 %v1924
        %1972 = vmatpush1.bf16.msra.mxu0 %v1923
        %1973 = vmatprep.subr.bf16.mxu0 %v1920
        %1974 = vmatpush1.bf16.msra.mxu0 %v1919
        %1975 = vmatprep.subr.bf16.mxu0 %v1916
        %1976 = vmatpush1.bf16.msra.mxu0 %v1915
        %1977 = vmatprep.subr.bf16.mxu0 %v1912
        %1978 = vmatpush1.bf16.msra.mxu0 %v1911
        %1979 = vmatprep.subr.bf16.mxu0 %v1908
        %1980 = vmatpush1.bf16.msra.mxu0 %v1907
        %1981 = vmatprep.subr.bf16.mxu0 %v1904
        %1982 = vmatpush1.bf16.msra.mxu0 %v1903
        %1983 = vmatprep.subr.bf16.mxu0 0
        %1984 = vmatpush2.bf16.msra.mxu0 0
        %1985 = vmatprep.subr.bf16.mxu0 0
        %1986 = vmatpush2.bf16.msra.mxu0 0
        %1987 = vmatprep.subr.bf16.mxu0 0
        %1988 = vmatpush2.bf16.msra.mxu0 0
        %1989 = vmatprep.subr.bf16.mxu0 0
        %1990 = vmatpush2.bf16.msra.mxu0 0
        %1991 = vmatprep.subr.bf16.mxu0 0
        %1992 = vmatpush2.bf16.msra.mxu0 0
        %1993 = vmatprep.subr.bf16.mxu0 0
        %1994 = vmatpush2.bf16.msra.mxu0 0
        %1995 = vmatprep.subr.bf16.mxu0 0
        %1996 = vmatpush2.bf16.msra.mxu0 0
        %1997 = vmatprep.subr.bf16.mxu0 0
        %1998 = vmatpush2.bf16.msra.mxu0 0
        %1999 = vmatprep.mubr.bf16.mxu0 0
        %2000 = vmatmul.mubr.bf16.gmra.mxu0 %v1752
        %v2001 = vpop.f32.mrf.mxu0
        %v2002 = vadd.f32 %v1790, %v2001
        %v2003 = vpop.f32.mrf.mxu0
        %v2004 = vadd.f32 %v1794, %v2003
        %v2005 = vpop.f32.mrf.mxu0
        %v2006 = vpop.f32.mrf.mxu0
        %2007 = vdwg.mxu0
        %2008 = vmatprep.subr.bf16.mxu0 %v1934
        %2009 = vmatpush1.bf16.msra.mxu0 %v1933
        %2010 = vmatprep.subr.bf16.mxu0 %v1930
        %2011 = vmatpush1.bf16.msra.mxu0 %v1929
        %2012 = vmatprep.subr.bf16.mxu0 %v1926
        %2013 = vmatpush1.bf16.msra.mxu0 %v1925
        %2014 = vmatprep.subr.bf16.mxu0 %v1922
        %2015 = vmatpush1.bf16.msra.mxu0 %v1921
        %2016 = vmatprep.subr.bf16.mxu0 %v1918
        %2017 = vmatpush1.bf16.msra.mxu0 %v1917
        %2018 = vmatprep.subr.bf16.mxu0 %v1914
        %2019 = vmatpush1.bf16.msra.mxu0 %v1913
        %2020 = vmatprep.subr.bf16.mxu0 %v1910
        %2021 = vmatpush1.bf16.msra.mxu0 %v1909
        %2022 = vmatprep.subr.bf16.mxu0 %v1906
        %2023 = vmatpush1.bf16.msra.mxu0 %v1905
        %2024 = vmatprep.subr.bf16.mxu0 0
        %2025 = vmatpush2.bf16.msra.mxu0 0
        %2026 = vmatprep.subr.bf16.mxu0 0
        %2027 = vmatpush2.bf16.msra.mxu0 0
        %2028 = vmatprep.subr.bf16.mxu0 0
        %2029 = vmatpush2.bf16.msra.mxu0 0
        %2030 = vmatprep.subr.bf16.mxu0 0
        %2031 = vmatpush2.bf16.msra.mxu0 0
        %2032 = vmatprep.subr.bf16.mxu0 0
        %2033 = vmatpush2.bf16.msra.mxu0 0
        %2034 = vmatprep.subr.bf16.mxu0 0
        %2035 = vmatpush2.bf16.msra.mxu0 0
        %2036 = vmatprep.subr.bf16.mxu0 0
        %2037 = vmatpush2.bf16.msra.mxu0 0
        %2038 = vmatprep.subr.bf16.mxu0 0
        %2039 = vmatpush2.bf16.msra.mxu0 0
        %2040 = vmatprep.mubr.bf16.mxu0 0
        %2041 = vmatmul.mubr.bf16.gmra.mxu0 %v1752
        %v2042 = vpop.f32.mrf.mxu0
        %v2043 = vadd.f32 %v1798, %v2042
        %v2044 = vpop.f32.mrf.mxu0
        %v2045 = vadd.f32 %v1802, %v2044
        %v2046 = vpop.f32.mrf.mxu0
        %v2047 = vpop.f32.mrf.mxu0
        %2048 = vdwg.mxu0
        %v2049 = vmul.f32 %v2002, 1.702
        %v2050 = vmul.f32 %v2004, 1.702
        %v2051 = vmul.f32 %v2043, 1.702
        %v2052 = vmul.f32 %v2045, 1.702
        %v2053 = vxor.u32 %v2049, 2147483648
        %v2054 = vxor.u32 %v2050, 2147483648
        %v2055 = vxor.u32 %v2051, 2147483648
        %v2056 = vxor.u32 %v2052, 2147483648
        %v2057 = vmul.f32 %v2053, 1.442695
        %v2058 = vpow.pop %v2057
        %v2059 = vmul.f32 %v2054, 1.442695
        %v2060 = vpow.pop %v2059
        %v2061 = vmul.f32 %v2055, 1.442695
        %v2062 = vpow.pop %v2061
        %v2063 = vmul.f32 %v2056, 1.442695
        %v2064 = vpow.pop %v2063
        %v2065 = vadd.f32 %v2058, 1.0
        %v2066 = vadd.f32 %v2060, 1.0
        %v2067 = vadd.f32 %v2062, 1.0
        %v2068 = vadd.f32 %v2064, 1.0
        %v2069 = vrcp.pop %v2065
        %v2070 = vmul.f32 1.0, %v2069
        %v2071 = vrcp.pop %v2066
        %v2072 = vmul.f32 1.0, %v2071
        %v2073 = vrcp.pop %v2067
        %v2074 = vmul.f32 1.0, %v2073
        %v2075 = vrcp.pop %v2068
        %v2076 = vmul.f32 1.0, %v2075
        %v2077 = vmul.f32 %v2002, %v2070
        %v2078 = vmul.f32 %v2004, %v2072
        %v2079 = vmul.f32 %v2043, %v2074
        %v2080 = vmul.f32 %v2045, %v2076
        %v2081 = vpack.c.bf16 %v2077, %v2077
        %v2082 = vpack.c.bf16 %v2078, %v2078
        %v2083 = vpack.c.bf16 %v2079, %v2079
        %v2084 = vpack.c.bf16 %v2080, %v2080
        %v2085 = vld [vmem:[%s671] sm:$0xf]
        %v2086 = vld [vmem:[%s671 + $0x4] sm:$0xf]
        %v2087 = vld [vmem:[%s671 + $0x8] sm:$0xf]
        %v2088 = vld [vmem:[%s671 + $0xc] sm:$0xf]
        %v2089 = vld [vmem:[%s671 + $0x10] sm:$0xf]
        %v2090 = vld [vmem:[%s671 + $0x14] sm:$0xf]
        %v2091 = vld [vmem:[%s671 + $0x18] sm:$0xf]
        %v2092 = vld [vmem:[%s671 + $0x1c] sm:$0xf]
        %v2093 = vld [vmem:[%s671 + $0x20] sm:$0xf]
        %v2094 = vld [vmem:[%s671 + $0x24] sm:$0xf]
        %v2095 = vld [vmem:[%s671 + $0x28] sm:$0xf]
        %v2096 = vld [vmem:[%s671 + $0x2c] sm:$0xf]
        %v2097 = vld [vmem:[%s671 + $0x30] sm:$0xf]
        %v2098 = vld [vmem:[%s671 + $0x34] sm:$0xf]
        %v2099 = vld [vmem:[%s671 + $0x38] sm:$0xf]
        %v2100 = vld [vmem:[%s671 + $0x3c] sm:$0xf]
        %v2101 = vld [vmem:[%s671 + $0x40] sm:$0xf]
        %v2102 = vld [vmem:[%s671 + $0x44] sm:$0xf]
        %v2103 = vld [vmem:[%s671 + $0x48] sm:$0xf]
        %v2104 = vld [vmem:[%s671 + $0x4c] sm:$0xf]
        %v2105 = vld [vmem:[%s671 + $0x50] sm:$0xf]
        %v2106 = vld [vmem:[%s671 + $0x54] sm:$0xf]
        %v2107 = vld [vmem:[%s671 + $0x58] sm:$0xf]
        %v2108 = vld [vmem:[%s671 + $0x5c] sm:$0xf]
        %v2109 = vld [vmem:[%s671 + $0x60] sm:$0xf]
        %v2110 = vld [vmem:[%s671 + $0x64] sm:$0xf]
        %v2111 = vld [vmem:[%s671 + $0x68] sm:$0xf]
        %v2112 = vld [vmem:[%s671 + $0x6c] sm:$0xf]
        %v2113 = vld [vmem:[%s671 + $0x70] sm:$0xf]
        %v2114 = vld [vmem:[%s671 + $0x74] sm:$0xf]
        %v2115 = vld [vmem:[%s671 + $0x78] sm:$0xf]
        %v2116 = vld [vmem:[%s671 + $0x7c] sm:$0xf]
        %v2117 = vld [vmem:[%s671 + $0x80] sm:$0xf]
        %v2118 = vld [vmem:[%s671 + $0x84] sm:$0xf]
        %v2119 = vld [vmem:[%s671 + $0x88] sm:$0xf]
        %v2120 = vld [vmem:[%s671 + $0x8c] sm:$0xf]
        %v2121 = vld [vmem:[%s671 + $0x90] sm:$0xf]
        %v2122 = vld [vmem:[%s671 + $0x94] sm:$0xf]
        %v2123 = vld [vmem:[%s671 + $0x98] sm:$0xf]
        %v2124 = vld [vmem:[%s671 + $0x9c] sm:$0xf]
        %v2125 = vld [vmem:[%s671 + $0xa0] sm:$0xf]
        %v2126 = vld [vmem:[%s671 + $0xa4] sm:$0xf]
        %v2127 = vld [vmem:[%s671 + $0xa8] sm:$0xf]
        %v2128 = vld [vmem:[%s671 + $0xac] sm:$0xf]
        %v2129 = vld [vmem:[%s671 + $0xb0] sm:$0xf]
        %v2130 = vld [vmem:[%s671 + $0xb4] sm:$0xf]
        %v2131 = vld [vmem:[%s671 + $0xb8] sm:$0xf]
        %v2132 = vld [vmem:[%s671 + $0xbc] sm:$0xf]
        %v2133 = vld [vmem:[%s671 + $0xc0] sm:$0xf]
        %v2134 = vld [vmem:[%s671 + $0xc4] sm:$0xf]
        %v2135 = vld [vmem:[%s671 + $0xc8] sm:$0xf]
        %v2136 = vld [vmem:[%s671 + $0xcc] sm:$0xf]
        %v2137 = vld [vmem:[%s671 + $0xd0] sm:$0xf]
        %v2138 = vld [vmem:[%s671 + $0xd4] sm:$0xf]
        %v2139 = vld [vmem:[%s671 + $0xd8] sm:$0xf]
        %v2140 = vld [vmem:[%s671 + $0xdc] sm:$0xf]
        %v2141 = vld [vmem:[%s671 + $0xe0] sm:$0xf]
        %v2142 = vld [vmem:[%s671 + $0xe4] sm:$0xf]
        %v2143 = vld [vmem:[%s671 + $0xe8] sm:$0xf]
        %v2144 = vld [vmem:[%s671 + $0xec] sm:$0xf]
        %v2145 = vld [vmem:[%s671 + $0xf0] sm:$0xf]
        %v2146 = vld [vmem:[%s671 + $0xf4] sm:$0xf]
        %v2147 = vld [vmem:[%s671 + $0xf8] sm:$0xf]
        %v2148 = vld [vmem:[%s671 + $0xfc] sm:$0xf]
        %v2149 = vld [vmem:[%s798] sm:$0x1]
        %v2151 = vlaneseq
        %v2152 = vshrl.u32 %v2151, 7
        %v2153 = vsub.s32 0, %v2152
        %v2154 = vrot.slane %v2149, %v2153
        %v2220 = vunpack.c.l.b16 %v2085
        %v2221 = vunpack.c.l.b16 %v2086
        %v2222 = vunpack.c.l.b16 %v2087
        %v2223 = vunpack.c.l.b16 %v2088
        %v2224 = vunpack.c.l.b16 %v2089
        %v2225 = vunpack.c.l.b16 %v2090
        %v2226 = vunpack.c.l.b16 %v2091
        %v2227 = vunpack.c.l.b16 %v2092
        %v2228 = vunpack.c.l.b16 %v2093
        %v2229 = vunpack.c.l.b16 %v2094
        %v2230 = vunpack.c.l.b16 %v2095
        %v2231 = vunpack.c.l.b16 %v2096
        %v2232 = vunpack.c.l.b16 %v2097
        %v2233 = vunpack.c.l.b16 %v2098
        %v2234 = vunpack.c.l.b16 %v2099
        %v2235 = vunpack.c.l.b16 %v2100
        %v2236 = vunpack.c.l.b16 %v2101
        %v2237 = vunpack.c.l.b16 %v2102
        %v2238 = vunpack.c.l.b16 %v2103
        %v2239 = vunpack.c.l.b16 %v2104
        %v2240 = vunpack.c.l.b16 %v2105
        %v2241 = vunpack.c.l.b16 %v2106
        %v2242 = vunpack.c.l.b16 %v2107
        %v2243 = vunpack.c.l.b16 %v2108
        %v2244 = vunpack.c.l.b16 %v2109
        %v2245 = vunpack.c.l.b16 %v2110
        %v2246 = vunpack.c.l.b16 %v2111
        %v2247 = vunpack.c.l.b16 %v2112
        %v2248 = vunpack.c.l.b16 %v2113
        %v2249 = vunpack.c.l.b16 %v2114
        %v2250 = vunpack.c.l.b16 %v2115
        %v2251 = vunpack.c.l.b16 %v2116
        %v2252 = vunpack.c.l.b16 %v2117
        %v2253 = vunpack.c.l.b16 %v2118
        %v2254 = vunpack.c.l.b16 %v2119
        %v2255 = vunpack.c.l.b16 %v2120
        %v2256 = vunpack.c.l.b16 %v2121
        %v2257 = vunpack.c.l.b16 %v2122
        %v2258 = vunpack.c.l.b16 %v2123
        %v2259 = vunpack.c.l.b16 %v2124
        %v2260 = vunpack.c.l.b16 %v2125
        %v2261 = vunpack.c.l.b16 %v2126
        %v2262 = vunpack.c.l.b16 %v2127
        %v2263 = vunpack.c.l.b16 %v2128
        %v2264 = vunpack.c.l.b16 %v2129
        %v2265 = vunpack.c.l.b16 %v2130
        %v2266 = vunpack.c.l.b16 %v2131
        %v2267 = vunpack.c.l.b16 %v2132
        %v2268 = vunpack.c.l.b16 %v2133
        %v2269 = vunpack.c.l.b16 %v2134
        %v2270 = vunpack.c.l.b16 %v2135
        %v2271 = vunpack.c.l.b16 %v2136
        %v2272 = vunpack.c.l.b16 %v2137
        %v2273 = vunpack.c.l.b16 %v2138
        %v2274 = vunpack.c.l.b16 %v2139
        %v2275 = vunpack.c.l.b16 %v2140
        %v2276 = vunpack.c.l.b16 %v2141
        %v2277 = vunpack.c.l.b16 %v2142
        %v2278 = vunpack.c.l.b16 %v2143
        %v2279 = vunpack.c.l.b16 %v2144
        %v2280 = vunpack.c.l.b16 %v2145
        %v2281 = vunpack.c.l.b16 %v2146
        %v2282 = vunpack.c.l.b16 %v2147
        %v2283 = vunpack.c.l.b16 %v2148
        %v2284 = vpack.c.b16 %v2221, %v2220
        %v2285 = vpack.c.b16 %v2223, %v2222
        %v2286 = vpack.c.b16 %v2225, %v2224
        %v2287 = vpack.c.b16 %v2227, %v2226
        %v2288 = vpack.c.b16 %v2229, %v2228
        %v2289 = vpack.c.b16 %v2231, %v2230
        %v2290 = vpack.c.b16 %v2233, %v2232
        %v2291 = vpack.c.b16 %v2235, %v2234
        %v2292 = vpack.c.b16 %v2237, %v2236
        %v2293 = vpack.c.b16 %v2239, %v2238
        %v2294 = vpack.c.b16 %v2241, %v2240
        %v2295 = vpack.c.b16 %v2243, %v2242
        %v2296 = vpack.c.b16 %v2245, %v2244
        %v2297 = vpack.c.b16 %v2247, %v2246
        %v2298 = vpack.c.b16 %v2249, %v2248
        %v2299 = vpack.c.b16 %v2251, %v2250
        %v2300 = vpack.c.b16 %v2253, %v2252
        %v2301 = vpack.c.b16 %v2255, %v2254
        %v2302 = vpack.c.b16 %v2257, %v2256
        %v2303 = vpack.c.b16 %v2259, %v2258
        %v2304 = vpack.c.b16 %v2261, %v2260
        %v2305 = vpack.c.b16 %v2263, %v2262
        %v2306 = vpack.c.b16 %v2265, %v2264
        %v2307 = vpack.c.b16 %v2267, %v2266
        %v2308 = vpack.c.b16 %v2269, %v2268
        %v2309 = vpack.c.b16 %v2271, %v2270
        %v2310 = vpack.c.b16 %v2273, %v2272
        %v2311 = vpack.c.b16 %v2275, %v2274
        %v2312 = vpack.c.b16 %v2277, %v2276
        %v2313 = vpack.c.b16 %v2279, %v2278
        %v2314 = vpack.c.b16 %v2281, %v2280
        %v2315 = vpack.c.b16 %v2283, %v2282
        %2348 = vmatprep.subr.bf16.mxu0 0
        %2349 = vmatpush1.bf16.msra.mxu0 %v2291
        %2350 = vmatprep.subr.bf16.mxu0 0
        %2351 = vmatpush1.bf16.msra.mxu0 %v2290
        %2352 = vmatprep.subr.bf16.mxu0 0
        %2353 = vmatpush1.bf16.msra.mxu0 %v2289
        %2354 = vmatprep.subr.bf16.mxu0 0
        %2355 = vmatpush1.bf16.msra.mxu0 %v2288
        %2356 = vmatprep.subr.bf16.mxu0 0
        %2357 = vmatpush1.bf16.msra.mxu0 %v2287
        %2358 = vmatprep.subr.bf16.mxu0 0
        %2359 = vmatpush1.bf16.msra.mxu0 %v2286
        %2360 = vmatprep.subr.bf16.mxu0 0
        %2361 = vmatpush1.bf16.msra.mxu0 %v2285
        %2362 = vmatprep.subr.bf16.mxu0 0
        %2363 = vmatpush1.bf16.msra.mxu0 %v2284
        %2364 = vmatprep.subr.bf16.mxu0 0
        %2365 = vmatpush2.bf16.msra.mxu0 %v2299
        %2366 = vmatprep.subr.bf16.mxu0 0
        %2367 = vmatpush2.bf16.msra.mxu0 %v2298
        %2368 = vmatprep.subr.bf16.mxu0 0
        %2369 = vmatpush2.bf16.msra.mxu0 %v2297
        %2370 = vmatprep.subr.bf16.mxu0 0
        %2371 = vmatpush2.bf16.msra.mxu0 %v2296
        %2372 = vmatprep.subr.bf16.mxu0 0
        %2373 = vmatpush2.bf16.msra.mxu0 %v2295
        %2374 = vmatprep.subr.bf16.mxu0 0
        %2375 = vmatpush2.bf16.msra.mxu0 %v2294
        %2376 = vmatprep.subr.bf16.mxu0 0
        %2377 = vmatpush2.bf16.msra.mxu0 %v2293
        %2378 = vmatprep.subr.bf16.mxu0 0
        %2379 = vmatpush2.bf16.msra.mxu0 %v2292
        %2380 = vmatprep.mubr.bf16.mxu0 %v2082
        %2381 = vmatmul.mubr.bf16.gmra.mxu0 %v2081
        %v2382 = vpop.f32.mrf.mxu0
        %v2383 = vadd.f32 %v2154, %v2382
        %v2384 = vpop.f32.mrf.mxu0
        %v2385 = vpop.f32.mrf.mxu0
        %v2386 = vpop.f32.mrf.mxu0
        %2387 = vdwg.mxu0
        %2388 = vmatprep.subr.bf16.mxu0 0
        %2389 = vmatpush1.bf16.msra.mxu0 %v2307
        %2390 = vmatprep.subr.bf16.mxu0 0
        %2391 = vmatpush1.bf16.msra.mxu0 %v2306
        %2392 = vmatprep.subr.bf16.mxu0 0
        %2393 = vmatpush1.bf16.msra.mxu0 %v2305
        %2394 = vmatprep.subr.bf16.mxu0 0
        %2395 = vmatpush1.bf16.msra.mxu0 %v2304
        %2396 = vmatprep.subr.bf16.mxu0 0
        %2397 = vmatpush1.bf16.msra.mxu0 %v2303
        %2398 = vmatprep.subr.bf16.mxu0 0
        %2399 = vmatpush1.bf16.msra.mxu0 %v2302
        %2400 = vmatprep.subr.bf16.mxu0 0
        %2401 = vmatpush1.bf16.msra.mxu0 %v2301
        %2402 = vmatprep.subr.bf16.mxu0 0
        %2403 = vmatpush1.bf16.msra.mxu0 %v2300
        %2404 = vmatprep.subr.bf16.mxu0 0
        %2405 = vmatpush2.bf16.msra.mxu0 %v2315
        %2406 = vmatprep.subr.bf16.mxu0 0
        %2407 = vmatpush2.bf16.msra.mxu0 %v2314
        %2408 = vmatprep.subr.bf16.mxu0 0
        %2409 = vmatpush2.bf16.msra.mxu0 %v2313
        %2410 = vmatprep.subr.bf16.mxu0 0
        %2411 = vmatpush2.bf16.msra.mxu0 %v2312
        %2412 = vmatprep.subr.bf16.mxu0 0
        %2413 = vmatpush2.bf16.msra.mxu0 %v2311
        %2414 = vmatprep.subr.bf16.mxu0 0
        %2415 = vmatpush2.bf16.msra.mxu0 %v2310
        %2416 = vmatprep.subr.bf16.mxu0 0
        %2417 = vmatpush2.bf16.msra.mxu0 %v2309
        %2418 = vmatprep.subr.bf16.mxu0 0
        %2419 = vmatpush2.bf16.msra.mxu0 %v2308
        %2420 = vmatprep.mubr.bf16.mxu0 %v2084
        %2421 = vmatmul.mubr.bf16.gmra.mxu0 %v2083
        %v2422 = vpop.f32.mrf.mxu0
        %v2423 = vadd.f32 %v2383, %v2422
        %v2424 = vpop.f32.mrf.mxu0
        %v2425 = vpop.f32.mrf.mxu0
        %v2426 = vpop.f32.mrf.mxu0
        %2427 = vdwg.mxu0
        %v2428 = vadd.f32 %v1724, %v2423
        %2429 = vst [vmem:[#allocation2] sm:$0xff] %v2428
        %p2430 = scmp.eq.s32.totalorder %s50, 1
        // Predicated region
        $region143: #{clip_text_embed.1} parent=83 // pred_check
          %p2431 = pneg %p2430
        $region144: #{clip_text_embed.1} parent=83 // pred_check_branch
          %2433 = sbr.rel (%p2431) target = $region146
        $region145: #{clip_text_embed.1} parent=83 // pred_region
          %s2434 = sld [smem:[#allocation6 + %s49]]
          %s2435 = scalar_lea.vmem [#allocation2], %s2434
          %v2436 = vld [vmem:[%s2435] sm:$0x1]
          %v2437 = vld [vmem:[#allocation13] sm:$0x1]
          %v2438 = vld [vmem:[#allocation15] sm:$0x1]
          %vm2439 = vcmask 1040384
          %v2440 = vsel %vm2439, %v2436, 0.0
          %2441 = vadd.xlane.f32.xlu0 %v2440
          %v2442 = vpop.xlane.xlu0 %2441
          %v2443 = vmul.f32 %v2442, %v857
          %v2444 = vsub.f32 %v2436, %v2443
          %v2445 = vmul.f32 %v2444, %v2444
          %v2446 = vsel %vm2439, %v2445, 0.0
          %2447 = vadd.xlane.f32.xlu0 %v2446
          %v2448 = vpop.xlane.xlu0 %2447
          %v2449 = vmul.f32 %v2448, %v857
          %v2450 = vadd.f32 %v2449, 1e-05
          %v2451 = vrsqrt.pop %v2450
          %v2452 = vmul.f32 %v2444, %v2451
          %v2453 = vmul.f32 %v2452, %v2437
          %v2454 = vadd.f32 %v2453, %v2438
          %v2455 = vpack.c.bf16 %v2454, %v2454
          %v2456 = vld [vmem:[%s17] sm:$0xf]
          %v2457 = vld [vmem:[%s17 + $0x4] sm:$0xf]
          %v2458 = vld [vmem:[%s17 + $0x8] sm:$0xf]
          %v2459 = vld [vmem:[%s17 + $0xc] sm:$0xf]
          %v2460 = vld [vmem:[%s17 + $0x10] sm:$0xf]
          %v2461 = vld [vmem:[%s17 + $0x14] sm:$0xf]
          %v2462 = vld [vmem:[%s17 + $0x18] sm:$0xf]
          %v2463 = vld [vmem:[%s17 + $0x1c] sm:$0xf]
          %v2464 = vld [vmem:[%s17 + $0x20] sm:$0xf]
          %v2465 = vld [vmem:[%s17 + $0x24] sm:$0xf]
          %v2466 = vld [vmem:[%s17 + $0x28] sm:$0xf]
          %v2467 = vld [vmem:[%s17 + $0x2c] sm:$0xf]
          %v2468 = vld [vmem:[%s17 + $0x30] sm:$0xf]
          %v2469 = vld [vmem:[%s17 + $0x34] sm:$0xf]
          %v2470 = vld [vmem:[%s17 + $0x38] sm:$0xf]
          %v2471 = vld [vmem:[%s17 + $0x3c] sm:$0xf]
          %v2488 = vunpack.c.l.b16 %v2456
          %v2489 = vunpack.c.l.b16 %v2457
          %v2490 = vunpack.c.l.b16 %v2458
          %v2491 = vunpack.c.l.b16 %v2459
          %v2492 = vunpack.c.l.b16 %v2460
          %v2493 = vunpack.c.l.b16 %v2461
          %v2494 = vunpack.c.l.b16 %v2462
          %v2495 = vunpack.c.l.b16 %v2463
          %v2496 = vunpack.c.l.b16 %v2464
          %v2497 = vunpack.c.l.b16 %v2465
          %v2498 = vunpack.c.l.b16 %v2466
          %v2499 = vunpack.c.l.b16 %v2467
          %v2500 = vunpack.c.l.b16 %v2468
          %v2501 = vunpack.c.l.b16 %v2469
          %v2502 = vunpack.c.l.b16 %v2470
          %v2503 = vunpack.c.l.b16 %v2471
          %v2504 = vpack.c.b16 %v2489, %v2488
          %v2505 = vpack.c.b16 %v2491, %v2490
          %v2506 = vpack.c.b16 %v2493, %v2492
          %v2507 = vpack.c.b16 %v2495, %v2494
          %v2508 = vpack.c.b16 %v2497, %v2496
          %v2509 = vpack.c.b16 %v2499, %v2498
          %v2510 = vpack.c.b16 %v2501, %v2500
          %v2511 = vpack.c.b16 %v2503, %v2502
          %2520 = vmatprep.subr.bf16.mxu0 0
          %2521 = vmatpush1.bf16.msra.mxu0 %v2511
          %2522 = vmatprep.subr.bf16.mxu0 0
          %2523 = vmatpush1.bf16.msra.mxu0 %v2510
          %2524 = vmatprep.subr.bf16.mxu0 0
          %2525 = vmatpush1.bf16.msra.mxu0 %v2509
          %2526 = vmatprep.subr.bf16.mxu0 0
          %2527 = vmatpush1.bf16.msra.mxu0 %v2508
          %2528 = vmatprep.subr.bf16.mxu0 0
          %2529 = vmatpush1.bf16.msra.mxu0 %v2507
          %2530 = vmatprep.subr.bf16.mxu0 0
          %2531 = vmatpush1.bf16.msra.mxu0 %v2506
          %2532 = vmatprep.subr.bf16.mxu0 0
          %2533 = vmatpush1.bf16.msra.mxu0 %v2505
          %2534 = vmatprep.subr.bf16.mxu0 0
          %2535 = vmatpush1.bf16.msra.mxu0 %v2504
          %2536 = vmatprep.subr.bf16.mxu0 0
          %2537 = vmatpush2.bf16.msra.mxu0 0
          %2538 = vmatprep.subr.bf16.mxu0 0
          %2539 = vmatpush2.bf16.msra.mxu0 0
          %2540 = vmatprep.subr.bf16.mxu0 0
          %2541 = vmatpush2.bf16.msra.mxu0 0
          %2542 = vmatprep.subr.bf16.mxu0 0
          %2543 = vmatpush2.bf16.msra.mxu0 0
          %2544 = vmatprep.subr.bf16.mxu0 0
          %2545 = vmatpush2.bf16.msra.mxu0 0
          %2546 = vmatprep.subr.bf16.mxu0 0
          %2547 = vmatpush2.bf16.msra.mxu0 0
          %2548 = vmatprep.subr.bf16.mxu0 0
          %2549 = vmatpush2.bf16.msra.mxu0 0
          %2550 = vmatprep.subr.bf16.mxu0 0
          %2551 = vmatpush2.bf16.msra.mxu0 0
          %2552 = vmatprep.mubr.bf16.mxu0 0
          %2553 = vmatmul.mubr.bf16.gmra.mxu0 %v2455
          %v2554 = vpop.f32.mrf.mxu0
          %v2555 = vadd.f32 0.0, %v2554
          %v2556 = vpop.f32.mrf.mxu0
          %v2557 = vpop.f32.mrf.mxu0
          %v2558 = vpop.f32.mrf.mxu0
          %2559 = vdwg.mxu0
          %v2560 = vmul.f32 %v2555, %v2555
          %v2561 = vsel %vm2439, %v2560, 0.0
          %2562 = vadd.xlane.f32.xlu0 %v2561
          %v2563 = vpop.xlane.xlu0 %2562
          %v2564 = vadd.f32 %v2563, 1e-12
          %v2565 = vrsqrt.pop %v2564
          %v2566 = vmul.f32 %v2555, %v2565
          %2567 = vst [vmem:[%s767] sm:$0x1] %v2566
        $region146: #{clip_text_embed.1} parent=83 // pred_fallthru
          _
        %s2568 = sand.u32 %s461, 1
        %s2569 = scalar_lea.sflag [#allocation9], %s2568
        %s2570 = sand.u32 %s461, 1
        %s2571 = scalar_lea.vmem [#allocation16], %s2570
        // Predicated region
        $region147: #{clip_text_embed.1} parent=83 // pred_check
          %p2572 = pneg %p471
        $region148: #{clip_text_embed.1} parent=83 // pred_check_branch
          %2574 = sbr.rel (%p2572) target = $region150
        $region149: #{clip_text_embed.1} parent=83 // pred_region
          %s2576 = ssub.s32 16, 16
          %2577 = vsyncadd %s2569, %s2576
          %s2578 = smul.addr %s49, 16
          %s2579 = scalar_lea.hbm %s18, %s2578
          %s2581 = sshll.u32 %s2571, 4
          %s2582 = int_to_ptr.vmem [resolvable:$true] %s2581
          %2584 = dma.vmem_to_hbm [thread:$0]  %s2582, 16, %s2579, %s2569
        $region150: #{clip_text_embed.1} parent=83 // pred_fallthru
          _
      $region84: #{clip_text_embed.1} parent=5 // pred_fallthru
        _
      %p2585 = scmp.le.s32.totalorder 2, %s40
      // Predicated region
      $region151: #{clip_text_embed.1} parent=5 // pred_check
        %p2586 = pneg %p2585
      $region152: #{clip_text_embed.1} parent=5 // pred_check_branch
        %2588 = sbr.rel (%p2586) target = $region154
      $region153: #{clip_text_embed.1} parent=5 // pred_region
        %s2589 = ssub.s32 %s40, 2
        // Predicated region
        $region155: #{clip_text_embed.1} parent=153 // pred_check
          %p2590 = pneg %p477
        $region156: #{clip_text_embed.1} parent=153 // pred_check_branch
          %2592 = sbr.rel (%p2590) target = $region158
        $region157: #{clip_text_embed.1} parent=153 // pred_region
          %s2593 = sand.u32 %s462, 1
          %s2594 = scalar_lea.sflag [#allocation9], %s2593
          %s2595 = sand.u32 %s462, 1
          %s2596 = scalar_lea.vmem [#allocation16], %s2595
          %2597 = dma.done %s2594, 16
        $region158: #{clip_text_embed.1} parent=153 // pred_fallthru
          _
      $region154: #{clip_text_embed.1} parent=5 // pred_fallthru
        _
    $region6: #{clip_text_embed.1} parent=1 // loop_footer
      %s44 = sadd.s32 1, %s40
    $region7: #{clip_text_embed.1} parent=1 // loop_footer_branch
      %39 = sbr.rel target = $region3
    $region8: #{clip_text_embed.1} parent=1 // loop_exit
      _
    %2598 = vsyncpa [#allocation8], 1
    %s2599 = scalar_lea.sflag [#allocation8], 1
    %2600 = vsyncpa %s2599, 1
    %2601 = vsyncpa [#allocation11], 1
    %s2602 = scalar_lea.sflag [#allocation11], 1
    %2603 = vsyncpa %s2602, 1
    %2604 = vsyncpa [#allocation14], 1
    %2605 = vsyncpa [#allocation9], 1
    %s2606 = scalar_lea.sflag [#allocation9], 1
    %2607 = vsyncpa %s2606, 1
  %2608 = vsyncmov [#allocation4]
  %s2609 = vpop.sfrf %2608
  %p2610 = scmp.eq.s32.totalorder %s2609, 0
  %p2611 = pneg %p2610
  %2613 = shalt.err (%p2611)

</llo_original>
